<compile_context>
chip_gen: v6e
topology: v6e:2x2x1
jax: 0.10.0
libtpu: 0.0.40
codegen_flags: <defaults>
</compile_context>

<pallas_src>
import jax
import jax.numpy as jnp
import numpy as np
from jax import lax
from jax.experimental import pallas as pl
from jax.experimental.pallas import tpu as pltpu


def _round_up(x, m):
    return ((x + m - 1) // m) * m


# ---------------------------------------------------------------------------
# Fused DecoderBlock kernel:
#   upsample(x) (+ skip) -> conv3x3+BN+ReLU -> conv3x3+BN+ReLU   (all in VMEM)
# ---------------------------------------------------------------------------
def _make_block_kernel(up, has_skip, Hx, Wx, Cx, Cs, Cout, Cout_pad, H, W):
    """Kernel factory; all shape/config parameters are static (closed over)."""
    M = H * W
    taps = [(ky, kx) for ky in range(3) for kx in range(3)]

    def kernel(*refs):
        if has_skip:
            (x_ref, skip_ref, w1_ref, s1_ref, b1_ref, w2_ref, s2_ref, b2_ref,
             o_ref, xpad, spad, mid, col1, col2) = refs
        else:
            (x_ref, w1_ref, s1_ref, b1_ref, w2_ref, s2_ref, b2_ref,
             o_ref, xpad, mid, col1, col2) = refs
            skip_ref = spad = None

        f32, bf16 = jnp.float32, jnp.bfloat16

        # ---- zero ONLY the 1-px halo; the interior is fully rewritten below --
        def zero_border(ref, c):
            zrow = jnp.zeros((1, W + 2, c), bf16)
            ref[pl.ds(0, 1), :, :] = zrow
            ref[pl.ds(H + 1, 1), :, :] = zrow
            zcol = jnp.zeros((H + 2, 1, c), bf16)
            ref[:, pl.ds(0, 1), :] = zcol
            ref[:, pl.ds(W + 1, 1), :] = zcol

        zero_border(xpad, Cx)
        if has_skip:
            zero_border(spad, Cs)
        zero_border(mid, Cout)

        # ---- conv1 input: fused nearest-x{up} upsample, VMEM only ------------
        xv = x_ref[0]                                       # (Hx, Wx, Cx) bf16
        if up == 1:
            xpad[pl.ds(1, H), pl.ds(1, W), :] = xv
        else:
            # H-repeat once for the whole tile (leading-dim broadcast + merge).
            xh = jnp.broadcast_to(xv[:, None, :, :], (Hx, up, Wx, Cx))
            xh = xh.reshape(H, Wx, Cx)
            # W-repeat: one sublane-broadcast store per source column.
            for w in range(Wx):
                rep = jnp.broadcast_to(xh[:, w:w + 1, :], (H, up, Cx))
                xpad[pl.ds(1, H), pl.ds(1 + up * w, up), :] = rep
        if has_skip:
            spad[pl.ds(1, H), pl.ds(1, W), :] = skip_ref[0]

        # ---- conv1: im2col -> ONE GEMM -> folded-BN + ReLU --------------------
        # The x/skip channel concat is only a column layout of col1; the host
        # concatenated the matching weight rows, so conv1 is a single dot.
        for t, (ky, kx) in enumerate(taps):
            col1[:, pl.ds(t * Cx, Cx)] = (
                xpad[pl.ds(ky, H), pl.ds(kx, W), :].reshape(M, Cx))
            if has_skip:
                col1[:, pl.ds(9 * Cx + t * Cs, Cs)] = (
                    spad[pl.ds(ky, H), pl.ds(kx, W), :].reshape(M, Cs))
        acc1 = jnp.dot(col1[...], w1_ref[...], preferred_element_type=f32)
        y1 = jnp.maximum(acc1 * s1_ref[...] + b1_ref[...], 0.0)      # (M, Cout)
        mid[pl.ds(1, H), pl.ds(1, W), :] = y1.astype(bf16).reshape(H, W, Cout)

        # ---- conv2: im2col -> ONE GEMM -> BN + ReLU -> lane-dense store -------
        for t, (ky, kx) in enumerate(taps):
            col2[:, pl.ds(t * Cout, Cout)] = (
                mid[pl.ds(ky, H), pl.ds(kx, W), :].reshape(M, Cout))
        acc2 = jnp.dot(col2[...], w2_ref[...], preferred_element_type=f32)
        y2 = jnp.maximum(acc2 * s2_ref[...] + b2_ref[...], 0.0)  # (M, Cout_pad)
        o_ref[0] = y2.astype(o_ref.dtype)                        # dense 128-lane

    return kernel


def decoder_block_pallas(x, skip, p, up):
    """x: (N,Hx,Wx,Cx) bf16 NHWC; skip: (N,H,W,Cs) bf16 or None -> (N,H,W,Cout) bf16."""
    N, Hx, Wx, Cx = x.shape
    H, W = up * Hx, up * Wx
    Cout = p["w1x"].shape[-1]
    has_skip = skip is not None
    Cs = skip.shape[-1] if has_skip else 0
    if has_skip:
        assert skip.shape[1] == H and skip.shape[2] == W, (skip.shape, H, W)

    M = H * W
    K1 = 9 * (Cx + Cs)
    K2 = 9 * Cout
    Cout_pad = max(128, _round_up(Cout, 128))     # lane-dense conv2 output store

    # Host-side weight packing: flatten taps into the GEMM K dim, concat the
    # x/skip halves for conv1, and zero-pad conv2's N dim (+scale/bias) to 128.
    w1 = p["w1x"].reshape(9 * Cx, Cout)
    if has_skip:
        w1 = jnp.concatenate([w1, p["w1s"].reshape(9 * Cs, Cout)], axis=0)
    w2 = jnp.pad(p["w2"].reshape(K2, Cout), ((0, 0), (0, Cout_pad - Cout)))
    s2 = jnp.pad(p["s2"], ((0, 0), (0, Cout_pad - Cout)))
    b2 = jnp.pad(p["b2"], ((0, 0), (0, Cout_pad - Cout)))

    kernel = _make_block_kernel(up, has_skip, Hx, Wx, Cx, Cs, Cout, Cout_pad, H, W)

    args, in_specs = [], []

    def add(a, spec):
        args.append(a)
        in_specs.append(spec)

    def full(shape):  # whole (grid-invariant) array as one block
        return pl.BlockSpec(shape, lambda n: (0,) * len(shape))

    add(x, pl.BlockSpec((1, Hx, Wx, Cx), lambda n: (n, 0, 0, 0)))
    if has_skip:
        add(skip, pl.BlockSpec((1, H, W, Cs), lambda n: (n, 0, 0, 0)))
    add(w1, full((K1, Cout)))
    add(p["s1"], full((1, Cout)))
    add(p["b1"], full((1, Cout)))
    add(w2, full((K2, Cout_pad)))
    add(s2, full((1, Cout_pad)))
    add(b2, full((1, Cout_pad)))

    scratch = [pltpu.VMEM((H + 2, W + 2, Cx), jnp.bfloat16)]          # padded x
    if has_skip:
        scratch.append(pltpu.VMEM((H + 2, W + 2, Cs), jnp.bfloat16))  # padded skip
    scratch += [
        pltpu.VMEM((H + 2, W + 2, Cout), jnp.bfloat16),               # padded conv1 out
        pltpu.VMEM((M, K1), jnp.bfloat16),                            # im2col conv1
        pltpu.VMEM((M, K2), jnp.bfloat16),                            # im2col conv2
    ]

    out = pl.pallas_call(
        kernel,
        out_shape=jax.ShapeDtypeStruct((N, M, Cout_pad), jnp.bfloat16),
        grid=(N,),
        in_specs=in_specs,
        out_specs=pl.BlockSpec((1, M, Cout_pad), lambda n: (n, 0, 0)),
        scratch_shapes=scratch,
        compiler_params=pltpu.CompilerParams(
            dimension_semantics=("parallel",),
            vmem_limit_bytes=32 * 1024 * 1024),   # safe on v5e/v6e/v7x
    )(*args)

    # Strip the lane padding and restore NHWC (cheap host-side layout plumbing).
    return out[:, :, :Cout].reshape(N, H, W, Cout)


# ---------------------------------------------------------------------------
# Parameter construction (deterministic, mirrors UnetDecoder_Segment.__init__)
# ---------------------------------------------------------------------------
def _init_conv_bn(key, cin, cout):
    kw, kg, kb, km, kv = jax.random.split(key, 5)
    w = jax.random.normal(kw, (cout, cin, 3, 3), jnp.float32) * 0.1   # OIHW, no bias
    gamma = 1.0 + 0.1 * jax.random.normal(kg, (cout,), jnp.float32)
    beta = 0.1 * jax.random.normal(kb, (cout,), jnp.float32)
    mean = 0.1 * jax.random.normal(km, (cout,), jnp.float32)
    var = 1.0 + 0.1 * jnp.abs(jax.random.normal(kv, (cout,), jnp.float32))
    eps = 1e-5
    scale = gamma / jnp.sqrt(var + eps)          # folded eval-mode BatchNorm
    bias = beta - mean * scale
    w9 = jnp.transpose(w, (2, 3, 1, 0)).reshape(9, cin, cout).astype(jnp.bfloat16)
    return w9, scale.reshape(1, cout), bias.reshape(1, cout)


def init_decoder_params(key, encoder_channels, decoder_channels):
    enc = list(encoder_channels[1:])[::-1]
    head = enc[0]
    in_ch = [head] + list(decoder_channels[:-1])
    skip_ch = list(enc[1:]) + [0]
    out_ch = list(decoder_channels)
    blocks = []
    for ic, sc, oc in zip(in_ch, skip_ch, out_ch):
        key, k1, k2 = jax.random.split(key, 3)
        w1, s1, b1 = _init_conv_bn(k1, ic + sc, oc)
        w2, s2, b2 = _init_conv_bn(k2, oc, oc)
        blocks.append({
            "w1x": w1[:, :ic, :],                         # x-channel taps
            "w1s": (w1[:, ic:, :] if sc > 0 else None),   # skip-channel taps
            "s1": s1, "b1": b1,
            "w2": w2, "s2": s2, "b2": b2,
        })
    return blocks


# ---------------------------------------------------------------------------
# Decoder forward (glue in JAX, fused block on the Pallas hot path)
# ---------------------------------------------------------------------------
def decoder_forward(features_nchw, blocks, block_fn):
    feats = [jnp.transpose(f, (0, 2, 3, 1)).astype(jnp.bfloat16)
             for f in features_nchw]
    feats = feats[1:][::-1]                 # drop first skip, deepest first
    head, skips = feats[0], feats[1:]
    x = head                                # center = nn.Identity()
    for i, blk in enumerate(blocks):
        skip = skips[i] if i < len(skips) else None
        interpolate = i < len(skips) - 1
        # interpolate -> x2; no skip -> extra double x2 (== nearest x4)
        up = (2 if interpolate else 1) * (1 if skip is not None else 4)
        x = block_fn(x, skip, blk, up)      # attention1/2 = Identity
    return jnp.transpose(x, (0, 3, 1, 2)).astype(jnp.float32)   # back to NCHW


# Pure-JAX reference block (same bf16 quantization points as the kernel).
def _block_ref(x, skip, p, up):
    x = x.astype(jnp.float32)
    if up > 1:
        x = jnp.repeat(jnp.repeat(x, up, axis=1), up, axis=2)   # nearest upsample
    if skip is not None:
        x = jnp.concatenate([x, skip.astype(jnp.float32)], axis=-1)
        w1 = jnp.concatenate([p["w1x"], p["w1s"]], axis=1)
    else:
        w1 = p["w1x"]

    def conv(z, w9, s, b):
        w = w9.astype(jnp.float32).reshape(3, 3, w9.shape[1], w9.shape[2])
        y = lax.conv_general_dilated(
            z, w, window_strides=(1, 1), padding="SAME",
            dimension_numbers=("NHWC", "HWIO", "NHWC"),
            precision=lax.Precision.HIGHEST)
        y = jnp.maximum(y * s + b, 0.0)
        return y.astype(jnp.bfloat16).astype(jnp.float32)

    y = conv(x, w1, p["s1"], p["b1"])
    y = conv(y, p["w2"], p["s2"], p["b2"])
    return y.astype(jnp.bfloat16)


# ---------------------------------------------------------------------------
if __name__ == "__main__":
    key = jax.random.PRNGKey(0)
    encoder_channels = [3, 8, 16, 32]       # len = n_blocks + 1
    decoder_channels = [32, 16, 8]          # n_blocks = 3
    kf, kp = jax.random.split(key)
    k0, k1, k2, k3 = jax.random.split(kf, 4)

    # Encoder features (NCHW, like PyTorch). f0 is dropped by the decoder.
    f0 = jax.random.normal(k0, (2, 3, 16, 16), jnp.float32)
    f1 = jax.random.normal(k1, (2, 8, 8, 8), jnp.float32)
    f2 = jax.random.normal(k2, (2, 16, 8, 8), jnp.float32)
    f3 = jax.random.normal(k3, (2, 32, 4, 4), jnp.float32)   # head (deepest)

    blocks = init_decoder_params(kp, encoder_channels, decoder_channels)

    out = decoder_forward([f0, f1, f2, f3], blocks, decoder_block_pallas)
    out = jax.block_until_ready(out)

    ref = decoder_forward([f0, f1, f2, f3], blocks, _block_ref)
    ref = jax.block_until_ready(ref)

    assert out.shape == (2, 8, 32, 32), out.shape
    np.testing.assert_allclose(np.asarray(out), np.asarray(ref),
                               rtol=2e-2, atol=2e-2)
    print("KERNEL_OK")
</pallas_src>

<mosaic_0001>
module attributes {stable_mosaic.version = 11 : i64} {
  func.func @kernel(%arg0: i32, %arg1: memref<1x4x4x32xbf16, #tpu.memory_space<vmem>>, %arg2: memref<1x8x8x16xbf16, #tpu.memory_space<vmem>>, %arg3: memref<432x32xbf16, #tpu.memory_space<vmem>>, %arg4: memref<1x32xf32, #tpu.memory_space<vmem>>, %arg5: memref<1x32xf32, #tpu.memory_space<vmem>>, %arg6: memref<288x128xbf16, #tpu.memory_space<vmem>>, %arg7: memref<1x128xf32, #tpu.memory_space<vmem>>, %arg8: memref<1x128xf32, #tpu.memory_space<vmem>>, %arg9: memref<1x64x128xbf16, #tpu.memory_space<vmem>>, %arg10: memref<10x10x32xbf16, #tpu.memory_space<vmem>>, %arg11: memref<10x10x16xbf16, #tpu.memory_space<vmem>>, %arg12: memref<10x10x32xbf16, #tpu.memory_space<vmem>>, %arg13: memref<64x432xbf16, #tpu.memory_space<vmem>>, %arg14: memref<64x288xbf16, #tpu.memory_space<vmem>>) attributes {dimension_semantics = [#tpu.dimension_semantics<parallel>], iteration_bounds = array<i64: 2>, scalar_prefetch = 0 : i64, scratch_operands = 5 : i64, tpu.core_type = #tpu.core_type<tc>, window_params = [{transform_indices = @transform_0, window_bounds = array<i64: 1, 4, 4, 32>}, {transform_indices = @transform_1, window_bounds = array<i64: 1, 8, 8, 16>}, {pipeline_mode = #tpu.pipeline_mode<synchronous>, transform_indices = @transform_2, window_bounds = array<i64: 432, 32>}, {pipeline_mode = #tpu.pipeline_mode<synchronous>, transform_indices = @transform_3, window_bounds = array<i64: 1, 32>}, {pipeline_mode = #tpu.pipeline_mode<synchronous>, transform_indices = @transform_4, window_bounds = array<i64: 1, 32>}, {pipeline_mode = #tpu.pipeline_mode<synchronous>, transform_indices = @transform_5, window_bounds = array<i64: 288, 128>}, {pipeline_mode = #tpu.pipeline_mode<synchronous>, transform_indices = @transform_6, window_bounds = array<i64: 1, 128>}, {pipeline_mode = #tpu.pipeline_mode<synchronous>, transform_indices = @transform_7, window_bounds = array<i64: 1, 128>}, {transform_indices = @transform_8, window_bounds = array<i64: 1, 64, 128>}]} {
    %cst = arith.constant 0.000000e+00 : bf16
    %0 = vector.broadcast %cst : bf16 to vector<1x10x32xbf16>
    %c0 = arith.constant 0 : index
    %c0_0 = arith.constant 0 : index
    %c0_1 = arith.constant 0 : index
    %1 = vector.load %arg10[%c0, %c0_0, %c0_1] : memref<10x10x32xbf16, #tpu.memory_space<vmem>>, vector<1x10x32xbf16>
    tpu.vector_store %arg10[%c0, %c0_0, %c0_1], %0 {strides = array<i32>} : memref<10x10x32xbf16, #tpu.memory_space<vmem>>, vector<1x10x32xbf16>,
    %c9 = arith.constant 9 : index
    %c0_2 = arith.constant 0 : index
    %c0_3 = arith.constant 0 : index
    %2 = vector.load %arg10[%c9, %c0_2, %c0_3] : memref<10x10x32xbf16, #tpu.memory_space<vmem>>, vector<1x10x32xbf16>
    tpu.vector_store %arg10[%c9, %c0_2, %c0_3], %0 {strides = array<i32>} : memref<10x10x32xbf16, #tpu.memory_space<vmem>>, vector<1x10x32xbf16>,
    %cst_4 = arith.constant 0.000000e+00 : bf16
    %3 = vector.broadcast %cst_4 : bf16 to vector<10x1x32xbf16>
    %c0_5 = arith.constant 0 : index
    %c0_6 = arith.constant 0 : index
    %c0_7 = arith.constant 0 : index
    %4 = vector.load %arg10[%c0_5, %c0_6, %c0_7] : memref<10x10x32xbf16, #tpu.memory_space<vmem>>, vector<10x1x32xbf16>
    tpu.vector_store %arg10[%c0_5, %c0_6, %c0_7], %3 {strides = array<i32>} : memref<10x10x32xbf16, #tpu.memory_space<vmem>>, vector<10x1x32xbf16>,
    %c0_8 = arith.constant 0 : index
    %c9_9 = arith.constant 9 : index
    %c0_10 = arith.constant 0 : index
    %5 = vector.load %arg10[%c0_8, %c9_9, %c0_10] : memref<10x10x32xbf16, #tpu.memory_space<vmem>>, vector<10x1x32xbf16>
    tpu.vector_store %arg10[%c0_8, %c9_9, %c0_10], %3 {strides = array<i32>} : memref<10x10x32xbf16, #tpu.memory_space<vmem>>, vector<10x1x32xbf16>,
    %cst_11 = arith.constant 0.000000e+00 : bf16
    %6 = vector.broadcast %cst_11 : bf16 to vector<1x10x16xbf16>
    %c0_12 = arith.constant 0 : index
    %c0_13 = arith.constant 0 : index
    %c0_14 = arith.constant 0 : index
    %7 = vector.load %arg11[%c0_12, %c0_13, %c0_14] : memref<10x10x16xbf16, #tpu.memory_space<vmem>>, vector<1x10x16xbf16>
    tpu.vector_store %arg11[%c0_12, %c0_13, %c0_14], %6 {strides = array<i32>} : memref<10x10x16xbf16, #tpu.memory_space<vmem>>, vector<1x10x16xbf16>,
    %c9_15 = arith.constant 9 : index
    %c0_16 = arith.constant 0 : index
    %c0_17 = arith.constant 0 : index
    %8 = vector.load %arg11[%c9_15, %c0_16, %c0_17] : memref<10x10x16xbf16, #tpu.memory_space<vmem>>, vector<1x10x16xbf16>
    tpu.vector_store %arg11[%c9_15, %c0_16, %c0_17], %6 {strides = array<i32>} : memref<10x10x16xbf16, #tpu.memory_space<vmem>>, vector<1x10x16xbf16>,
    %cst_18 = arith.constant 0.000000e+00 : bf16
    %9 = vector.broadcast %cst_18 : bf16 to vector<10x1x16xbf16>
    %c0_19 = arith.constant 0 : index
    %c0_20 = arith.constant 0 : index
    %c0_21 = arith.constant 0 : index
    %10 = vector.load %arg11[%c0_19, %c0_20, %c0_21] : memref<10x10x16xbf16, #tpu.memory_space<vmem>>, vector<10x1x16xbf16>
    tpu.vector_store %arg11[%c0_19, %c0_20, %c0_21], %9 {strides = array<i32>} : memref<10x10x16xbf16, #tpu.memory_space<vmem>>, vector<10x1x16xbf16>,
    %c0_22 = arith.constant 0 : index
    %c9_23 = arith.constant 9 : index
    %c0_24 = arith.constant 0 : index
    %11 = vector.load %arg11[%c0_22, %c9_23, %c0_24] : memref<10x10x16xbf16, #tpu.memory_space<vmem>>, vector<10x1x16xbf16>
    tpu.vector_store %arg11[%c0_22, %c9_23, %c0_24], %9 {strides = array<i32>} : memref<10x10x16xbf16, #tpu.memory_space<vmem>>, vector<10x1x16xbf16>,
    %cst_25 = arith.constant 0.000000e+00 : bf16
    %12 = vector.broadcast %cst_25 : bf16 to vector<1x10x32xbf16>
    %c0_26 = arith.constant 0 : index
    %c0_27 = arith.constant 0 : index
    %c0_28 = arith.constant 0 : index
    %13 = vector.load %arg12[%c0_26, %c0_27, %c0_28] : memref<10x10x32xbf16, #tpu.memory_space<vmem>>, vector<1x10x32xbf16>
    tpu.vector_store %arg12[%c0_26, %c0_27, %c0_28], %12 {strides = array<i32>} : memref<10x10x32xbf16, #tpu.memory_space<vmem>>, vector<1x10x32xbf16>,
    %c9_29 = arith.constant 9 : index
    %c0_30 = arith.constant 0 : index
    %c0_31 = arith.constant 0 : index
    %14 = vector.load %arg12[%c9_29, %c0_30, %c0_31] : memref<10x10x32xbf16, #tpu.memory_space<vmem>>, vector<1x10x32xbf16>
    tpu.vector_store %arg12[%c9_29, %c0_30, %c0_31], %12 {strides = array<i32>} : memref<10x10x32xbf16, #tpu.memory_space<vmem>>, vector<1x10x32xbf16>,
    %cst_32 = arith.constant 0.000000e+00 : bf16
    %15 = vector.broadcast %cst_32 : bf16 to vector<10x1x32xbf16>
    %c0_33 = arith.constant 0 : index
    %c0_34 = arith.constant 0 : index
    %c0_35 = arith.constant 0 : index
    %16 = vector.load %arg12[%c0_33, %c0_34, %c0_35] : memref<10x10x32xbf16, #tpu.memory_space<vmem>>, vector<10x1x32xbf16>
    tpu.vector_store %arg12[%c0_33, %c0_34, %c0_35], %15 {strides = array<i32>} : memref<10x10x32xbf16, #tpu.memory_space<vmem>>, vector<10x1x32xbf16>,
    %c0_36 = arith.constant 0 : index
    %c9_37 = arith.constant 9 : index
    %c0_38 = arith.constant 0 : index
    %17 = vector.load %arg12[%c0_36, %c9_37, %c0_38] : memref<10x10x32xbf16, #tpu.memory_space<vmem>>, vector<10x1x32xbf16>
    tpu.vector_store %arg12[%c0_36, %c9_37, %c0_38], %15 {strides = array<i32>} : memref<10x10x32xbf16, #tpu.memory_space<vmem>>, vector<10x1x32xbf16>,
    %c0_39 = arith.constant 0 : index
    %c0_40 = arith.constant 0 : index
    %c0_41 = arith.constant 0 : index
    %c0_42 = arith.constant 0 : index
    %18 = vector.load %arg1[%c0_39, %c0_40, %c0_41, %c0_42] : memref<1x4x4x32xbf16, #tpu.memory_space<vmem>>, vector<1x4x4x32xbf16>
    %19 = vector.shape_cast %18 : vector<1x4x4x32xbf16> to vector<4x4x32xbf16>
    %20 = vector.shape_cast %19 : vector<4x4x32xbf16> to vector<4x1x4x32xbf16>
    %21 = vector.shape_cast %20 : vector<4x1x4x32xbf16> to vector<4x1x4x32xbf16>
    %22 = vector.broadcast %21 : vector<4x1x4x32xbf16> to vector<4x2x4x32xbf16>
    %23 = vector.shape_cast %22 : vector<4x2x4x32xbf16> to vector<8x4x32xbf16>
    %24 = vector.extract_strided_slice %23 {offsets = [0, 0, 0], sizes = [8, 1, 32], strides = [1, 1, 1]} : vector<8x4x32xbf16> to vector<8x1x32xbf16>
    %25 = vector.shape_cast %24 : vector<8x1x32xbf16> to vector<8x1x32xbf16>
    %26 = vector.broadcast %25 : vector<8x1x32xbf16> to vector<8x2x32xbf16>
    %c1 = arith.constant 1 : index
    %c1_43 = arith.constant 1 : index
    %c0_44 = arith.constant 0 : index
    %27 = vector.load %arg10[%c1, %c1_43, %c0_44] : memref<10x10x32xbf16, #tpu.memory_space<vmem>>, vector<8x2x32xbf16>
    tpu.vector_store %arg10[%c1, %c1_43, %c0_44], %26 {strides = array<i32>} : memref<10x10x32xbf16, #tpu.memory_space<vmem>>, vector<8x2x32xbf16>,
    %28 = vector.extract_strided_slice %23 {offsets = [0, 1, 0], sizes = [8, 1, 32], strides = [1, 1, 1]} : vector<8x4x32xbf16> to vector<8x1x32xbf16>
    %29 = vector.shape_cast %28 : vector<8x1x32xbf16> to vector<8x1x32xbf16>
    %30 = vector.broadcast %29 : vector<8x1x32xbf16> to vector<8x2x32xbf16>
    %c1_45 = arith.constant 1 : index
    %c3 = arith.constant 3 : index
    %c0_46 = arith.constant 0 : index
    %31 = vector.load %arg10[%c1_45, %c3, %c0_46] : memref<10x10x32xbf16, #tpu.memory_space<vmem>>, vector<8x2x32xbf16>
    tpu.vector_store %arg10[%c1_45, %c3, %c0_46], %30 {strides = array<i32>} : memref<10x10x32xbf16, #tpu.memory_space<vmem>>, vector<8x2x32xbf16>,
    %32 = vector.extract_strided_slice %23 {offsets = [0, 2, 0], sizes = [8, 1, 32], strides = [1, 1, 1]} : vector<8x4x32xbf16> to vector<8x1x32xbf16>
    %33 = vector.shape_cast %32 : vector<8x1x32xbf16> to vector<8x1x32xbf16>
    %34 = vector.broadcast %33 : vector<8x1x32xbf16> to vector<8x2x32xbf16>
    %c1_47 = arith.constant 1 : index
    %c5 = arith.constant 5 : index
    %c0_48 = arith.constant 0 : index
    %35 = vector.load %arg10[%c1_47, %c5, %c0_48] : memref<10x10x32xbf16, #tpu.memory_space<vmem>>, vector<8x2x32xbf16>
    tpu.vector_store %arg10[%c1_47, %c5, %c0_48], %34 {strides = array<i32>} : memref<10x10x32xbf16, #tpu.memory_space<vmem>>, vector<8x2x32xbf16>,
    %36 = vector.extract_strided_slice %23 {offsets = [0, 3, 0], sizes = [8, 1, 32], strides = [1, 1, 1]} : vector<8x4x32xbf16> to vector<8x1x32xbf16>
    %37 = vector.shape_cast %36 : vector<8x1x32xbf16> to vector<8x1x32xbf16>
    %38 = vector.broadcast %37 : vector<8x1x32xbf16> to vector<8x2x32xbf16>
    %c1_49 = arith.constant 1 : index
    %c7 = arith.constant 7 : index
    %c0_50 = arith.constant 0 : index
    %39 = vector.load %arg10[%c1_49, %c7, %c0_50] : memref<10x10x32xbf16, #tpu.memory_space<vmem>>, vector<8x2x32xbf16>
    tpu.vector_store %arg10[%c1_49, %c7, %c0_50], %38 {strides = array<i32>} : memref<10x10x32xbf16, #tpu.memory_space<vmem>>, vector<8x2x32xbf16>,
    %c0_51 = arith.constant 0 : index
    %c0_52 = arith.constant 0 : index
    %c0_53 = arith.constant 0 : index
    %c0_54 = arith.constant 0 : index
    %40 = vector.load %arg2[%c0_51, %c0_52, %c0_53, %c0_54] : memref<1x8x8x16xbf16, #tpu.memory_space<vmem>>, vector<1x8x8x16xbf16>
    %41 = vector.shape_cast %40 : vector<1x8x8x16xbf16> to vector<8x8x16xbf16>
    %c1_55 = arith.constant 1 : index
    %c1_56 = arith.constant 1 : index
    %c0_57 = arith.constant 0 : index
    %42 = vector.load %arg11[%c1_55, %c1_56, %c0_57] : memref<10x10x16xbf16, #tpu.memory_space<vmem>>, vector<8x8x16xbf16>
    tpu.vector_store %arg11[%c1_55, %c1_56, %c0_57], %41 {strides = array<i32>} : memref<10x10x16xbf16, #tpu.memory_space<vmem>>, vector<8x8x16xbf16>,
    %c0_58 = arith.constant 0 : index
    %c0_59 = arith.constant 0 : index
    %c0_60 = arith.constant 0 : index
    %43 = vector.load %arg10[%c0_58, %c0_59, %c0_60] : memref<10x10x32xbf16, #tpu.memory_space<vmem>>, vector<8x8x32xbf16>
    %44 = vector.shape_cast %43 : vector<8x8x32xbf16> to vector<64x32xbf16>
    %c0_61 = arith.constant 0 : index
    %c0_62 = arith.constant 0 : index
    %45 = vector.load %arg13[%c0_61, %c0_62] : memref<64x432xbf16, #tpu.memory_space<vmem>>, vector<64x32xbf16>
    tpu.vector_store %arg13[%c0_61, %c0_62], %44 {strides = array<i32>} : memref<64x432xbf16, #tpu.memory_space<vmem>>, vector<64x32xbf16>,
    %c0_63 = arith.constant 0 : index
    %c0_64 = arith.constant 0 : index
    %c0_65 = arith.constant 0 : index
    %46 = vector.load %arg11[%c0_63, %c0_64, %c0_65] : memref<10x10x16xbf16, #tpu.memory_space<vmem>>, vector<8x8x16xbf16>
    %47 = vector.shape_cast %46 : vector<8x8x16xbf16> to vector<64x16xbf16>
    %c0_66 = arith.constant 0 : index
    %c288 = arith.constant 288 : index
    %48 = vector.load %arg13[%c0_66, %c288] : memref<64x432xbf16, #tpu.memory_space<vmem>>, vector<64x16xbf16>
    tpu.vector_store %arg13[%c0_66, %c288], %47 {strides = array<i32>} : memref<64x432xbf16, #tpu.memory_space<vmem>>, vector<64x16xbf16>,
    %c0_67 = arith.constant 0 : index
    %c1_68 = arith.constant 1 : index
    %c0_69 = arith.constant 0 : index
    %49 = vector.load %arg10[%c0_67, %c1_68, %c0_69] : memref<10x10x32xbf16, #tpu.memory_space<vmem>>, vector<8x8x32xbf16>
    %50 = vector.shape_cast %49 : vector<8x8x32xbf16> to vector<64x32xbf16>
    %c0_70 = arith.constant 0 : index
    %c32 = arith.constant 32 : index
    %51 = vector.load %arg13[%c0_70, %c32] : memref<64x432xbf16, #tpu.memory_space<vmem>>, vector<64x32xbf16>
    tpu.vector_store %arg13[%c0_70, %c32], %50 {strides = array<i32>} : memref<64x432xbf16, #tpu.memory_space<vmem>>, vector<64x32xbf16>,
    %c0_71 = arith.constant 0 : index
    %c1_72 = arith.constant 1 : index
    %c0_73 = arith.constant 0 : index
    %52 = vector.load %arg11[%c0_71, %c1_72, %c0_73] : memref<10x10x16xbf16, #tpu.memory_space<vmem>>, vector<8x8x16xbf16>
    %53 = vector.shape_cast %52 : vector<8x8x16xbf16> to vector<64x16xbf16>
    %c0_74 = arith.constant 0 : index
    %c304 = arith.constant 304 : index
    %54 = vector.load %arg13[%c0_74, %c304] : memref<64x432xbf16, #tpu.memory_space<vmem>>, vector<64x16xbf16>
    tpu.vector_store %arg13[%c0_74, %c304], %53 {strides = array<i32>} : memref<64x432xbf16, #tpu.memory_space<vmem>>, vector<64x16xbf16>,
    %c0_75 = arith.constant 0 : index
    %c2 = arith.constant 2 : index
    %c0_76 = arith.constant 0 : index
    %55 = vector.load %arg10[%c0_75, %c2, %c0_76] : memref<10x10x32xbf16, #tpu.memory_space<vmem>>, vector<8x8x32xbf16>
    %56 = vector.shape_cast %55 : vector<8x8x32xbf16> to vector<64x32xbf16>
    %c0_77 = arith.constant 0 : index
    %c64 = arith.constant 64 : index
    %57 = vector.load %arg13[%c0_77, %c64] : memref<64x432xbf16, #tpu.memory_space<vmem>>, vector<64x32xbf16>
    tpu.vector_store %arg13[%c0_77, %c64], %56 {strides = array<i32>} : memref<64x432xbf16, #tpu.memory_space<vmem>>, vector<64x32xbf16>,
    %c0_78 = arith.constant 0 : index
    %c2_79 = arith.constant 2 : index
    %c0_80 = arith.constant 0 : index
    %58 = vector.load %arg11[%c0_78, %c2_79, %c0_80] : memref<10x10x16xbf16, #tpu.memory_space<vmem>>, vector<8x8x16xbf16>
    %59 = vector.shape_cast %58 : vector<8x8x16xbf16> to vector<64x16xbf16>
    %c0_81 = arith.constant 0 : index
    %c320 = arith.constant 320 : index
    %60 = vector.load %arg13[%c0_81, %c320] : memref<64x432xbf16, #tpu.memory_space<vmem>>, vector<64x16xbf16>
    tpu.vector_store %arg13[%c0_81, %c320], %59 {strides = array<i32>} : memref<64x432xbf16, #tpu.memory_space<vmem>>, vector<64x16xbf16>,
    %c1_82 = arith.constant 1 : index
    %c0_83 = arith.constant 0 : index
    %c0_84 = arith.constant 0 : index
    %61 = vector.load %arg10[%c1_82, %c0_83, %c0_84] : memref<10x10x32xbf16, #tpu.memory_space<vmem>>, vector<8x8x32xbf16>
    %62 = vector.shape_cast %61 : vector<8x8x32xbf16> to vector<64x32xbf16>
    %c0_85 = arith.constant 0 : index
    %c96 = arith.constant 96 : index
    %63 = vector.load %arg13[%c0_85, %c96] : memref<64x432xbf16, #tpu.memory_space<vmem>>, vector<64x32xbf16>
    tpu.vector_store %arg13[%c0_85, %c96], %62 {strides = array<i32>} : memref<64x432xbf16, #tpu.memory_space<vmem>>, vector<64x32xbf16>,
    %c1_86 = arith.constant 1 : index
    %c0_87 = arith.constant 0 : index
    %c0_88 = arith.constant 0 : index
    %64 = vector.load %arg11[%c1_86, %c0_87, %c0_88] : memref<10x10x16xbf16, #tpu.memory_space<vmem>>, vector<8x8x16xbf16>
    %65 = vector.shape_cast %64 : vector<8x8x16xbf16> to vector<64x16xbf16>
    %c0_89 = arith.constant 0 : index
    %c336 = arith.constant 336 : index
    %66 = vector.load %arg13[%c0_89, %c336] : memref<64x432xbf16, #tpu.memory_space<vmem>>, vector<64x16xbf16>
    tpu.vector_store %arg13[%c0_89, %c336], %65 {strides = array<i32>} : memref<64x432xbf16, #tpu.memory_space<vmem>>, vector<64x16xbf16>,
    %c1_90 = arith.constant 1 : index
    %c1_91 = arith.constant 1 : index
    %c0_92 = arith.constant 0 : index
    %67 = vector.load %arg10[%c1_90, %c1_91, %c0_92] : memref<10x10x32xbf16, #tpu.memory_space<vmem>>, vector<8x8x32xbf16>
    %68 = vector.shape_cast %67 : vector<8x8x32xbf16> to vector<64x32xbf16>
    %c0_93 = arith.constant 0 : index
    %c128 = arith.constant 128 : index
    %69 = vector.load %arg13[%c0_93, %c128] : memref<64x432xbf16, #tpu.memory_space<vmem>>, vector<64x32xbf16>
    tpu.vector_store %arg13[%c0_93, %c128], %68 {strides = array<i32>} : memref<64x432xbf16, #tpu.memory_space<vmem>>, vector<64x32xbf16>,
    %c1_94 = arith.constant 1 : index
    %c1_95 = arith.constant 1 : index
    %c0_96 = arith.constant 0 : index
    %70 = vector.load %arg11[%c1_94, %c1_95, %c0_96] : memref<10x10x16xbf16, #tpu.memory_space<vmem>>, vector<8x8x16xbf16>
    %71 = vector.shape_cast %70 : vector<8x8x16xbf16> to vector<64x16xbf16>
    %c0_97 = arith.constant 0 : index
    %c352 = arith.constant 352 : index
    %72 = vector.load %arg13[%c0_97, %c352] : memref<64x432xbf16, #tpu.memory_space<vmem>>, vector<64x16xbf16>
    tpu.vector_store %arg13[%c0_97, %c352], %71 {strides = array<i32>} : memref<64x432xbf16, #tpu.memory_space<vmem>>, vector<64x16xbf16>,
    %c1_98 = arith.constant 1 : index
    %c2_99 = arith.constant 2 : index
    %c0_100 = arith.constant 0 : index
    %73 = vector.load %arg10[%c1_98, %c2_99, %c0_100] : memref<10x10x32xbf16, #tpu.memory_space<vmem>>, vector<8x8x32xbf16>
    %74 = vector.shape_cast %73 : vector<8x8x32xbf16> to vector<64x32xbf16>
    %c0_101 = arith.constant 0 : index
    %c160 = arith.constant 160 : index
    %75 = vector.load %arg13[%c0_101, %c160] : memref<64x432xbf16, #tpu.memory_space<vmem>>, vector<64x32xbf16>
    tpu.vector_store %arg13[%c0_101, %c160], %74 {strides = array<i32>} : memref<64x432xbf16, #tpu.memory_space<vmem>>, vector<64x32xbf16>,
    %c1_102 = arith.constant 1 : index
    %c2_103 = arith.constant 2 : index
    %c0_104 = arith.constant 0 : index
    %76 = vector.load %arg11[%c1_102, %c2_103, %c0_104] : memref<10x10x16xbf16, #tpu.memory_space<vmem>>, vector<8x8x16xbf16>
    %77 = vector.shape_cast %76 : vector<8x8x16xbf16> to vector<64x16xbf16>
    %c0_105 = arith.constant 0 : index
    %c368 = arith.constant 368 : index
    %78 = vector.load %arg13[%c0_105, %c368] : memref<64x432xbf16, #tpu.memory_space<vmem>>, vector<64x16xbf16>
    tpu.vector_store %arg13[%c0_105, %c368], %77 {strides = array<i32>} : memref<64x432xbf16, #tpu.memory_space<vmem>>, vector<64x16xbf16>,
    %c2_106 = arith.constant 2 : index
    %c0_107 = arith.constant 0 : index
    %c0_108 = arith.constant 0 : index
    %79 = vector.load %arg10[%c2_106, %c0_107, %c0_108] : memref<10x10x32xbf16, #tpu.memory_space<vmem>>, vector<8x8x32xbf16>
    %80 = vector.shape_cast %79 : vector<8x8x32xbf16> to vector<64x32xbf16>
    %c0_109 = arith.constant 0 : index
    %c192 = arith.constant 192 : index
    %81 = vector.load %arg13[%c0_109, %c192] : memref<64x432xbf16, #tpu.memory_space<vmem>>, vector<64x32xbf16>
    tpu.vector_store %arg13[%c0_109, %c192], %80 {strides = array<i32>} : memref<64x432xbf16, #tpu.memory_space<vmem>>, vector<64x32xbf16>,
    %c2_110 = arith.constant 2 : index
    %c0_111 = arith.constant 0 : index
    %c0_112 = arith.constant 0 : index
    %82 = vector.load %arg11[%c2_110, %c0_111, %c0_112] : memref<10x10x16xbf16, #tpu.memory_space<vmem>>, vector<8x8x16xbf16>
    %83 = vector.shape_cast %82 : vector<8x8x16xbf16> to vector<64x16xbf16>
    %c0_113 = arith.constant 0 : index
    %c384 = arith.constant 384 : index
    %84 = vector.load %arg13[%c0_113, %c384] : memref<64x432xbf16, #tpu.memory_space<vmem>>, vector<64x16xbf16>
    tpu.vector_store %arg13[%c0_113, %c384], %83 {strides = array<i32>} : memref<64x432xbf16, #tpu.memory_space<vmem>>, vector<64x16xbf16>,
    %c2_114 = arith.constant 2 : index
    %c1_115 = arith.constant 1 : index
    %c0_116 = arith.constant 0 : index
    %85 = vector.load %arg10[%c2_114, %c1_115, %c0_116] : memref<10x10x32xbf16, #tpu.memory_space<vmem>>, vector<8x8x32xbf16>
    %86 = vector.shape_cast %85 : vector<8x8x32xbf16> to vector<64x32xbf16>
    %c0_117 = arith.constant 0 : index
    %c224 = arith.constant 224 : index
    %87 = vector.load %arg13[%c0_117, %c224] : memref<64x432xbf16, #tpu.memory_space<vmem>>, vector<64x32xbf16>
    tpu.vector_store %arg13[%c0_117, %c224], %86 {strides = array<i32>} : memref<64x432xbf16, #tpu.memory_space<vmem>>, vector<64x32xbf16>,
    %c2_118 = arith.constant 2 : index
    %c1_119 = arith.constant 1 : index
    %c0_120 = arith.constant 0 : index
    %88 = vector.load %arg11[%c2_118, %c1_119, %c0_120] : memref<10x10x16xbf16, #tpu.memory_space<vmem>>, vector<8x8x16xbf16>
    %89 = vector.shape_cast %88 : vector<8x8x16xbf16> to vector<64x16xbf16>
    %c0_121 = arith.constant 0 : index
    %c400 = arith.constant 400 : index
    %90 = vector.load %arg13[%c0_121, %c400] : memref<64x432xbf16, #tpu.memory_space<vmem>>, vector<64x16xbf16>
    tpu.vector_store %arg13[%c0_121, %c400], %89 {strides = array<i32>} : memref<64x432xbf16, #tpu.memory_space<vmem>>, vector<64x16xbf16>,
    %c2_122 = arith.constant 2 : index
    %c2_123 = arith.constant 2 : index
    %c0_124 = arith.constant 0 : index
    %91 = vector.load %arg10[%c2_122, %c2_123, %c0_124] : memref<10x10x32xbf16, #tpu.memory_space<vmem>>, vector<8x8x32xbf16>
    %92 = vector.shape_cast %91 : vector<8x8x32xbf16> to vector<64x32xbf16>
    %c0_125 = arith.constant 0 : index
    %c256 = arith.constant 256 : index
    %93 = vector.load %arg13[%c0_125, %c256] : memref<64x432xbf16, #tpu.memory_space<vmem>>, vector<64x32xbf16>
    tpu.vector_store %arg13[%c0_125, %c256], %92 {strides = array<i32>} : memref<64x432xbf16, #tpu.memory_space<vmem>>, vector<64x32xbf16>,
    %c2_126 = arith.constant 2 : index
    %c2_127 = arith.constant 2 : index
    %c0_128 = arith.constant 0 : index
    %94 = vector.load %arg11[%c2_126, %c2_127, %c0_128] : memref<10x10x16xbf16, #tpu.memory_space<vmem>>, vector<8x8x16xbf16>
    %95 = vector.shape_cast %94 : vector<8x8x16xbf16> to vector<64x16xbf16>
    %c0_129 = arith.constant 0 : index
    %c416 = arith.constant 416 : index
    %96 = vector.load %arg13[%c0_129, %c416] : memref<64x432xbf16, #tpu.memory_space<vmem>>, vector<64x16xbf16>
    tpu.vector_store %arg13[%c0_129, %c416], %95 {strides = array<i32>} : memref<64x432xbf16, #tpu.memory_space<vmem>>, vector<64x16xbf16>,
    %c0_130 = arith.constant 0 : index
    %c0_131 = arith.constant 0 : index
    %97 = vector.load %arg13[%c0_130, %c0_131] : memref<64x432xbf16, #tpu.memory_space<vmem>>, vector<64x432xbf16>
    %c0_132 = arith.constant 0 : index
    %c0_133 = arith.constant 0 : index
    %98 = vector.load %arg3[%c0_132, %c0_133] : memref<432x32xbf16, #tpu.memory_space<vmem>>, vector<432x32xbf16>
    %cst_134 = arith.constant dense<0.000000e+00> : vector<64x32xf32>
    %99 = tpu.matmul %97, %98, %cst_134 {dimension_numbers = #tpu.dot_dimension_numbers<[1], [0], [0], [1], [0, 0, 1, 1], [], []>} : vector<64x432xbf16>, vector<432x32xbf16>, vector<64x32xf32> -> vector<64x32xf32>
    %c0_135 = arith.constant 0 : index
    %c0_136 = arith.constant 0 : index
    %100 = vector.load %arg4[%c0_135, %c0_136] : memref<1x32xf32, #tpu.memory_space<vmem>>, vector<1x32xf32>
    %101 = vector.broadcast %100 : vector<1x32xf32> to vector<64x32xf32>
    %102 = arith.mulf %99, %101 : vector<64x32xf32>
    %c0_137 = arith.constant 0 : index
    %c0_138 = arith.constant 0 : index
    %103 = vector.load %arg5[%c0_137, %c0_138] : memref<1x32xf32, #tpu.memory_space<vmem>>, vector<1x32xf32>
    %104 = vector.broadcast %103 : vector<1x32xf32> to vector<64x32xf32>
    %105 = arith.addf %102, %104 : vector<64x32xf32>
    %cst_139 = arith.constant 0.000000e+00 : f32
    %106 = vector.broadcast %cst_139 : f32 to vector<64x32xf32>
    %107 = arith.maximumf %105, %106 : vector<64x32xf32>
    %108 = arith.truncf %107 : vector<64x32xf32> to vector<64x32xbf16>
    %109 = vector.shape_cast %108 : vector<64x32xbf16> to vector<8x8x32xbf16>
    %c1_140 = arith.constant 1 : index
    %c1_141 = arith.constant 1 : index
    %c0_142 = arith.constant 0 : index
    %110 = vector.load %arg12[%c1_140, %c1_141, %c0_142] : memref<10x10x32xbf16, #tpu.memory_space<vmem>>, vector<8x8x32xbf16>
    tpu.vector_store %arg12[%c1_140, %c1_141, %c0_142], %109 {strides = array<i32>} : memref<10x10x32xbf16, #tpu.memory_space<vmem>>, vector<8x8x32xbf16>,
    %c0_143 = arith.constant 0 : index
    %c0_144 = arith.constant 0 : index
    %c0_145 = arith.constant 0 : index
    %111 = vector.load %arg12[%c0_143, %c0_144, %c0_145] : memref<10x10x32xbf16, #tpu.memory_space<vmem>>, vector<8x8x32xbf16>
    %112 = vector.shape_cast %111 : vector<8x8x32xbf16> to vector<64x32xbf16>
    %c0_146 = arith.constant 0 : index
    %c0_147 = arith.constant 0 : index
    %113 = vector.load %arg14[%c0_146, %c0_147] : memref<64x288xbf16, #tpu.memory_space<vmem>>, vector<64x32xbf16>
    tpu.vector_store %arg14[%c0_146, %c0_147], %112 {strides = array<i32>} : memref<64x288xbf16, #tpu.memory_space<vmem>>, vector<64x32xbf16>,
    %c0_148 = arith.constant 0 : index
    %c1_149 = arith.constant 1 : index
    %c0_150 = arith.constant 0 : index
    %114 = vector.load %arg12[%c0_148, %c1_149, %c0_150] : memref<10x10x32xbf16, #tpu.memory_space<vmem>>, vector<8x8x32xbf16>
    %115 = vector.shape_cast %114 : vector<8x8x32xbf16> to vector<64x32xbf16>
    %c0_151 = arith.constant 0 : index
    %c32_152 = arith.constant 32 : index
    %116 = vector.load %arg14[%c0_151, %c32_152] : memref<64x288xbf16, #tpu.memory_space<vmem>>, vector<64x32xbf16>
    tpu.vector_store %arg14[%c0_151, %c32_152], %115 {strides = array<i32>} : memref<64x288xbf16, #tpu.memory_space<vmem>>, vector<64x32xbf16>,
    %c0_153 = arith.constant 0 : index
    %c2_154 = arith.constant 2 : index
    %c0_155 = arith.constant 0 : index
    %117 = vector.load %arg12[%c0_153, %c2_154, %c0_155] : memref<10x10x32xbf16, #tpu.memory_space<vmem>>, vector<8x8x32xbf16>
    %118 = vector.shape_cast %117 : vector<8x8x32xbf16> to vector<64x32xbf16>
    %c0_156 = arith.constant 0 : index
    %c64_157 = arith.constant 64 : index
    %119 = vector.load %arg14[%c0_156, %c64_157] : memref<64x288xbf16, #tpu.memory_space<vmem>>, vector<64x32xbf16>
    tpu.vector_store %arg14[%c0_156, %c64_157], %118 {strides = array<i32>} : memref<64x288xbf16, #tpu.memory_space<vmem>>, vector<64x32xbf16>,
    %c1_158 = arith.constant 1 : index
    %c0_159 = arith.constant 0 : index
    %c0_160 = arith.constant 0 : index
    %120 = vector.load %arg12[%c1_158, %c0_159, %c0_160] : memref<10x10x32xbf16, #tpu.memory_space<vmem>>, vector<8x8x32xbf16>
    %121 = vector.shape_cast %120 : vector<8x8x32xbf16> to vector<64x32xbf16>
    %c0_161 = arith.constant 0 : index
    %c96_162 = arith.constant 96 : index
    %122 = vector.load %arg14[%c0_161, %c96_162] : memref<64x288xbf16, #tpu.memory_space<vmem>>, vector<64x32xbf16>
    tpu.vector_store %arg14[%c0_161, %c96_162], %121 {strides = array<i32>} : memref<64x288xbf16, #tpu.memory_space<vmem>>, vector<64x32xbf16>,
    %c1_163 = arith.constant 1 : index
    %c1_164 = arith.constant 1 : index
    %c0_165 = arith.constant 0 : index
    %123 = vector.load %arg12[%c1_163, %c1_164, %c0_165] : memref<10x10x32xbf16, #tpu.memory_space<vmem>>, vector<8x8x32xbf16>
    %124 = vector.shape_cast %123 : vector<8x8x32xbf16> to vector<64x32xbf16>
    %c0_166 = arith.constant 0 : index
    %c128_167 = arith.constant 128 : index
    %125 = vector.load %arg14[%c0_166, %c128_167] : memref<64x288xbf16, #tpu.memory_space<vmem>>, vector<64x32xbf16>
    tpu.vector_store %arg14[%c0_166, %c128_167], %124 {strides = array<i32>} : memref<64x288xbf16, #tpu.memory_space<vmem>>, vector<64x32xbf16>,
    %c1_168 = arith.constant 1 : index
    %c2_169 = arith.constant 2 : index
    %c0_170 = arith.constant 0 : index
    %126 = vector.load %arg12[%c1_168, %c2_169, %c0_170] : memref<10x10x32xbf16, #tpu.memory_space<vmem>>, vector<8x8x32xbf16>
    %127 = vector.shape_cast %126 : vector<8x8x32xbf16> to vector<64x32xbf16>
    %c0_171 = arith.constant 0 : index
    %c160_172 = arith.constant 160 : index
    %128 = vector.load %arg14[%c0_171, %c160_172] : memref<64x288xbf16, #tpu.memory_space<vmem>>, vector<64x32xbf16>
    tpu.vector_store %arg14[%c0_171, %c160_172], %127 {strides = array<i32>} : memref<64x288xbf16, #tpu.memory_space<vmem>>, vector<64x32xbf16>,
    %c2_173 = arith.constant 2 : index
    %c0_174 = arith.constant 0 : index
    %c0_175 = arith.constant 0 : index
    %129 = vector.load %arg12[%c2_173, %c0_174, %c0_175] : memref<10x10x32xbf16, #tpu.memory_space<vmem>>, vector<8x8x32xbf16>
    %130 = vector.shape_cast %129 : vector<8x8x32xbf16> to vector<64x32xbf16>
    %c0_176 = arith.constant 0 : index
    %c192_177 = arith.constant 192 : index
    %131 = vector.load %arg14[%c0_176, %c192_177] : memref<64x288xbf16, #tpu.memory_space<vmem>>, vector<64x32xbf16>
    tpu.vector_store %arg14[%c0_176, %c192_177], %130 {strides = array<i32>} : memref<64x288xbf16, #tpu.memory_space<vmem>>, vector<64x32xbf16>,
    %c2_178 = arith.constant 2 : index
    %c1_179 = arith.constant 1 : index
    %c0_180 = arith.constant 0 : index
    %132 = vector.load %arg12[%c2_178, %c1_179, %c0_180] : memref<10x10x32xbf16, #tpu.memory_space<vmem>>, vector<8x8x32xbf16>
    %133 = vector.shape_cast %132 : vector<8x8x32xbf16> to vector<64x32xbf16>
    %c0_181 = arith.constant 0 : index
    %c224_182 = arith.constant 224 : index
    %134 = vector.load %arg14[%c0_181, %c224_182] : memref<64x288xbf16, #tpu.memory_space<vmem>>, vector<64x32xbf16>
    tpu.vector_store %arg14[%c0_181, %c224_182], %133 {strides = array<i32>} : memref<64x288xbf16, #tpu.memory_space<vmem>>, vector<64x32xbf16>,
    %c2_183 = arith.constant 2 : index
    %c2_184 = arith.constant 2 : index
    %c0_185 = arith.constant 0 : index
    %135 = vector.load %arg12[%c2_183, %c2_184, %c0_185] : memref<10x10x32xbf16, #tpu.memory_space<vmem>>, vector<8x8x32xbf16>
    %136 = vector.shape_cast %135 : vector<8x8x32xbf16> to vector<64x32xbf16>
    %c0_186 = arith.constant 0 : index
    %c256_187 = arith.constant 256 : index
    %137 = vector.load %arg14[%c0_186, %c256_187] : memref<64x288xbf16, #tpu.memory_space<vmem>>, vector<64x32xbf16>
    tpu.vector_store %arg14[%c0_186, %c256_187], %136 {strides = array<i32>} : memref<64x288xbf16, #tpu.memory_space<vmem>>, vector<64x32xbf16>,
    %c0_188 = arith.constant 0 : index
    %c0_189 = arith.constant 0 : index
    %138 = vector.load %arg14[%c0_188, %c0_189] : memref<64x288xbf16, #tpu.memory_space<vmem>>, vector<64x288xbf16>
    %c0_190 = arith.constant 0 : index
    %c0_191 = arith.constant 0 : index
    %139 = vector.load %arg6[%c0_190, %c0_191] : memref<288x128xbf16, #tpu.memory_space<vmem>>, vector<288x128xbf16>
    %cst_192 = arith.constant dense<0.000000e+00> : vector<64x128xf32>
    %140 = tpu.matmul %138, %139, %cst_192 {dimension_numbers = #tpu.dot_dimension_numbers<[1], [0], [0], [1], [0, 0, 1, 1], [], []>} : vector<64x288xbf16>, vector<288x128xbf16>, vector<64x128xf32> -> vector<64x128xf32>
    %c0_193 = arith.constant 0 : index
    %c0_194 = arith.constant 0 : index
    %141 = vector.load %arg7[%c0_193, %c0_194] : memref<1x128xf32, #tpu.memory_space<vmem>>, vector<1x128xf32>
    %142 = vector.broadcast %141 : vector<1x128xf32> to vector<64x128xf32>
    %143 = arith.mulf %140, %142 : vector<64x128xf32>
    %c0_195 = arith.constant 0 : index
    %c0_196 = arith.constant 0 : index
    %144 = vector.load %arg8[%c0_195, %c0_196] : memref<1x128xf32, #tpu.memory_space<vmem>>, vector<1x128xf32>
    %145 = vector.broadcast %144 : vector<1x128xf32> to vector<64x128xf32>
    %146 = arith.addf %143, %145 : vector<64x128xf32>
    %cst_197 = arith.constant 0.000000e+00 : f32
    %147 = vector.broadcast %cst_197 : f32 to vector<64x128xf32>
    %148 = arith.maximumf %146, %147 : vector<64x128xf32>
    %149 = arith.truncf %148 : vector<64x128xf32> to vector<64x128xbf16>
    %c0_198 = arith.constant 0 : index
    %c0_199 = arith.constant 0 : index
    %c0_200 = arith.constant 0 : index
    %150 = vector.load %arg9[%c0_198, %c0_199, %c0_200] : memref<1x64x128xbf16, #tpu.memory_space<vmem>>, vector<1x64x128xbf16>
    %151 = vector.shape_cast %150 : vector<1x64x128xbf16> to vector<64x128xbf16>
    %152 = vector.shape_cast %149 : vector<64x128xbf16> to vector<1x64x128xbf16>
    tpu.vector_store %arg9[%c0_198, %c0_199, %c0_200], %152 {strides = array<i32>} : memref<1x64x128xbf16, #tpu.memory_space<vmem>>, vector<1x64x128xbf16>,
    return
  }
  func.func @transform_0(%arg0: i32) -> (i32, i32, i32, i32) {
    %c0_i32 = arith.constant 0 : i32
    %c0_i32_0 = arith.constant 0 : i32
    %c0_i32_1 = arith.constant 0 : i32
    %c0_i32_2 = arith.constant 0 : i32
    return %arg0, %c0_i32, %c0_i32_0, %c0_i32_1 : i32, i32, i32, i32
  }
  func.func @transform_1(%arg0: i32) -> (i32, i32, i32, i32) {
    %c0_i32 = arith.constant 0 : i32
    %c0_i32_0 = arith.constant 0 : i32
    %c0_i32_1 = arith.constant 0 : i32
    %c0_i32_2 = arith.constant 0 : i32
    return %arg0, %c0_i32, %c0_i32_0, %c0_i32_1 : i32, i32, i32, i32
  }
  func.func @transform_2(%arg0: i32) -> (i32, i32) {
    %c0_i32 = arith.constant 0 : i32
    %c0_i32_0 = arith.constant 0 : i32
    %c0_i32_1 = arith.constant 0 : i32
    return %c0_i32, %c0_i32_0 : i32, i32
  }
  func.func @transform_3(%arg0: i32) -> (i32, i32) {
    %c0_i32 = arith.constant 0 : i32
    %c0_i32_0 = arith.constant 0 : i32
    %c0_i32_1 = arith.constant 0 : i32
    return %c0_i32, %c0_i32_0 : i32, i32
  }
  func.func @transform_4(%arg0: i32) -> (i32, i32) {
    %c0_i32 = arith.constant 0 : i32
    %c0_i32_0 = arith.constant 0 : i32
    %c0_i32_1 = arith.constant 0 : i32
    return %c0_i32, %c0_i32_0 : i32, i32
  }
  func.func @transform_5(%arg0: i32) -> (i32, i32) {
    %c0_i32 = arith.constant 0 : i32
    %c0_i32_0 = arith.constant 0 : i32
    %c0_i32_1 = arith.constant 0 : i32
    return %c0_i32, %c0_i32_0 : i32, i32
  }
  func.func @transform_6(%arg0: i32) -> (i32, i32) {
    %c0_i32 = arith.constant 0 : i32
    %c0_i32_0 = arith.constant 0 : i32
    %c0_i32_1 = arith.constant 0 : i32
    return %c0_i32, %c0_i32_0 : i32, i32
  }
  func.func @transform_7(%arg0: i32) -> (i32, i32) {
    %c0_i32 = arith.constant 0 : i32
    %c0_i32_0 = arith.constant 0 : i32
    %c0_i32_1 = arith.constant 0 : i32
    return %c0_i32, %c0_i32_0 : i32, i32
  }
  func.func @transform_8(%arg0: i32) -> (i32, i32, i32) {
    %c0_i32 = arith.constant 0 : i32
    %c0_i32_0 = arith.constant 0 : i32
    %c0_i32_1 = arith.constant 0 : i32
    return %arg0, %c0_i32, %c0_i32_0 : i32, i32, i32
  }
}

</mosaic_0001>

<llo_original>
// kernel: tpu_custom_call.1
$region0: #{tpu_custom_call.1}
  #allocation0 [shape = 'u32[]', space=smem, size = 0x4, offset = 0x4, fixed_abs, tag = 'smem constant byte address 0x4 - core index']
  #allocation1 [shape = 'u32[144,128]{1,0:T(1,128)}', space=vmem, size = 0x12000, scoped, tag = 'internal scratch']
  #allocation2 [shape = 'bf16[10,10,32]{2,1,0:T(8,128)(2,1)}', space=vmem, size = 0xa000, scoped, tag = 'scratch operand']
  #allocation3 [shape = 'bf16[10,10,16]{2,1,0:T(8,128)(2,1)}', space=vmem, size = 0xa000, scoped, tag = 'scratch operand']
  #allocation4 [shape = 'bf16[10,10,32]{2,1,0:T(8,128)(2,1)}', space=vmem, size = 0xa000, scoped, tag = 'scratch operand']
  #allocation5 [shape = 'bf16[64,432]{1,0:T(8,128)(2,1)}', space=vmem, size = 0x10000, scoped, tag = 'scratch operand']
  #allocation6 [shape = 'bf16[64,288]{1,0:T(8,128)(2,1)}', space=vmem, size = 0xc000, scoped, tag = 'scratch operand']
  %s0 = inlined_call_operand.vmem [shape: bf16[2,4,4,32], index: 0, kind: input, shape index: {}]
  %s1 = inlined_call_operand.vmem [shape: bf16[2,8,8,16], index: 1, kind: input, shape index: {}]
  %s2 = inlined_call_operand.vmem [shape: bf16[432,32], index: 2, kind: input, shape index: {}]
  %s3 = inlined_call_operand.vmem [shape: f32[1,32], index: 3, kind: input, shape index: {}]
  %s4 = inlined_call_operand.vmem [shape: f32[1,32], index: 4, kind: input, shape index: {}]
  %s5 = inlined_call_operand.vmem [shape: bf16[288,128], index: 5, kind: input, shape index: {}]
  %s6 = inlined_call_operand.vmem [shape: f32[1,128], index: 6, kind: input, shape index: {}]
  %s7 = inlined_call_operand.vmem [shape: f32[1,128], index: 7, kind: input, shape index: {}]
  %s8 = inlined_call_operand.hbm [shape: bf16[2,64,128], index: 8, kind: output, shape index: {}]
  %s9 = sld [smem:[#allocation0]]
  $region65: #{tpu_custom_call.1} parent=0
    _
  %s11 = ssub.s32 1, %s9
  %s12 = scalar_select 0, %s11, %s9
  $region1: #{tpu_custom_call.1} parent=0
    #allocation7 [shape = 'u8[32768]{0}', space=vmem, size = 0x8000, scoped, tag = 'output window, operand 0']
    #allocation8 [shape = 's32[2]{0}', space=sflag, size = 0x8, scoped, tag = 'scoped memory for tpu_custom_call.1']
    %13 = vsyncpa [#allocation8], 0
    %s14 = scalar_lea.sflag [#allocation8], 1
    %15 = vsyncpa %s14, 0
    loop: start=0, step=1, limit=4
    $region2: #{tpu_custom_call.1} parent=1 // loop_pre_header
      _
    $region3: #{tpu_custom_call.1} parent=1 // loop_header
      %s17 = sphi 0, %s21
      %p18 = scmp.ge.s32.totalorder %s17, 4
      %s27 = sphi 0, %s29
      %s30 = sphi 0, %s27
      %s31 = sphi 0, %s30
      %s47 = sphi 0, %s31
      %s53 = sphi 0, %s55
      %s56 = sphi 0, %s53
      %s57 = sphi 0, %s56
      %s73 = sphi 0, %s57
      %s77 = sphi 0, %s77
      %s79 = sphi 0, %s77
      %s80 = sphi 0, %s79
      %s94 = sphi 0, %s80
      %s98 = sphi 0, %s98
      %s100 = sphi 0, %s98
      %s101 = sphi 0, %s100
      %s115 = sphi 0, %s101
      %s119 = sphi 0, %s119
      %s121 = sphi 0, %s119
      %s122 = sphi 0, %s121
      %s136 = sphi 0, %s122
      %s140 = sphi 0, %s140
      %s142 = sphi 0, %s140
      %s143 = sphi 0, %s142
      %s157 = sphi 0, %s143
      %s161 = sphi 0, %s161
      %s163 = sphi 0, %s161
      %s164 = sphi 0, %s163
      %s178 = sphi 0, %s164
      %s182 = sphi 0, %s182
      %s184 = sphi 0, %s182
      %s185 = sphi 0, %s184
      %s199 = sphi 0, %s185
      %s205 = sphi 0, %s207
      %s208 = sphi 0, %s205
      %s209 = sphi 0, %s208
      %s225 = sphi 0, %s209
    $region4: #{tpu_custom_call.1} parent=1 // loop_header_branch
      %20 = sbr.rel (%p18) target = $region8
    $region5: #{tpu_custom_call.1} parent=1 // loop_body
      %s22 = ssub.s32 %s17, 1
      %s23 = ssub.s32 %s17, 2
      %s24 = sadd.s32 %s17, 1
      %s25 = ssub.s32 %s17, %s24
      %p26 = scmp.eq.s32.totalorder %s25, 0
      %s28 = sadd.s32 %s27, 1
      %s29 = scalar_select %p26, %s27, %s28
      %p32 = pneg %p26
      %p33 = scmp.eq.s32.totalorder %s17, 1
      %p34 = por %p32, %p33
      %p35 = scmp.ne.s32.totalorder %s27, %s30
      %p36 = scmp.eq.s32.totalorder %s17, 0
      %p37 = por %p35, %p36
      %p38 = scmp.ne.s32.totalorder %s27, %s30
      %p39 = scmp.eq.s32.totalorder %s22, 1
      %p40 = por %p38, %p39
      %p41 = scmp.ne.s32.totalorder %s30, %s31
      %p42 = scmp.eq.s32.totalorder %s22, 0
      %p43 = por %p41, %p42
      %p44 = scmp.ne.s32.totalorder %s30, %s31
      %p45 = scmp.eq.s32.totalorder %s23, 1
      %p46 = por %p44, %p45
      %p48 = scmp.ne.s32.totalorder %s31, %s47
      %p49 = scmp.eq.s32.totalorder %s23, 0
      %p50 = por %p48, %p49
      %s51 = ssub.s32 %s17, %s24
      %p52 = scmp.eq.s32.totalorder %s51, 0
      %s54 = sadd.s32 %s53, 1
      %s55 = scalar_select %p52, %s53, %s54
      %p58 = pneg %p52
      %p59 = scmp.eq.s32.totalorder %s17, 1
      %p60 = por %p58, %p59
      %p61 = scmp.ne.s32.totalorder %s53, %s56
      %p62 = scmp.eq.s32.totalorder %s17, 0
      %p63 = por %p61, %p62
      %p64 = scmp.ne.s32.totalorder %s53, %s56
      %p65 = scmp.eq.s32.totalorder %s22, 1
      %p66 = por %p64, %p65
      %p67 = scmp.ne.s32.totalorder %s56, %s57
      %p68 = scmp.eq.s32.totalorder %s22, 0
      %p69 = por %p67, %p68
      %p70 = scmp.ne.s32.totalorder %s56, %s57
      %p71 = scmp.eq.s32.totalorder %s23, 1
      %p72 = por %p70, %p71
      %p74 = scmp.ne.s32.totalorder %s57, %s73
      %p75 = scmp.eq.s32.totalorder %s23, 0
      %p76 = por %p74, %p75
      %s78 = sadd.s32 %s77, 1
      %p81 = scmp.eq.s32.totalorder %s17, 1
      %p82 = scmp.ne.s32.totalorder %s77, %s79
      %p83 = scmp.eq.s32.totalorder %s17, 0
      %p84 = por %p82, %p83
      %p85 = scmp.ne.s32.totalorder %s77, %s79
      %p86 = scmp.eq.s32.totalorder %s22, 1
      %p87 = por %p85, %p86
      %p88 = scmp.ne.s32.totalorder %s79, %s80
      %p89 = scmp.eq.s32.totalorder %s22, 0
      %p90 = por %p88, %p89
      %p91 = scmp.ne.s32.totalorder %s79, %s80
      %p92 = scmp.eq.s32.totalorder %s23, 1
      %p93 = por %p91, %p92
      %p95 = scmp.ne.s32.totalorder %s80, %s94
      %p96 = scmp.eq.s32.totalorder %s23, 0
      %p97 = por %p95, %p96
      %s99 = sadd.s32 %s98, 1
      %p102 = scmp.eq.s32.totalorder %s17, 1
      %p103 = scmp.ne.s32.totalorder %s98, %s100
      %p104 = scmp.eq.s32.totalorder %s17, 0
      %p105 = por %p103, %p104
      %p106 = scmp.ne.s32.totalorder %s98, %s100
      %p107 = scmp.eq.s32.totalorder %s22, 1
      %p108 = por %p106, %p107
      %p109 = scmp.ne.s32.totalorder %s100, %s101
      %p110 = scmp.eq.s32.totalorder %s22, 0
      %p111 = por %p109, %p110
      %p112 = scmp.ne.s32.totalorder %s100, %s101
      %p113 = scmp.eq.s32.totalorder %s23, 1
      %p114 = por %p112, %p113
      %p116 = scmp.ne.s32.totalorder %s101, %s115
      %p117 = scmp.eq.s32.totalorder %s23, 0
      %p118 = por %p116, %p117
      %s120 = sadd.s32 %s119, 1
      %p123 = scmp.eq.s32.totalorder %s17, 1
      %p124 = scmp.ne.s32.totalorder %s119, %s121
      %p125 = scmp.eq.s32.totalorder %s17, 0
      %p126 = por %p124, %p125
      %p127 = scmp.ne.s32.totalorder %s119, %s121
      %p128 = scmp.eq.s32.totalorder %s22, 1
      %p129 = por %p127, %p128
      %p130 = scmp.ne.s32.totalorder %s121, %s122
      %p131 = scmp.eq.s32.totalorder %s22, 0
      %p132 = por %p130, %p131
      %p133 = scmp.ne.s32.totalorder %s121, %s122
      %p134 = scmp.eq.s32.totalorder %s23, 1
      %p135 = por %p133, %p134
      %p137 = scmp.ne.s32.totalorder %s122, %s136
      %p138 = scmp.eq.s32.totalorder %s23, 0
      %p139 = por %p137, %p138
      %s141 = sadd.s32 %s140, 1
      %p144 = scmp.eq.s32.totalorder %s17, 1
      %p145 = scmp.ne.s32.totalorder %s140, %s142
      %p146 = scmp.eq.s32.totalorder %s17, 0
      %p147 = por %p145, %p146
      %p148 = scmp.ne.s32.totalorder %s140, %s142
      %p149 = scmp.eq.s32.totalorder %s22, 1
      %p150 = por %p148, %p149
      %p151 = scmp.ne.s32.totalorder %s142, %s143
      %p152 = scmp.eq.s32.totalorder %s22, 0
      %p153 = por %p151, %p152
      %p154 = scmp.ne.s32.totalorder %s142, %s143
      %p155 = scmp.eq.s32.totalorder %s23, 1
      %p156 = por %p154, %p155
      %p158 = scmp.ne.s32.totalorder %s143, %s157
      %p159 = scmp.eq.s32.totalorder %s23, 0
      %p160 = por %p158, %p159
      %s162 = sadd.s32 %s161, 1
      %p165 = scmp.eq.s32.totalorder %s17, 1
      %p166 = scmp.ne.s32.totalorder %s161, %s163
      %p167 = scmp.eq.s32.totalorder %s17, 0
      %p168 = por %p166, %p167
      %p169 = scmp.ne.s32.totalorder %s161, %s163
      %p170 = scmp.eq.s32.totalorder %s22, 1
      %p171 = por %p169, %p170
      %p172 = scmp.ne.s32.totalorder %s163, %s164
      %p173 = scmp.eq.s32.totalorder %s22, 0
      %p174 = por %p172, %p173
      %p175 = scmp.ne.s32.totalorder %s163, %s164
      %p176 = scmp.eq.s32.totalorder %s23, 1
      %p177 = por %p175, %p176
      %p179 = scmp.ne.s32.totalorder %s164, %s178
      %p180 = scmp.eq.s32.totalorder %s23, 0
      %p181 = por %p179, %p180
      %s183 = sadd.s32 %s182, 1
      %p186 = scmp.eq.s32.totalorder %s17, 1
      %p187 = scmp.ne.s32.totalorder %s182, %s184
      %p188 = scmp.eq.s32.totalorder %s17, 0
      %p189 = por %p187, %p188
      %p190 = scmp.ne.s32.totalorder %s182, %s184
      %p191 = scmp.eq.s32.totalorder %s22, 1
      %p192 = por %p190, %p191
      %p193 = scmp.ne.s32.totalorder %s184, %s185
      %p194 = scmp.eq.s32.totalorder %s22, 0
      %p195 = por %p193, %p194
      %p196 = scmp.ne.s32.totalorder %s184, %s185
      %p197 = scmp.eq.s32.totalorder %s23, 1
      %p198 = por %p196, %p197
      %p200 = scmp.ne.s32.totalorder %s185, %s199
      %p201 = scmp.eq.s32.totalorder %s23, 0
      %p202 = por %p200, %p201
      %s203 = ssub.s32 %s17, %s24
      %p204 = scmp.eq.s32.totalorder %s203, 0
      %s206 = sadd.s32 %s205, 1
      %s207 = scalar_select %p204, %s205, %s206
      %p210 = pneg %p204
      %p211 = scmp.eq.s32.totalorder %s17, 1
      %p212 = por %p210, %p211
      %p213 = scmp.ne.s32.totalorder %s205, %s208
      %p214 = scmp.eq.s32.totalorder %s17, 0
      %p215 = por %p213, %p214
      %p216 = scmp.ne.s32.totalorder %s205, %s208
      %p217 = scmp.eq.s32.totalorder %s22, 1
      %p218 = por %p216, %p217
      %p219 = scmp.ne.s32.totalorder %s208, %s209
      %p220 = scmp.eq.s32.totalorder %s22, 0
      %p221 = por %p219, %p220
      %p222 = scmp.ne.s32.totalorder %s208, %s209
      %p223 = scmp.eq.s32.totalorder %s23, 1
      %p224 = por %p222, %p223
      %p226 = scmp.ne.s32.totalorder %s209, %s225
      %p227 = scmp.eq.s32.totalorder %s23, 0
      %p228 = por %p226, %p227
      %p229 = scmp.le.s32.totalorder 1, %s17
      %p230 = scmp.lt.s32.totalorder %s17, 3
      %p231 = pnand %p229, %p230
      %p232 = pneg %p231
      // Predicated region
      $region9: #{tpu_custom_call.1} parent=5 // pred_check
        _
      $region10: #{tpu_custom_call.1} parent=5 // pred_check_branch
        %234 = sbr.rel (%p231) target = $region12
      $region11: #{tpu_custom_call.1} parent=5 // pred_region
        %s235 = ssub.s32 %s17, 1
        // Predicated region
        $region13: #{tpu_custom_call.1} parent=11 // pred_check
          %p236 = pneg %p90
        $region14: #{tpu_custom_call.1} parent=11 // pred_check_branch
          %238 = sbr.rel (%p236) target = $region16
        $region15: #{tpu_custom_call.1} parent=11 // pred_region
          _
        $region16: #{tpu_custom_call.1} parent=11 // pred_fallthru
          _
        // Predicated region
        $region17: #{tpu_custom_call.1} parent=11 // pred_check
          %p239 = pneg %p111
        $region18: #{tpu_custom_call.1} parent=11 // pred_check_branch
          %241 = sbr.rel (%p239) target = $region20
        $region19: #{tpu_custom_call.1} parent=11 // pred_region
          _
        $region20: #{tpu_custom_call.1} parent=11 // pred_fallthru
          _
        // Predicated region
        $region21: #{tpu_custom_call.1} parent=11 // pred_check
          %p242 = pneg %p132
        $region22: #{tpu_custom_call.1} parent=11 // pred_check_branch
          %244 = sbr.rel (%p242) target = $region24
        $region23: #{tpu_custom_call.1} parent=11 // pred_region
          _
        $region24: #{tpu_custom_call.1} parent=11 // pred_fallthru
          _
        // Predicated region
        $region25: #{tpu_custom_call.1} parent=11 // pred_check
          %p245 = pneg %p153
        $region26: #{tpu_custom_call.1} parent=11 // pred_check_branch
          %247 = sbr.rel (%p245) target = $region28
        $region27: #{tpu_custom_call.1} parent=11 // pred_region
          _
        $region28: #{tpu_custom_call.1} parent=11 // pred_fallthru
          _
        // Predicated region
        $region29: #{tpu_custom_call.1} parent=11 // pred_check
          %p248 = pneg %p174
        $region30: #{tpu_custom_call.1} parent=11 // pred_check_branch
          %250 = sbr.rel (%p248) target = $region32
        $region31: #{tpu_custom_call.1} parent=11 // pred_region
          _
        $region32: #{tpu_custom_call.1} parent=11 // pred_fallthru
          _
        // Predicated region
        $region33: #{tpu_custom_call.1} parent=11 // pred_check
          %p251 = pneg %p195
        $region34: #{tpu_custom_call.1} parent=11 // pred_check_branch
          %253 = sbr.rel (%p251) target = $region36
        $region35: #{tpu_custom_call.1} parent=11 // pred_region
          _
        $region36: #{tpu_custom_call.1} parent=11 // pred_fallthru
          _
      $region12: #{tpu_custom_call.1} parent=5 // pred_fallthru
        _
      %p254 = scmp.lt.s32.totalorder %s17, 2
      // Predicated region
      $region37: #{tpu_custom_call.1} parent=5 // pred_check
        %p255 = pneg %p254
      $region38: #{tpu_custom_call.1} parent=5 // pred_check_branch
        %257 = sbr.rel (%p255) target = $region40
      $region39: #{tpu_custom_call.1} parent=5 // pred_region
        // Predicated region
        $region41: #{tpu_custom_call.1} parent=39 // pred_check
          %p258 = pneg %p37
        $region42: #{tpu_custom_call.1} parent=39 // pred_check_branch
          %260 = sbr.rel (%p258) target = $region44
        $region43: #{tpu_custom_call.1} parent=39 // pred_region
          %p261 = scmp.lt.s32.totalorder %s17, 1
          %s262 = scalar_select %p261, %s17, 1
          %s263 = smul.addr %s262, 4
          %s264 = smul.addr %s263, 2
          %s265 = scalar_lea.vmem %s0, %s264
        $region44: #{tpu_custom_call.1} parent=39 // pred_fallthru
          _
        // Predicated region
        $region45: #{tpu_custom_call.1} parent=39 // pred_check
          %p266 = pneg %p63
        $region46: #{tpu_custom_call.1} parent=39 // pred_check_branch
          %268 = sbr.rel (%p266) target = $region48
        $region47: #{tpu_custom_call.1} parent=39 // pred_region
          %p269 = scmp.lt.s32.totalorder %s17, 1
          %s270 = scalar_select %p269, %s17, 1
          %s271 = smul.addr %s270, 8
          %s272 = smul.addr %s271, 4
          %s273 = scalar_lea.vmem %s1, %s272
        $region48: #{tpu_custom_call.1} parent=39 // pred_fallthru
          _
      $region40: #{tpu_custom_call.1} parent=5 // pred_fallthru
        _
      %p274 = scmp.le.s32.totalorder 1, %s17
      %p275 = scmp.lt.s32.totalorder %s17, 3
      %p276 = pnand %p274, %p275
      %p277 = pneg %p276
      // Predicated region
      $region49: #{tpu_custom_call.1} parent=5 // pred_check
        _
      $region50: #{tpu_custom_call.1} parent=5 // pred_check_branch
        %279 = sbr.rel (%p276) target = $region52
      $region51: #{tpu_custom_call.1} parent=5 // pred_region
        %s280 = ssub.s32 %s17, 1
        %p281 = scmp.lt.s32.totalorder %s22, 1
        %s282 = scalar_select %p281, %s22, 1
        %s283 = smul.addr %s282, 4
        %s284 = smul.addr %s283, 2
        %s285 = scalar_lea.vmem %s0, %s284
        %p286 = pneg %p43
        %p287 = pneg %p40
        %p288 = scmp.lt.s32.totalorder %s22, 1
        %s289 = scalar_select %p288, %s22, 1
        %s290 = smul.addr %s289, 8
        %s291 = smul.addr %s290, 4
        %s292 = scalar_lea.vmem %s1, %s291
        %p293 = pneg %p69
        %p294 = pneg %p66
        %p295 = pneg %p90
        %p296 = pneg %p87
        %p297 = pneg %p111
        %p298 = pneg %p108
        %p299 = pneg %p132
        %p300 = pneg %p129
        %p301 = pneg %p153
        %p302 = pneg %p150
        %p303 = pneg %p174
        %p304 = pneg %p171
        %p305 = pneg %p195
        %p306 = pneg %p192
        %p307 = pneg %p221
        %p308 = pneg %p218
        %s309 = sand.u32 %s208, 1
        %s310 = scalar_lea.sflag [#allocation8], %s309
        %s311 = sand.u32 %s208, 1
        %s312 = smul.addr %s311, 32
        %s313 = scalar_lea.vmem [#allocation7], %s312
        %p314 = scmp.lt.s32.totalorder %s22, 1
        %s315 = scalar_select %p314, %s22, 1
        %s316 = smul.addr %s315, 4
        %s317 = smul.addr %s316, 2
        %s318 = scalar_lea.vmem %s0, %s317
        %p319 = scmp.lt.s32.totalorder %s22, 1
        %s320 = scalar_select %p319, %s22, 1
        %s321 = smul.addr %s320, 8
        %s322 = smul.addr %s321, 4
        %s323 = scalar_lea.vmem %s1, %s322
        %vm325 = vcmask 257024
        %326 = vst.msk [vmem:[#allocation2] sm:$0xf] %vm325, 0
        %vm327 = vcmask 253952
        %328 = vst.msk [vmem:[#allocation2 + $0x4] sm:$0x1] %vm327, 0
        %s329 = scalar_lea.vmem [#allocation2], 72
        %330 = vst.msk [vmem:[%s329] sm:$0xf] %vm325, 0
        %331 = vst.msk [vmem:[%s329 + $0x4] sm:$0x1] %vm327, 0
        %vm332 = vcmask 253952
        %vm333 = vsmask.f32 256
        %vm334 = vmand %vm332, %vm333
        %v335 = vld [vmem:[#allocation2] sm:$0x1]
        %v336 = vsel %vm334, 0, %v335
        %337 = vst [vmem:[#allocation2] sm:$0x1] %v336
        %v338 = vld [vmem:[#allocation2 + $0x8] sm:$0x1]
        %v339 = vsel %vm334, 0, %v338
        %340 = vst [vmem:[#allocation2 + $0x8] sm:$0x1] %v339
        %v341 = vld [vmem:[#allocation2 + $0x10] sm:$0x1]
        %v342 = vsel %vm334, 0, %v341
        %343 = vst [vmem:[#allocation2 + $0x10] sm:$0x1] %v342
        %v344 = vld [vmem:[#allocation2 + $0x18] sm:$0x1]
        %v345 = vsel %vm334, 0, %v344
        %346 = vst [vmem:[#allocation2 + $0x18] sm:$0x1] %v345
        %v347 = vld [vmem:[#allocation2 + $0x20] sm:$0x1]
        %v348 = vsel %vm334, 0, %v347
        %349 = vst [vmem:[#allocation2 + $0x20] sm:$0x1] %v348
        %v350 = vld [vmem:[#allocation2 + $0x28] sm:$0x1]
        %v351 = vsel %vm334, 0, %v350
        %352 = vst [vmem:[#allocation2 + $0x28] sm:$0x1] %v351
        %v353 = vld [vmem:[#allocation2 + $0x30] sm:$0x1]
        %v354 = vsel %vm334, 0, %v353
        %355 = vst [vmem:[#allocation2 + $0x30] sm:$0x1] %v354
        %v356 = vld [vmem:[#allocation2 + $0x38] sm:$0x1]
        %v357 = vsel %vm334, 0, %v356
        %358 = vst [vmem:[#allocation2 + $0x38] sm:$0x1] %v357
        %v359 = vld [vmem:[#allocation2 + $0x40] sm:$0x1]
        %v360 = vsel %vm334, 0, %v359
        %361 = vst [vmem:[#allocation2 + $0x40] sm:$0x1] %v360
        %v362 = vld [vmem:[#allocation2 + $0x48] sm:$0x1]
        %v363 = vsel %vm334, 0, %v362
        %364 = vst [vmem:[#allocation2 + $0x48] sm:$0x1] %v363
        %vm365 = vsmask.f32 7938
        %vm366 = vmand %vm332, %vm365
        %v367 = vld [vmem:[#allocation2 + $0x4] sm:$0x1]
        %v368 = vsel %vm366, 0, %v367
        %369 = vst [vmem:[#allocation2 + $0x4] sm:$0x1] %v368
        %v370 = vld [vmem:[#allocation2 + $0xc] sm:$0x1]
        %v371 = vsel %vm366, 0, %v370
        %372 = vst [vmem:[#allocation2 + $0xc] sm:$0x1] %v371
        %v373 = vld [vmem:[#allocation2 + $0x14] sm:$0x1]
        %v374 = vsel %vm366, 0, %v373
        %375 = vst [vmem:[#allocation2 + $0x14] sm:$0x1] %v374
        %v376 = vld [vmem:[#allocation2 + $0x1c] sm:$0x1]
        %v377 = vsel %vm366, 0, %v376
        %378 = vst [vmem:[#allocation2 + $0x1c] sm:$0x1] %v377
        %v379 = vld [vmem:[#allocation2 + $0x24] sm:$0x1]
        %v380 = vsel %vm366, 0, %v379
        %381 = vst [vmem:[#allocation2 + $0x24] sm:$0x1] %v380
        %v382 = vld [vmem:[#allocation2 + $0x2c] sm:$0x1]
        %v383 = vsel %vm366, 0, %v382
        %384 = vst [vmem:[#allocation2 + $0x2c] sm:$0x1] %v383
        %v385 = vld [vmem:[#allocation2 + $0x34] sm:$0x1]
        %v386 = vsel %vm366, 0, %v385
        %387 = vst [vmem:[#allocation2 + $0x34] sm:$0x1] %v386
        %v388 = vld [vmem:[#allocation2 + $0x3c] sm:$0x1]
        %v389 = vsel %vm366, 0, %v388
        %390 = vst [vmem:[#allocation2 + $0x3c] sm:$0x1] %v389
        %v391 = vld [vmem:[#allocation2 + $0x44] sm:$0x1]
        %v392 = vsel %vm366, 0, %v391
        %393 = vst [vmem:[#allocation2 + $0x44] sm:$0x1] %v392
        %v394 = vld [vmem:[#allocation2 + $0x4c] sm:$0x1]
        %v395 = vsel %vm366, 0, %v394
        %396 = vst [vmem:[#allocation2 + $0x4c] sm:$0x1] %v395
        %vm397 = vcmask 125952
        %398 = vst.msk [vmem:[#allocation3] sm:$0xf] %vm397, 0
        %vm399 = vcmask 122880
        %400 = vst.msk [vmem:[#allocation3 + $0x4] sm:$0x1] %vm399, 0
        %s401 = scalar_lea.vmem [#allocation3], 72
        %402 = vst.msk [vmem:[%s401] sm:$0xf] %vm397, 0
        %403 = vst.msk [vmem:[%s401 + $0x4] sm:$0x1] %vm399, 0
        %vm404 = vcmask 122880
        %vm405 = vmand %vm404, %vm333
        %v406 = vld [vmem:[#allocation3] sm:$0x1]
        %v407 = vsel %vm405, 0, %v406
        %408 = vst [vmem:[#allocation3] sm:$0x1] %v407
        %v409 = vld [vmem:[#allocation3 + $0x8] sm:$0x1]
        %v410 = vsel %vm405, 0, %v409
        %411 = vst [vmem:[#allocation3 + $0x8] sm:$0x1] %v410
        %v412 = vld [vmem:[#allocation3 + $0x10] sm:$0x1]
        %v413 = vsel %vm405, 0, %v412
        %414 = vst [vmem:[#allocation3 + $0x10] sm:$0x1] %v413
        %v415 = vld [vmem:[#allocation3 + $0x18] sm:$0x1]
        %v416 = vsel %vm405, 0, %v415
        %417 = vst [vmem:[#allocation3 + $0x18] sm:$0x1] %v416
        %v418 = vld [vmem:[#allocation3 + $0x20] sm:$0x1]
        %v419 = vsel %vm405, 0, %v418
        %420 = vst [vmem:[#allocation3 + $0x20] sm:$0x1] %v419
        %v421 = vld [vmem:[#allocation3 + $0x28] sm:$0x1]
        %v422 = vsel %vm405, 0, %v421
        %423 = vst [vmem:[#allocation3 + $0x28] sm:$0x1] %v422
        %v424 = vld [vmem:[#allocation3 + $0x30] sm:$0x1]
        %v425 = vsel %vm405, 0, %v424
        %426 = vst [vmem:[#allocation3 + $0x30] sm:$0x1] %v425
        %v427 = vld [vmem:[#allocation3 + $0x38] sm:$0x1]
        %v428 = vsel %vm405, 0, %v427
        %429 = vst [vmem:[#allocation3 + $0x38] sm:$0x1] %v428
        %v430 = vld [vmem:[#allocation3 + $0x40] sm:$0x1]
        %v431 = vsel %vm405, 0, %v430
        %432 = vst [vmem:[#allocation3 + $0x40] sm:$0x1] %v431
        %v433 = vld [vmem:[#allocation3 + $0x48] sm:$0x1]
        %v434 = vsel %vm405, 0, %v433
        %435 = vst [vmem:[#allocation3 + $0x48] sm:$0x1] %v434
        %vm436 = vmand %vm404, %vm365
        %v437 = vld [vmem:[#allocation3 + $0x4] sm:$0x1]
        %v438 = vsel %vm436, 0, %v437
        %439 = vst [vmem:[#allocation3 + $0x4] sm:$0x1] %v438
        %v440 = vld [vmem:[#allocation3 + $0xc] sm:$0x1]
        %v441 = vsel %vm436, 0, %v440
        %442 = vst [vmem:[#allocation3 + $0xc] sm:$0x1] %v441
        %v443 = vld [vmem:[#allocation3 + $0x14] sm:$0x1]
        %v444 = vsel %vm436, 0, %v443
        %445 = vst [vmem:[#allocation3 + $0x14] sm:$0x1] %v444
        %v446 = vld [vmem:[#allocation3 + $0x1c] sm:$0x1]
        %v447 = vsel %vm436, 0, %v446
        %448 = vst [vmem:[#allocation3 + $0x1c] sm:$0x1] %v447
        %v449 = vld [vmem:[#allocation3 + $0x24] sm:$0x1]
        %v450 = vsel %vm436, 0, %v449
        %451 = vst [vmem:[#allocation3 + $0x24] sm:$0x1] %v450
        %v452 = vld [vmem:[#allocation3 + $0x2c] sm:$0x1]
        %v453 = vsel %vm436, 0, %v452
        %454 = vst [vmem:[#allocation3 + $0x2c] sm:$0x1] %v453
        %v455 = vld [vmem:[#allocation3 + $0x34] sm:$0x1]
        %v456 = vsel %vm436, 0, %v455
        %457 = vst [vmem:[#allocation3 + $0x34] sm:$0x1] %v456
        %v458 = vld [vmem:[#allocation3 + $0x3c] sm:$0x1]
        %v459 = vsel %vm436, 0, %v458
        %460 = vst [vmem:[#allocation3 + $0x3c] sm:$0x1] %v459
        %v461 = vld [vmem:[#allocation3 + $0x44] sm:$0x1]
        %v462 = vsel %vm436, 0, %v461
        %463 = vst [vmem:[#allocation3 + $0x44] sm:$0x1] %v462
        %v464 = vld [vmem:[#allocation3 + $0x4c] sm:$0x1]
        %v465 = vsel %vm436, 0, %v464
        %466 = vst [vmem:[#allocation3 + $0x4c] sm:$0x1] %v465
        %467 = vst.msk [vmem:[#allocation4] sm:$0xf] %vm325, 0
        %468 = vst.msk [vmem:[#allocation4 + $0x4] sm:$0x1] %vm327, 0
        %s469 = scalar_lea.vmem [#allocation4], 72
        %470 = vst.msk [vmem:[%s469] sm:$0xf] %vm325, 0
        %471 = vst.msk [vmem:[%s469 + $0x4] sm:$0x1] %vm327, 0
        %v472 = vld [vmem:[#allocation4] sm:$0x1]
        %v473 = vsel %vm334, 0, %v472
        %474 = vst [vmem:[#allocation4] sm:$0x1] %v473
        %v475 = vld [vmem:[#allocation4 + $0x8] sm:$0x1]
        %v476 = vsel %vm334, 0, %v475
        %477 = vst [vmem:[#allocation4 + $0x8] sm:$0x1] %v476
        %v478 = vld [vmem:[#allocation4 + $0x10] sm:$0x1]
        %v479 = vsel %vm334, 0, %v478
        %480 = vst [vmem:[#allocation4 + $0x10] sm:$0x1] %v479
        %v481 = vld [vmem:[#allocation4 + $0x18] sm:$0x1]
        %v482 = vsel %vm334, 0, %v481
        %483 = vst [vmem:[#allocation4 + $0x18] sm:$0x1] %v482
        %v484 = vld [vmem:[#allocation4 + $0x20] sm:$0x1]
        %v485 = vsel %vm334, 0, %v484
        %486 = vst [vmem:[#allocation4 + $0x20] sm:$0x1] %v485
        %v487 = vld [vmem:[#allocation4 + $0x28] sm:$0x1]
        %v488 = vsel %vm334, 0, %v487
        %489 = vst [vmem:[#allocation4 + $0x28] sm:$0x1] %v488
        %v490 = vld [vmem:[#allocation4 + $0x30] sm:$0x1]
        %v491 = vsel %vm334, 0, %v490
        %492 = vst [vmem:[#allocation4 + $0x30] sm:$0x1] %v491
        %v493 = vld [vmem:[#allocation4 + $0x38] sm:$0x1]
        %v494 = vsel %vm334, 0, %v493
        %495 = vst [vmem:[#allocation4 + $0x38] sm:$0x1] %v494
        %v496 = vld [vmem:[#allocation4 + $0x40] sm:$0x1]
        %v497 = vsel %vm334, 0, %v496
        %498 = vst [vmem:[#allocation4 + $0x40] sm:$0x1] %v497
        %v499 = vld [vmem:[#allocation4 + $0x48] sm:$0x1]
        %v500 = vsel %vm334, 0, %v499
        %501 = vst [vmem:[#allocation4 + $0x48] sm:$0x1] %v500
        %v502 = vld [vmem:[#allocation4 + $0x4] sm:$0x1]
        %v503 = vsel %vm366, 0, %v502
        %504 = vst [vmem:[#allocation4 + $0x4] sm:$0x1] %v503
        %v505 = vld [vmem:[#allocation4 + $0xc] sm:$0x1]
        %v506 = vsel %vm366, 0, %v505
        %507 = vst [vmem:[#allocation4 + $0xc] sm:$0x1] %v506
        %v508 = vld [vmem:[#allocation4 + $0x14] sm:$0x1]
        %v509 = vsel %vm366, 0, %v508
        %510 = vst [vmem:[#allocation4 + $0x14] sm:$0x1] %v509
        %v511 = vld [vmem:[#allocation4 + $0x1c] sm:$0x1]
        %v512 = vsel %vm366, 0, %v511
        %513 = vst [vmem:[#allocation4 + $0x1c] sm:$0x1] %v512
        %v514 = vld [vmem:[#allocation4 + $0x24] sm:$0x1]
        %v515 = vsel %vm366, 0, %v514
        %516 = vst [vmem:[#allocation4 + $0x24] sm:$0x1] %v515
        %v517 = vld [vmem:[#allocation4 + $0x2c] sm:$0x1]
        %v518 = vsel %vm366, 0, %v517
        %519 = vst [vmem:[#allocation4 + $0x2c] sm:$0x1] %v518
        %v520 = vld [vmem:[#allocation4 + $0x34] sm:$0x1]
        %v521 = vsel %vm366, 0, %v520
        %522 = vst [vmem:[#allocation4 + $0x34] sm:$0x1] %v521
        %v523 = vld [vmem:[#allocation4 + $0x3c] sm:$0x1]
        %v524 = vsel %vm366, 0, %v523
        %525 = vst [vmem:[#allocation4 + $0x3c] sm:$0x1] %v524
        %v526 = vld [vmem:[#allocation4 + $0x44] sm:$0x1]
        %v527 = vsel %vm366, 0, %v526
        %528 = vst [vmem:[#allocation4 + $0x44] sm:$0x1] %v527
        %v529 = vld [vmem:[#allocation4 + $0x4c] sm:$0x1]
        %v530 = vsel %vm366, 0, %v529
        %531 = vst [vmem:[#allocation4 + $0x4c] sm:$0x1] %v530
        %v532 = vld [vmem:[%s318] sm:$0x3]
        %v533 = vld [vmem:[%s318 + $0x2] sm:$0x3]
        %v534 = vld [vmem:[%s318 + $0x4] sm:$0x3]
        %v535 = vld [vmem:[%s318 + $0x6] sm:$0x3]
        %v537 = vpack.i.b16 %v532, %v532
        %v539 = vlaneseq
        %v540 = vshrl.u32 %v539, 7
        %v541 = vsub.s32 0, %v540
        %v542 = vrot.slane %v537, %v541
        %v544 = vpack.i.b16 %v533, %v533
        %v546 = vlaneseq
        %v547 = vshrl.u32 %v546, 7
        %v548 = vsub.s32 0, %v547
        %v549 = vrot.slane %v544, %v548
        %v551 = vpack.i.b16 %v534, %v534
        %v553 = vlaneseq
        %v554 = vshrl.u32 %v553, 7
        %v555 = vsub.s32 0, %v554
        %v556 = vrot.slane %v551, %v555
        %v558 = vpack.i.b16 %v535, %v535
        %v560 = vlaneseq
        %v561 = vshrl.u32 %v560, 7
        %v562 = vsub.s32 0, %v561
        %v563 = vrot.slane %v558, %v562
        %s564 = scalar_lea.vmem [#allocation2], 8
        %vm565 = vcmask 254976
        %vm566 = vsmask.f32 1282
        %vm567 = vmand %vm565, %vm566
        %v568 = vld [vmem:[%s564] sm:$0x3]
        %v569 = vsel %vm567, %v542, %v568
        %570 = vst [vmem:[%s564] sm:$0x3] %v569
        %v571 = vld [vmem:[%s564 + $0x8] sm:$0x3]
        %v572 = vsel %vm567, %v542, %v571
        %573 = vst [vmem:[%s564 + $0x8] sm:$0x3] %v572
        %v574 = vld [vmem:[%s564 + $0x10] sm:$0x3]
        %v575 = vsel %vm567, %v549, %v574
        %576 = vst [vmem:[%s564 + $0x10] sm:$0x3] %v575
        %v577 = vld [vmem:[%s564 + $0x18] sm:$0x3]
        %v578 = vsel %vm567, %v549, %v577
        %579 = vst [vmem:[%s564 + $0x18] sm:$0x3] %v578
        %v580 = vld [vmem:[%s564 + $0x20] sm:$0x3]
        %v581 = vsel %vm567, %v556, %v580
        %582 = vst [vmem:[%s564 + $0x20] sm:$0x3] %v581
        %v583 = vld [vmem:[%s564 + $0x28] sm:$0x3]
        %v584 = vsel %vm567, %v556, %v583
        %585 = vst [vmem:[%s564 + $0x28] sm:$0x3] %v584
        %v586 = vld [vmem:[%s564 + $0x30] sm:$0x3]
        %v587 = vsel %vm567, %v563, %v586
        %588 = vst [vmem:[%s564 + $0x30] sm:$0x3] %v587
        %v589 = vld [vmem:[%s564 + $0x38] sm:$0x3]
        %v590 = vsel %vm567, %v563, %v589
        %591 = vst [vmem:[%s564 + $0x38] sm:$0x3] %v590
        %v592 = vshrl.u32 %v532, 16
        %v593 = vpack.i.b16 %v592, %v592
        %v595 = vlaneseq
        %v596 = vshrl.u32 %v595, 7
        %v597 = vsub.s32 0, %v596
        %v598 = vrot.slane %v593, %v597
        %v599 = vshrl.u32 %v533, 16
        %v600 = vpack.i.b16 %v599, %v599
        %v602 = vlaneseq
        %v603 = vshrl.u32 %v602, 7
        %v604 = vsub.s32 0, %v603
        %v605 = vrot.slane %v600, %v604
        %v606 = vshrl.u32 %v534, 16
        %v607 = vpack.i.b16 %v606, %v606
        %v609 = vlaneseq
        %v610 = vshrl.u32 %v609, 7
        %v611 = vsub.s32 0, %v610
        %v612 = vrot.slane %v607, %v611
        %v613 = vshrl.u32 %v535, 16
        %v614 = vpack.i.b16 %v613, %v613
        %v616 = vlaneseq
        %v617 = vshrl.u32 %v616, 7
        %v618 = vsub.s32 0, %v617
        %v619 = vrot.slane %v614, %v618
        %vm620 = vcmask 256001
        %vm621 = vsmask.f32 2310
        %vm622 = vmand %vm620, %vm621
        %v623 = vld [vmem:[%s564] sm:$0x6]
        %v624 = vsel %vm622, %v598, %v623
        %625 = vst [vmem:[%s564] sm:$0x6] %v624
        %v626 = vld [vmem:[%s564 + $0x8] sm:$0x6]
        %v627 = vsel %vm622, %v598, %v626
        %628 = vst [vmem:[%s564 + $0x8] sm:$0x6] %v627
        %v629 = vld [vmem:[%s564 + $0x10] sm:$0x6]
        %v630 = vsel %vm622, %v605, %v629
        %631 = vst [vmem:[%s564 + $0x10] sm:$0x6] %v630
        %v632 = vld [vmem:[%s564 + $0x18] sm:$0x6]
        %v633 = vsel %vm622, %v605, %v632
        %634 = vst [vmem:[%s564 + $0x18] sm:$0x6] %v633
        %v635 = vld [vmem:[%s564 + $0x20] sm:$0x6]
        %v636 = vsel %vm622, %v612, %v635
        %637 = vst [vmem:[%s564 + $0x20] sm:$0x6] %v636
        %v638 = vld [vmem:[%s564 + $0x28] sm:$0x6]
        %v639 = vsel %vm622, %v612, %v638
        %640 = vst [vmem:[%s564 + $0x28] sm:$0x6] %v639
        %v641 = vld [vmem:[%s564 + $0x30] sm:$0x6]
        %v642 = vsel %vm622, %v619, %v641
        %643 = vst [vmem:[%s564 + $0x30] sm:$0x6] %v642
        %v644 = vld [vmem:[%s564 + $0x38] sm:$0x6]
        %v645 = vsel %vm622, %v619, %v644
        %646 = vst [vmem:[%s564 + $0x38] sm:$0x6] %v645
        %v647 = vlaneseq
        %v648 = vshrl.u32 %v647, 7
        %v649 = vsub.s32 1, %v648
        %v650 = vrot.slane %v537, %v649
        %v651 = vlaneseq
        %v652 = vshrl.u32 %v651, 7
        %v653 = vsub.s32 1, %v652
        %v654 = vrot.slane %v544, %v653
        %v655 = vlaneseq
        %v656 = vshrl.u32 %v655, 7
        %v657 = vsub.s32 1, %v656
        %v658 = vrot.slane %v551, %v657
        %v659 = vlaneseq
        %v660 = vshrl.u32 %v659, 7
        %v661 = vsub.s32 1, %v660
        %v662 = vrot.slane %v558, %v661
        %vm663 = vcmask 257026
        %vm664 = vsmask.f32 3338
        %vm665 = vmand %vm663, %vm664
        %v666 = vld [vmem:[%s564] sm:$0xc]
        %v667 = vsel %vm665, %v650, %v666
        %668 = vst [vmem:[%s564] sm:$0xc] %v667
        %v669 = vld [vmem:[%s564 + $0x8] sm:$0xc]
        %v670 = vsel %vm665, %v650, %v669
        %671 = vst [vmem:[%s564 + $0x8] sm:$0xc] %v670
        %v672 = vld [vmem:[%s564 + $0x10] sm:$0xc]
        %v673 = vsel %vm665, %v654, %v672
        %674 = vst [vmem:[%s564 + $0x10] sm:$0xc] %v673
        %v675 = vld [vmem:[%s564 + $0x18] sm:$0xc]
        %v676 = vsel %vm665, %v654, %v675
        %677 = vst [vmem:[%s564 + $0x18] sm:$0xc] %v676
        %v678 = vld [vmem:[%s564 + $0x20] sm:$0xc]
        %v679 = vsel %vm665, %v658, %v678
        %680 = vst [vmem:[%s564 + $0x20] sm:$0xc] %v679
        %v681 = vld [vmem:[%s564 + $0x28] sm:$0xc]
        %v682 = vsel %vm665, %v658, %v681
        %683 = vst [vmem:[%s564 + $0x28] sm:$0xc] %v682
        %v684 = vld [vmem:[%s564 + $0x30] sm:$0xc]
        %v685 = vsel %vm665, %v662, %v684
        %686 = vst [vmem:[%s564 + $0x30] sm:$0xc] %v685
        %v687 = vld [vmem:[%s564 + $0x38] sm:$0xc]
        %v688 = vsel %vm665, %v662, %v687
        %689 = vst [vmem:[%s564 + $0x38] sm:$0xc] %v688
        %v690 = vlaneseq
        %v691 = vshrl.u32 %v690, 7
        %v692 = vsub.s32 1, %v691
        %v693 = vrot.slane %v593, %v692
        %v694 = vlaneseq
        %v695 = vshrl.u32 %v694, 7
        %v696 = vsub.s32 1, %v695
        %v697 = vrot.slane %v600, %v696
        %v698 = vlaneseq
        %v699 = vshrl.u32 %v698, 7
        %v700 = vsub.s32 1, %v699
        %v701 = vrot.slane %v607, %v700
        %v702 = vlaneseq
        %v703 = vshrl.u32 %v702, 7
        %v704 = vsub.s32 1, %v703
        %v705 = vrot.slane %v614, %v704
        %v710 = vunpack.c.l.b16 %v693
        %v711 = vunpack.c.l.b16 %v697
        %v712 = vunpack.c.l.b16 %v701
        %v713 = vunpack.c.l.b16 %v705
        %v714 = vpack.c.b16 %v710, %v710
        %v715 = vpack.c.b16 %v711, %v711
        %v716 = vpack.c.b16 %v712, %v712
        %v717 = vpack.c.b16 %v713, %v713
        %vm722 = vcmask 257027
        %vm723 = vsmask.f32 7950
        %vm724 = vmand %vm722, %vm723
        %v725 = vld [vmem:[%s564] sm:$0x8]
        %v726 = vsel %vm724, %v714, %v725
        %727 = vst [vmem:[%s564] sm:$0x8] %v726
        %v728 = vld [vmem:[%s564 + $0x4] sm:$0x1]
        %v729 = vsel %vm334, %v714, %v728
        %730 = vst [vmem:[%s564 + $0x4] sm:$0x1] %v729
        %v731 = vld [vmem:[%s564 + $0x8] sm:$0x8]
        %v732 = vsel %vm724, %v714, %v731
        %733 = vst [vmem:[%s564 + $0x8] sm:$0x8] %v732
        %v734 = vld [vmem:[%s564 + $0xc] sm:$0x1]
        %v735 = vsel %vm334, %v714, %v734
        %736 = vst [vmem:[%s564 + $0xc] sm:$0x1] %v735
        %v737 = vld [vmem:[%s564 + $0x10] sm:$0x8]
        %v738 = vsel %vm724, %v715, %v737
        %739 = vst [vmem:[%s564 + $0x10] sm:$0x8] %v738
        %v740 = vld [vmem:[%s564 + $0x14] sm:$0x1]
        %v741 = vsel %vm334, %v715, %v740
        %742 = vst [vmem:[%s564 + $0x14] sm:$0x1] %v741
        %v743 = vld [vmem:[%s564 + $0x18] sm:$0x8]
        %v744 = vsel %vm724, %v715, %v743
        %745 = vst [vmem:[%s564 + $0x18] sm:$0x8] %v744
        %v746 = vld [vmem:[%s564 + $0x1c] sm:$0x1]
        %v747 = vsel %vm334, %v715, %v746
        %748 = vst [vmem:[%s564 + $0x1c] sm:$0x1] %v747
        %v749 = vld [vmem:[%s564 + $0x20] sm:$0x8]
        %v750 = vsel %vm724, %v716, %v749
        %751 = vst [vmem:[%s564 + $0x20] sm:$0x8] %v750
        %v752 = vld [vmem:[%s564 + $0x24] sm:$0x1]
        %v753 = vsel %vm334, %v716, %v752
        %754 = vst [vmem:[%s564 + $0x24] sm:$0x1] %v753
        %v755 = vld [vmem:[%s564 + $0x28] sm:$0x8]
        %v756 = vsel %vm724, %v716, %v755
        %757 = vst [vmem:[%s564 + $0x28] sm:$0x8] %v756
        %v758 = vld [vmem:[%s564 + $0x2c] sm:$0x1]
        %v759 = vsel %vm334, %v716, %v758
        %760 = vst [vmem:[%s564 + $0x2c] sm:$0x1] %v759
        %v761 = vld [vmem:[%s564 + $0x30] sm:$0x8]
        %v762 = vsel %vm724, %v717, %v761
        %763 = vst [vmem:[%s564 + $0x30] sm:$0x8] %v762
        %v764 = vld [vmem:[%s564 + $0x34] sm:$0x1]
        %v765 = vsel %vm334, %v717, %v764
        %766 = vst [vmem:[%s564 + $0x34] sm:$0x1] %v765
        %v767 = vld [vmem:[%s564 + $0x38] sm:$0x8]
        %v768 = vsel %vm724, %v717, %v767
        %769 = vst [vmem:[%s564 + $0x38] sm:$0x8] %v768
        %v770 = vld [vmem:[%s564 + $0x3c] sm:$0x1]
        %v771 = vsel %vm334, %v717, %v770
        %772 = vst [vmem:[%s564 + $0x3c] sm:$0x1] %v771
        %v773 = vld [vmem:[%s323] sm:$0xf]
        %v774 = vld [vmem:[%s323 + $0x4] sm:$0xf]
        %v775 = vld [vmem:[%s323 + $0x8] sm:$0xf]
        %v776 = vld [vmem:[%s323 + $0xc] sm:$0xf]
        %v777 = vld [vmem:[%s323 + $0x10] sm:$0xf]
        %v778 = vld [vmem:[%s323 + $0x14] sm:$0xf]
        %v779 = vld [vmem:[%s323 + $0x18] sm:$0xf]
        %v780 = vld [vmem:[%s323 + $0x1c] sm:$0xf]
        %v782 = vshrl.u32 %v773, 16
        %v784 = vrot.slane %v782, 7
        %v785 = vshll.u32 %v773, 16
        %v787 = vor.u32 %v784, %v785
        %v788 = vrot.slane %v784, 4
        %v790 = vshrl.u32 %v774, 16
        %v792 = vrot.slane %v790, 7
        %v793 = vshll.u32 %v774, 16
        %v795 = vor.u32 %v792, %v793
        %v796 = vrot.slane %v792, 4
        %v798 = vshrl.u32 %v775, 16
        %v800 = vrot.slane %v798, 7
        %v801 = vshll.u32 %v775, 16
        %v803 = vor.u32 %v800, %v801
        %v804 = vrot.slane %v800, 4
        %v806 = vshrl.u32 %v776, 16
        %v808 = vrot.slane %v806, 7
        %v809 = vshll.u32 %v776, 16
        %v811 = vor.u32 %v808, %v809
        %v812 = vrot.slane %v808, 4
        %v814 = vshrl.u32 %v777, 16
        %v816 = vrot.slane %v814, 7
        %v817 = vshll.u32 %v777, 16
        %v819 = vor.u32 %v816, %v817
        %v820 = vrot.slane %v816, 4
        %v822 = vshrl.u32 %v778, 16
        %v824 = vrot.slane %v822, 7
        %v825 = vshll.u32 %v778, 16
        %v827 = vor.u32 %v824, %v825
        %v828 = vrot.slane %v824, 4
        %v830 = vshrl.u32 %v779, 16
        %v832 = vrot.slane %v830, 7
        %v833 = vshll.u32 %v779, 16
        %v835 = vor.u32 %v832, %v833
        %v836 = vrot.slane %v832, 4
        %v838 = vshrl.u32 %v780, 16
        %v840 = vrot.slane %v838, 7
        %v841 = vshll.u32 %v780, 16
        %v843 = vor.u32 %v840, %v841
        %v844 = vrot.slane %v840, 4
        %s861 = scalar_lea.vmem [#allocation3], 8
        %vm862 = vcmask 125952
        %vm863 = vmand %vm862, %vm365
        %v864 = vld [vmem:[%s861] sm:$0xf]
        %v865 = vsel %vm863, %v787, %v864
        %866 = vst [vmem:[%s861] sm:$0xf] %v865
        %v867 = vld [vmem:[%s861 + $0x4] sm:$0x1]
        %v868 = vsel %vm405, %v788, %v867
        %869 = vst [vmem:[%s861 + $0x4] sm:$0x1] %v868
        %v870 = vld [vmem:[%s861 + $0x8] sm:$0xf]
        %v871 = vsel %vm863, %v795, %v870
        %872 = vst [vmem:[%s861 + $0x8] sm:$0xf] %v871
        %v873 = vld [vmem:[%s861 + $0xc] sm:$0x1]
        %v874 = vsel %vm405, %v796, %v873
        %875 = vst [vmem:[%s861 + $0xc] sm:$0x1] %v874
        %v876 = vld [vmem:[%s861 + $0x10] sm:$0xf]
        %v877 = vsel %vm863, %v803, %v876
        %878 = vst [vmem:[%s861 + $0x10] sm:$0xf] %v877
        %v879 = vld [vmem:[%s861 + $0x14] sm:$0x1]
        %v880 = vsel %vm405, %v804, %v879
        %881 = vst [vmem:[%s861 + $0x14] sm:$0x1] %v880
        %v882 = vld [vmem:[%s861 + $0x18] sm:$0xf]
        %v883 = vsel %vm863, %v811, %v882
        %884 = vst [vmem:[%s861 + $0x18] sm:$0xf] %v883
        %v885 = vld [vmem:[%s861 + $0x1c] sm:$0x1]
        %v886 = vsel %vm405, %v812, %v885
        %887 = vst [vmem:[%s861 + $0x1c] sm:$0x1] %v886
        %v888 = vld [vmem:[%s861 + $0x20] sm:$0xf]
        %v889 = vsel %vm863, %v819, %v888
        %890 = vst [vmem:[%s861 + $0x20] sm:$0xf] %v889
        %v891 = vld [vmem:[%s861 + $0x24] sm:$0x1]
        %v892 = vsel %vm405, %v820, %v891
        %893 = vst [vmem:[%s861 + $0x24] sm:$0x1] %v892
        %v894 = vld [vmem:[%s861 + $0x28] sm:$0xf]
        %v895 = vsel %vm863, %v827, %v894
        %896 = vst [vmem:[%s861 + $0x28] sm:$0xf] %v895
        %v897 = vld [vmem:[%s861 + $0x2c] sm:$0x1]
        %v898 = vsel %vm405, %v828, %v897
        %899 = vst [vmem:[%s861 + $0x2c] sm:$0x1] %v898
        %v900 = vld [vmem:[%s861 + $0x30] sm:$0xf]
        %v901 = vsel %vm863, %v835, %v900
        %902 = vst [vmem:[%s861 + $0x30] sm:$0xf] %v901
        %v903 = vld [vmem:[%s861 + $0x34] sm:$0x1]
        %v904 = vsel %vm405, %v836, %v903
        %905 = vst [vmem:[%s861 + $0x34] sm:$0x1] %v904
        %v906 = vld [vmem:[%s861 + $0x38] sm:$0xf]
        %v907 = vsel %vm863, %v843, %v906
        %908 = vst [vmem:[%s861 + $0x38] sm:$0xf] %v907
        %v909 = vld [vmem:[%s861 + $0x3c] sm:$0x1]
        %v910 = vsel %vm405, %v844, %v909
        %911 = vst [vmem:[%s861 + $0x3c] sm:$0x1] %v910
        %v912 = vld [vmem:[#allocation2] sm:$0xf]
        %v913 = vld [vmem:[#allocation2 + $0x8] sm:$0xf]
        %v914 = vld [vmem:[#allocation2 + $0x10] sm:$0xf]
        %v915 = vld [vmem:[#allocation2 + $0x18] sm:$0xf]
        %v916 = vld [vmem:[#allocation2 + $0x20] sm:$0xf]
        %v917 = vld [vmem:[#allocation2 + $0x28] sm:$0xf]
        %v918 = vld [vmem:[#allocation2 + $0x30] sm:$0xf]
        %v919 = vld [vmem:[#allocation2 + $0x38] sm:$0xf]
        %920 = vst.msk [vmem:[#allocation5] sm:$0xf] %vm325, %v912
        %921 = vst.msk [vmem:[#allocation5 + $0x10] sm:$0xf] %vm325, %v913
        %922 = vst.msk [vmem:[#allocation5 + $0x20] sm:$0xf] %vm325, %v914
        %923 = vst.msk [vmem:[#allocation5 + $0x30] sm:$0xf] %vm325, %v915
        %924 = vst.msk [vmem:[#allocation5 + $0x40] sm:$0xf] %vm325, %v916
        %925 = vst.msk [vmem:[#allocation5 + $0x50] sm:$0xf] %vm325, %v917
        %926 = vst.msk [vmem:[#allocation5 + $0x60] sm:$0xf] %vm325, %v918
        %927 = vst.msk [vmem:[#allocation5 + $0x70] sm:$0xf] %vm325, %v919
        %v928 = vld [vmem:[#allocation3] sm:$0xf]
        %v929 = vld [vmem:[#allocation3 + $0x8] sm:$0xf]
        %v930 = vld [vmem:[#allocation3 + $0x10] sm:$0xf]
        %v931 = vld [vmem:[#allocation3 + $0x18] sm:$0xf]
        %v932 = vld [vmem:[#allocation3 + $0x20] sm:$0xf]
        %v933 = vld [vmem:[#allocation3 + $0x28] sm:$0xf]
        %v934 = vld [vmem:[#allocation3 + $0x30] sm:$0xf]
        %v935 = vld [vmem:[#allocation3 + $0x38] sm:$0xf]
        %944 = vrot.lane.b32.xlu0 %v928, 32
        %v945 = vpop.permute.xlu0 %944
        %946 = vrot.lane.b32.xlu0 %v929, 32
        %v947 = vpop.permute.xlu0 %946
        %948 = vrot.lane.b32.xlu0 %v930, 32
        %v949 = vpop.permute.xlu0 %948
        %950 = vrot.lane.b32.xlu0 %v931, 32
        %v951 = vpop.permute.xlu0 %950
        %952 = vrot.lane.b32.xlu0 %v932, 32
        %v953 = vpop.permute.xlu0 %952
        %954 = vrot.lane.b32.xlu0 %v933, 32
        %v955 = vpop.permute.xlu0 %954
        %956 = vrot.lane.b32.xlu0 %v934, 32
        %v957 = vpop.permute.xlu0 %956
        %958 = vrot.lane.b32.xlu0 %v935, 32
        %v959 = vpop.permute.xlu0 %958
        %vm968 = vcmask 388352
        %969 = vst.msk [vmem:[#allocation5 + $0x8] sm:$0xf] %vm968, %v945
        %970 = vst.msk [vmem:[#allocation5 + $0x18] sm:$0xf] %vm968, %v947
        %971 = vst.msk [vmem:[#allocation5 + $0x28] sm:$0xf] %vm968, %v949
        %972 = vst.msk [vmem:[#allocation5 + $0x38] sm:$0xf] %vm968, %v951
        %973 = vst.msk [vmem:[#allocation5 + $0x48] sm:$0xf] %vm968, %v953
        %974 = vst.msk [vmem:[#allocation5 + $0x58] sm:$0xf] %vm968, %v955
        %975 = vst.msk [vmem:[#allocation5 + $0x68] sm:$0xf] %vm968, %v957
        %976 = vst.msk [vmem:[#allocation5 + $0x78] sm:$0xf] %vm968, %v959
        %v977 = vld [vmem:[#allocation2] sm:$0xf]
        %v978 = vld [vmem:[#allocation2 + $0x4] sm:$0x1]
        %v979 = vld [vmem:[#allocation2 + $0x8] sm:$0xf]
        %v980 = vld [vmem:[#allocation2 + $0xc] sm:$0x1]
        %v981 = vld [vmem:[#allocation2 + $0x10] sm:$0xf]
        %v982 = vld [vmem:[#allocation2 + $0x14] sm:$0x1]
        %v983 = vld [vmem:[#allocation2 + $0x18] sm:$0xf]
        %v984 = vld [vmem:[#allocation2 + $0x1c] sm:$0x1]
        %v985 = vld [vmem:[#allocation2 + $0x20] sm:$0xf]
        %v986 = vld [vmem:[#allocation2 + $0x24] sm:$0x1]
        %v987 = vld [vmem:[#allocation2 + $0x28] sm:$0xf]
        %v988 = vld [vmem:[#allocation2 + $0x2c] sm:$0x1]
        %v989 = vld [vmem:[#allocation2 + $0x30] sm:$0xf]
        %v990 = vld [vmem:[#allocation2 + $0x34] sm:$0x1]
        %v991 = vld [vmem:[#allocation2 + $0x38] sm:$0xf]
        %v992 = vld [vmem:[#allocation2 + $0x3c] sm:$0x1]
        %vm993 = vsmask.f32 3328
        %vm994 = vsmask.f32 7440
        %vm995 = vmor %vm993, %vm994
        %v997 = vshrl.u32 %v977, 16
        %v999 = vrot.slane %v997, 4
        %v1000 = vshll.u32 %v977, 16
        %v1002 = vrot.slane %v1000, 5
        %v1003 = vor.u32 %v999, %v1002
        %v1004 = vrot.slane %v1003, 4
        %v1006 = vshll.u32 %v978, 16
        %v1008 = vrot.slane %v1006, 5
        %v1009 = vsel %vm995, %v1004, %v1008
        %v1011 = vshrl.u32 %v979, 16
        %v1013 = vrot.slane %v1011, 4
        %v1014 = vshll.u32 %v979, 16
        %v1016 = vrot.slane %v1014, 5
        %v1017 = vor.u32 %v1013, %v1016
        %v1018 = vrot.slane %v1017, 4
        %v1020 = vshll.u32 %v980, 16
        %v1022 = vrot.slane %v1020, 5
        %v1023 = vsel %vm995, %v1018, %v1022
        %v1025 = vshrl.u32 %v981, 16
        %v1027 = vrot.slane %v1025, 4
        %v1028 = vshll.u32 %v981, 16
        %v1030 = vrot.slane %v1028, 5
        %v1031 = vor.u32 %v1027, %v1030
        %v1032 = vrot.slane %v1031, 4
        %v1034 = vshll.u32 %v982, 16
        %v1036 = vrot.slane %v1034, 5
        %v1037 = vsel %vm995, %v1032, %v1036
        %v1039 = vshrl.u32 %v983, 16
        %v1041 = vrot.slane %v1039, 4
        %v1042 = vshll.u32 %v983, 16
        %v1044 = vrot.slane %v1042, 5
        %v1045 = vor.u32 %v1041, %v1044
        %v1046 = vrot.slane %v1045, 4
        %v1048 = vshll.u32 %v984, 16
        %v1050 = vrot.slane %v1048, 5
        %v1051 = vsel %vm995, %v1046, %v1050
        %v1053 = vshrl.u32 %v985, 16
        %v1055 = vrot.slane %v1053, 4
        %v1056 = vshll.u32 %v985, 16
        %v1058 = vrot.slane %v1056, 5
        %v1059 = vor.u32 %v1055, %v1058
        %v1060 = vrot.slane %v1059, 4
        %v1062 = vshll.u32 %v986, 16
        %v1064 = vrot.slane %v1062, 5
        %v1065 = vsel %vm995, %v1060, %v1064
        %v1067 = vshrl.u32 %v987, 16
        %v1069 = vrot.slane %v1067, 4
        %v1070 = vshll.u32 %v987, 16
        %v1072 = vrot.slane %v1070, 5
        %v1073 = vor.u32 %v1069, %v1072
        %v1074 = vrot.slane %v1073, 4
        %v1076 = vshll.u32 %v988, 16
        %v1078 = vrot.slane %v1076, 5
        %v1079 = vsel %vm995, %v1074, %v1078
        %v1081 = vshrl.u32 %v989, 16
        %v1083 = vrot.slane %v1081, 4
        %v1084 = vshll.u32 %v989, 16
        %v1086 = vrot.slane %v1084, 5
        %v1087 = vor.u32 %v1083, %v1086
        %v1088 = vrot.slane %v1087, 4
        %v1090 = vshll.u32 %v990, 16
        %v1092 = vrot.slane %v1090, 5
        %v1093 = vsel %vm995, %v1088, %v1092
        %v1095 = vshrl.u32 %v991, 16
        %v1097 = vrot.slane %v1095, 4
        %v1098 = vshll.u32 %v991, 16
        %v1100 = vrot.slane %v1098, 5
        %v1101 = vor.u32 %v1097, %v1100
        %v1102 = vrot.slane %v1101, 4
        %v1104 = vshll.u32 %v992, 16
        %v1106 = vrot.slane %v1104, 5
        %v1107 = vsel %vm995, %v1102, %v1106
        %1108 = vrot.lane.b32.xlu0 %v1009, 32
        %v1109 = vpop.permute.xlu0 %1108
        %1110 = vrot.lane.b32.xlu0 %v1023, 32
        %v1111 = vpop.permute.xlu0 %1110
        %1112 = vrot.lane.b32.xlu0 %v1037, 32
        %v1113 = vpop.permute.xlu0 %1112
        %1114 = vrot.lane.b32.xlu0 %v1051, 32
        %v1115 = vpop.permute.xlu0 %1114
        %1116 = vrot.lane.b32.xlu0 %v1065, 32
        %v1117 = vpop.permute.xlu0 %1116
        %1118 = vrot.lane.b32.xlu0 %v1079, 32
        %v1119 = vpop.permute.xlu0 %1118
        %1120 = vrot.lane.b32.xlu0 %v1093, 32
        %v1121 = vpop.permute.xlu0 %1120
        %1122 = vrot.lane.b32.xlu0 %v1107, 32
        %v1123 = vpop.permute.xlu0 %1122
        %vm1132 = vcmask 519424
        %1133 = vst.msk [vmem:[#allocation5] sm:$0xf] %vm1132, %v1109
        %1134 = vst.msk [vmem:[#allocation5 + $0x10] sm:$0xf] %vm1132, %v1111
        %1135 = vst.msk [vmem:[#allocation5 + $0x20] sm:$0xf] %vm1132, %v1113
        %1136 = vst.msk [vmem:[#allocation5 + $0x30] sm:$0xf] %vm1132, %v1115
        %1137 = vst.msk [vmem:[#allocation5 + $0x40] sm:$0xf] %vm1132, %v1117
        %1138 = vst.msk [vmem:[#allocation5 + $0x50] sm:$0xf] %vm1132, %v1119
        %1139 = vst.msk [vmem:[#allocation5 + $0x60] sm:$0xf] %vm1132, %v1121
        %1140 = vst.msk [vmem:[#allocation5 + $0x70] sm:$0xf] %vm1132, %v1123
        %v1141 = vld [vmem:[#allocation3] sm:$0xf]
        %v1142 = vld [vmem:[#allocation3 + $0x4] sm:$0x1]
        %v1143 = vld [vmem:[#allocation3 + $0x8] sm:$0xf]
        %v1144 = vld [vmem:[#allocation3 + $0xc] sm:$0x1]
        %v1145 = vld [vmem:[#allocation3 + $0x10] sm:$0xf]
        %v1146 = vld [vmem:[#allocation3 + $0x14] sm:$0x1]
        %v1147 = vld [vmem:[#allocation3 + $0x18] sm:$0xf]
        %v1148 = vld [vmem:[#allocation3 + $0x1c] sm:$0x1]
        %v1149 = vld [vmem:[#allocation3 + $0x20] sm:$0xf]
        %v1150 = vld [vmem:[#allocation3 + $0x24] sm:$0x1]
        %v1151 = vld [vmem:[#allocation3 + $0x28] sm:$0xf]
        %v1152 = vld [vmem:[#allocation3 + $0x2c] sm:$0x1]
        %v1153 = vld [vmem:[#allocation3 + $0x30] sm:$0xf]
        %v1154 = vld [vmem:[#allocation3 + $0x34] sm:$0x1]
        %v1155 = vld [vmem:[#allocation3 + $0x38] sm:$0xf]
        %v1156 = vld [vmem:[#allocation3 + $0x3c] sm:$0x1]
        %v1158 = vshrl.u32 %v1141, 16
        %v1160 = vrot.slane %v1158, 4
        %v1161 = vshll.u32 %v1141, 16
        %v1163 = vrot.slane %v1161, 5
        %v1164 = vor.u32 %v1160, %v1163
        %v1165 = vrot.slane %v1164, 4
        %v1167 = vshll.u32 %v1142, 16
        %v1169 = vrot.slane %v1167, 5
        %v1170 = vsel %vm995, %v1165, %v1169
        %v1172 = vshrl.u32 %v1143, 16
        %v1174 = vrot.slane %v1172, 4
        %v1175 = vshll.u32 %v1143, 16
        %v1177 = vrot.slane %v1175, 5
        %v1178 = vor.u32 %v1174, %v1177
        %v1179 = vrot.slane %v1178, 4
        %v1181 = vshll.u32 %v1144, 16
        %v1183 = vrot.slane %v1181, 5
        %v1184 = vsel %vm995, %v1179, %v1183
        %v1186 = vshrl.u32 %v1145, 16
        %v1188 = vrot.slane %v1186, 4
        %v1189 = vshll.u32 %v1145, 16
        %v1191 = vrot.slane %v1189, 5
        %v1192 = vor.u32 %v1188, %v1191
        %v1193 = vrot.slane %v1192, 4
        %v1195 = vshll.u32 %v1146, 16
        %v1197 = vrot.slane %v1195, 5
        %v1198 = vsel %vm995, %v1193, %v1197
        %v1200 = vshrl.u32 %v1147, 16
        %v1202 = vrot.slane %v1200, 4
        %v1203 = vshll.u32 %v1147, 16
        %v1205 = vrot.slane %v1203, 5
        %v1206 = vor.u32 %v1202, %v1205
        %v1207 = vrot.slane %v1206, 4
        %v1209 = vshll.u32 %v1148, 16
        %v1211 = vrot.slane %v1209, 5
        %v1212 = vsel %vm995, %v1207, %v1211
        %v1214 = vshrl.u32 %v1149, 16
        %v1216 = vrot.slane %v1214, 4
        %v1217 = vshll.u32 %v1149, 16
        %v1219 = vrot.slane %v1217, 5
        %v1220 = vor.u32 %v1216, %v1219
        %v1221 = vrot.slane %v1220, 4
        %v1223 = vshll.u32 %v1150, 16
        %v1225 = vrot.slane %v1223, 5
        %v1226 = vsel %vm995, %v1221, %v1225
        %v1228 = vshrl.u32 %v1151, 16
        %v1230 = vrot.slane %v1228, 4
        %v1231 = vshll.u32 %v1151, 16
        %v1233 = vrot.slane %v1231, 5
        %v1234 = vor.u32 %v1230, %v1233
        %v1235 = vrot.slane %v1234, 4
        %v1237 = vshll.u32 %v1152, 16
        %v1239 = vrot.slane %v1237, 5
        %v1240 = vsel %vm995, %v1235, %v1239
        %v1242 = vshrl.u32 %v1153, 16
        %v1244 = vrot.slane %v1242, 4
        %v1245 = vshll.u32 %v1153, 16
        %v1247 = vrot.slane %v1245, 5
        %v1248 = vor.u32 %v1244, %v1247
        %v1249 = vrot.slane %v1248, 4
        %v1251 = vshll.u32 %v1154, 16
        %v1253 = vrot.slane %v1251, 5
        %v1254 = vsel %vm995, %v1249, %v1253
        %v1256 = vshrl.u32 %v1155, 16
        %v1258 = vrot.slane %v1256, 4
        %v1259 = vshll.u32 %v1155, 16
        %v1261 = vrot.slane %v1259, 5
        %v1262 = vor.u32 %v1258, %v1261
        %v1263 = vrot.slane %v1262, 4
        %v1265 = vshll.u32 %v1156, 16
        %v1267 = vrot.slane %v1265, 5
        %v1268 = vsel %vm995, %v1263, %v1267
        %1269 = vrot.lane.b32.xlu0 %v1170, 48
        %v1270 = vpop.permute.xlu0 %1269
        %1271 = vrot.lane.b32.xlu0 %v1184, 48
        %v1272 = vpop.permute.xlu0 %1271
        %1273 = vrot.lane.b32.xlu0 %v1198, 48
        %v1274 = vpop.permute.xlu0 %1273
        %1275 = vrot.lane.b32.xlu0 %v1212, 48
        %v1276 = vpop.permute.xlu0 %1275
        %1277 = vrot.lane.b32.xlu0 %v1226, 48
        %v1278 = vpop.permute.xlu0 %1277
        %1279 = vrot.lane.b32.xlu0 %v1240, 48
        %v1280 = vpop.permute.xlu0 %1279
        %1281 = vrot.lane.b32.xlu0 %v1254, 48
        %v1282 = vpop.permute.xlu0 %1281
        %1283 = vrot.lane.b32.xlu0 %v1268, 48
        %v1284 = vpop.permute.xlu0 %1283
        %vm1293 = vcmask 519552
        %1294 = vst.msk [vmem:[#allocation5 + $0x8] sm:$0xf] %vm1293, %v1270
        %1295 = vst.msk [vmem:[#allocation5 + $0x18] sm:$0xf] %vm1293, %v1272
        %1296 = vst.msk [vmem:[#allocation5 + $0x28] sm:$0xf] %vm1293, %v1274
        %1297 = vst.msk [vmem:[#allocation5 + $0x38] sm:$0xf] %vm1293, %v1276
        %1298 = vst.msk [vmem:[#allocation5 + $0x48] sm:$0xf] %vm1293, %v1278
        %1299 = vst.msk [vmem:[#allocation5 + $0x58] sm:$0xf] %vm1293, %v1280
        %1300 = vst.msk [vmem:[#allocation5 + $0x68] sm:$0xf] %vm1293, %v1282
        %1301 = vst.msk [vmem:[#allocation5 + $0x78] sm:$0xf] %vm1293, %v1284
        %v1302 = vld [vmem:[#allocation2] sm:$0xe]
        %v1303 = vld [vmem:[#allocation2 + $0x4] sm:$0x1]
        %v1304 = vld [vmem:[#allocation2 + $0x8] sm:$0xe]
        %v1305 = vld [vmem:[#allocation2 + $0xc] sm:$0x1]
        %v1306 = vld [vmem:[#allocation2 + $0x10] sm:$0xe]
        %v1307 = vld [vmem:[#allocation2 + $0x14] sm:$0x1]
        %v1308 = vld [vmem:[#allocation2 + $0x18] sm:$0xe]
        %v1309 = vld [vmem:[#allocation2 + $0x1c] sm:$0x1]
        %v1310 = vld [vmem:[#allocation2 + $0x20] sm:$0xe]
        %v1311 = vld [vmem:[#allocation2 + $0x24] sm:$0x1]
        %v1312 = vld [vmem:[#allocation2 + $0x28] sm:$0xe]
        %v1313 = vld [vmem:[#allocation2 + $0x2c] sm:$0x1]
        %v1314 = vld [vmem:[#allocation2 + $0x30] sm:$0xe]
        %v1315 = vld [vmem:[#allocation2 + $0x34] sm:$0x1]
        %v1316 = vld [vmem:[#allocation2 + $0x38] sm:$0xe]
        %v1317 = vld [vmem:[#allocation2 + $0x3c] sm:$0x1]
        %vm1334 = vcmask 1042432
        %vm1335 = vcmask 1046532
        %vm1336 = vmor %vm1334, %vm1335
        %v1337 = vrot.slane %v1302, 5
        %v1338 = vrot.slane %v1337, 4
        %v1339 = vrot.slane %v1303, 5
        %v1340 = vsel %vm1336, %v1338, %v1339
        %v1341 = vrot.slane %v1304, 5
        %v1342 = vrot.slane %v1341, 4
        %v1343 = vrot.slane %v1305, 5
        %v1344 = vsel %vm1336, %v1342, %v1343
        %v1345 = vrot.slane %v1306, 5
        %v1346 = vrot.slane %v1345, 4
        %v1347 = vrot.slane %v1307, 5
        %v1348 = vsel %vm1336, %v1346, %v1347
        %v1349 = vrot.slane %v1308, 5
        %v1350 = vrot.slane %v1349, 4
        %v1351 = vrot.slane %v1309, 5
        %v1352 = vsel %vm1336, %v1350, %v1351
        %v1353 = vrot.slane %v1310, 5
        %v1354 = vrot.slane %v1353, 4
        %v1355 = vrot.slane %v1311, 5
        %v1356 = vsel %vm1336, %v1354, %v1355
        %v1357 = vrot.slane %v1312, 5
        %v1358 = vrot.slane %v1357, 4
        %v1359 = vrot.slane %v1313, 5
        %v1360 = vsel %vm1336, %v1358, %v1359
        %v1361 = vrot.slane %v1314, 5
        %v1362 = vrot.slane %v1361, 4
        %v1363 = vrot.slane %v1315, 5
        %v1364 = vsel %vm1336, %v1362, %v1363
        %v1365 = vrot.slane %v1316, 5
        %v1366 = vrot.slane %v1365, 4
        %v1367 = vrot.slane %v1317, 5
        %v1368 = vsel %vm1336, %v1366, %v1367
        %1369 = vrot.lane.b32.xlu0 %v1340, 64
        %v1370 = vpop.permute.xlu0 %1369
        %1371 = vrot.lane.b32.xlu0 %v1344, 64
        %v1372 = vpop.permute.xlu0 %1371
        %1373 = vrot.lane.b32.xlu0 %v1348, 64
        %v1374 = vpop.permute.xlu0 %1373
        %1375 = vrot.lane.b32.xlu0 %v1352, 64
        %v1376 = vpop.permute.xlu0 %1375
        %1377 = vrot.lane.b32.xlu0 %v1356, 64
        %v1378 = vpop.permute.xlu0 %1377
        %1379 = vrot.lane.b32.xlu0 %v1360, 64
        %v1380 = vpop.permute.xlu0 %1379
        %1381 = vrot.lane.b32.xlu0 %v1364, 64
        %v1382 = vpop.permute.xlu0 %1381
        %1383 = vrot.lane.b32.xlu0 %v1368, 64
        %v1384 = vpop.permute.xlu0 %1383
        %vm1393 = vcmask 781824
        %1394 = vst.msk [vmem:[#allocation5] sm:$0xf] %vm1393, %v1370
        %1395 = vst.msk [vmem:[#allocation5 + $0x10] sm:$0xf] %vm1393, %v1372
        %1396 = vst.msk [vmem:[#allocation5 + $0x20] sm:$0xf] %vm1393, %v1374
        %1397 = vst.msk [vmem:[#allocation5 + $0x30] sm:$0xf] %vm1393, %v1376
        %1398 = vst.msk [vmem:[#allocation5 + $0x40] sm:$0xf] %vm1393, %v1378
        %1399 = vst.msk [vmem:[#allocation5 + $0x50] sm:$0xf] %vm1393, %v1380
        %1400 = vst.msk [vmem:[#allocation5 + $0x60] sm:$0xf] %vm1393, %v1382
        %1401 = vst.msk [vmem:[#allocation5 + $0x70] sm:$0xf] %vm1393, %v1384
        %v1402 = vld [vmem:[#allocation3] sm:$0xe]
        %v1403 = vld [vmem:[#allocation3 + $0x4] sm:$0x1]
        %v1404 = vld [vmem:[#allocation3 + $0x8] sm:$0xe]
        %v1405 = vld [vmem:[#allocation3 + $0xc] sm:$0x1]
        %v1406 = vld [vmem:[#allocation3 + $0x10] sm:$0xe]
        %v1407 = vld [vmem:[#allocation3 + $0x14] sm:$0x1]
        %v1408 = vld [vmem:[#allocation3 + $0x18] sm:$0xe]
        %v1409 = vld [vmem:[#allocation3 + $0x1c] sm:$0x1]
        %v1410 = vld [vmem:[#allocation3 + $0x20] sm:$0xe]
        %v1411 = vld [vmem:[#allocation3 + $0x24] sm:$0x1]
        %v1412 = vld [vmem:[#allocation3 + $0x28] sm:$0xe]
        %v1413 = vld [vmem:[#allocation3 + $0x2c] sm:$0x1]
        %v1414 = vld [vmem:[#allocation3 + $0x30] sm:$0xe]
        %v1415 = vld [vmem:[#allocation3 + $0x34] sm:$0x1]
        %v1416 = vld [vmem:[#allocation3 + $0x38] sm:$0xe]
        %v1417 = vld [vmem:[#allocation3 + $0x3c] sm:$0x1]
        %v1434 = vrot.slane %v1402, 5
        %v1435 = vrot.slane %v1434, 4
        %v1436 = vrot.slane %v1403, 5
        %v1437 = vsel %vm1336, %v1435, %v1436
        %v1438 = vrot.slane %v1404, 5
        %v1439 = vrot.slane %v1438, 4
        %v1440 = vrot.slane %v1405, 5
        %v1441 = vsel %vm1336, %v1439, %v1440
        %v1442 = vrot.slane %v1406, 5
        %v1443 = vrot.slane %v1442, 4
        %v1444 = vrot.slane %v1407, 5
        %v1445 = vsel %vm1336, %v1443, %v1444
        %v1446 = vrot.slane %v1408, 5
        %v1447 = vrot.slane %v1446, 4
        %v1448 = vrot.slane %v1409, 5
        %v1449 = vsel %vm1336, %v1447, %v1448
        %v1450 = vrot.slane %v1410, 5
        %v1451 = vrot.slane %v1450, 4
        %v1452 = vrot.slane %v1411, 5
        %v1453 = vsel %vm1336, %v1451, %v1452
        %v1454 = vrot.slane %v1412, 5
        %v1455 = vrot.slane %v1454, 4
        %v1456 = vrot.slane %v1413, 5
        %v1457 = vsel %vm1336, %v1455, %v1456
        %v1458 = vrot.slane %v1414, 5
        %v1459 = vrot.slane %v1458, 4
        %v1460 = vrot.slane %v1415, 5
        %v1461 = vsel %vm1336, %v1459, %v1460
        %v1462 = vrot.slane %v1416, 5
        %v1463 = vrot.slane %v1462, 4
        %v1464 = vrot.slane %v1417, 5
        %v1465 = vsel %vm1336, %v1463, %v1464
        %1466 = vrot.lane.b32.xlu0 %v1437, 64
        %v1467 = vpop.permute.xlu0 %1466
        %1468 = vrot.lane.b32.xlu0 %v1441, 64
        %v1469 = vpop.permute.xlu0 %1468
        %1470 = vrot.lane.b32.xlu0 %v1445, 64
        %v1471 = vpop.permute.xlu0 %1470
        %1472 = vrot.lane.b32.xlu0 %v1449, 64
        %v1473 = vpop.permute.xlu0 %1472
        %1474 = vrot.lane.b32.xlu0 %v1453, 64
        %v1475 = vpop.permute.xlu0 %1474
        %1476 = vrot.lane.b32.xlu0 %v1457, 64
        %v1477 = vpop.permute.xlu0 %1476
        %1478 = vrot.lane.b32.xlu0 %v1461, 64
        %v1479 = vpop.permute.xlu0 %1478
        %1480 = vrot.lane.b32.xlu0 %v1465, 64
        %v1481 = vpop.permute.xlu0 %1480
        %vm1490 = vcmask 650752
        %1491 = vst.msk [vmem:[#allocation5 + $0x8] sm:$0xf] %vm1490, %v1467
        %1492 = vst.msk [vmem:[#allocation5 + $0x18] sm:$0xf] %vm1490, %v1469
        %1493 = vst.msk [vmem:[#allocation5 + $0x28] sm:$0xf] %vm1490, %v1471
        %1494 = vst.msk [vmem:[#allocation5 + $0x38] sm:$0xf] %vm1490, %v1473
        %1495 = vst.msk [vmem:[#allocation5 + $0x48] sm:$0xf] %vm1490, %v1475
        %1496 = vst.msk [vmem:[#allocation5 + $0x58] sm:$0xf] %vm1490, %v1477
        %1497 = vst.msk [vmem:[#allocation5 + $0x68] sm:$0xf] %vm1490, %v1479
        %1498 = vst.msk [vmem:[#allocation5 + $0x78] sm:$0xf] %vm1490, %v1481
        %v1499 = vld [vmem:[%s564] sm:$0xf]
        %v1500 = vld [vmem:[%s564 + $0x8] sm:$0xf]
        %v1501 = vld [vmem:[%s564 + $0x10] sm:$0xf]
        %v1502 = vld [vmem:[%s564 + $0x18] sm:$0xf]
        %v1503 = vld [vmem:[%s564 + $0x20] sm:$0xf]
        %v1504 = vld [vmem:[%s564 + $0x28] sm:$0xf]
        %v1505 = vld [vmem:[%s564 + $0x30] sm:$0xf]
        %v1506 = vld [vmem:[%s564 + $0x38] sm:$0xf]
        %1515 = vrot.lane.b32.xlu0 %v1499, 96
        %v1516 = vpop.permute.xlu0 %1515
        %1517 = vrot.lane.b32.xlu0 %v1500, 96
        %v1518 = vpop.permute.xlu0 %1517
        %1519 = vrot.lane.b32.xlu0 %v1501, 96
        %v1520 = vpop.permute.xlu0 %1519
        %1521 = vrot.lane.b32.xlu0 %v1502, 96
        %v1522 = vpop.permute.xlu0 %1521
        %1523 = vrot.lane.b32.xlu0 %v1503, 96
        %v1524 = vpop.permute.xlu0 %1523
        %1525 = vrot.lane.b32.xlu0 %v1504, 96
        %v1526 = vpop.permute.xlu0 %1525
        %1527 = vrot.lane.b32.xlu0 %v1505, 96
        %v1528 = vpop.permute.xlu0 %1527
        %1529 = vrot.lane.b32.xlu0 %v1506, 96
        %v1530 = vpop.permute.xlu0 %1529
        %vm1539 = vcmask 1044224
        %1540 = vst.msk [vmem:[#allocation5] sm:$0xf] %vm1539, %v1516
        %1541 = vst.msk [vmem:[#allocation5 + $0x10] sm:$0xf] %vm1539, %v1518
        %1542 = vst.msk [vmem:[#allocation5 + $0x20] sm:$0xf] %vm1539, %v1520
        %1543 = vst.msk [vmem:[#allocation5 + $0x30] sm:$0xf] %vm1539, %v1522
        %1544 = vst.msk [vmem:[#allocation5 + $0x40] sm:$0xf] %vm1539, %v1524
        %1545 = vst.msk [vmem:[#allocation5 + $0x50] sm:$0xf] %vm1539, %v1526
        %1546 = vst.msk [vmem:[#allocation5 + $0x60] sm:$0xf] %vm1539, %v1528
        %1547 = vst.msk [vmem:[#allocation5 + $0x70] sm:$0xf] %vm1539, %v1530
        %v1548 = vld [vmem:[%s861] sm:$0xf]
        %v1549 = vld [vmem:[%s861 + $0x8] sm:$0xf]
        %v1550 = vld [vmem:[%s861 + $0x10] sm:$0xf]
        %v1551 = vld [vmem:[%s861 + $0x18] sm:$0xf]
        %v1552 = vld [vmem:[%s861 + $0x20] sm:$0xf]
        %v1553 = vld [vmem:[%s861 + $0x28] sm:$0xf]
        %v1554 = vld [vmem:[%s861 + $0x30] sm:$0xf]
        %v1555 = vld [vmem:[%s861 + $0x38] sm:$0xf]
        %1564 = vrot.lane.b32.xlu0 %v1548, 80
        %v1565 = vpop.permute.xlu0 %1564
        %1566 = vrot.lane.b32.xlu0 %v1549, 80
        %v1567 = vpop.permute.xlu0 %1566
        %1568 = vrot.lane.b32.xlu0 %v1550, 80
        %v1569 = vpop.permute.xlu0 %1568
        %1570 = vrot.lane.b32.xlu0 %v1551, 80
        %v1571 = vpop.permute.xlu0 %1570
        %1572 = vrot.lane.b32.xlu0 %v1552, 80
        %v1573 = vpop.permute.xlu0 %1572
        %1574 = vrot.lane.b32.xlu0 %v1553, 80
        %v1575 = vpop.permute.xlu0 %1574
        %1576 = vrot.lane.b32.xlu0 %v1554, 80
        %v1577 = vpop.permute.xlu0 %1576
        %1578 = vrot.lane.b32.xlu0 %v1555, 80
        %v1579 = vpop.permute.xlu0 %1578
        %vm1588 = vcmask 781952
        %1589 = vst.msk [vmem:[#allocation5 + $0x8] sm:$0xf] %vm1588, %v1565
        %1590 = vst.msk [vmem:[#allocation5 + $0x18] sm:$0xf] %vm1588, %v1567
        %1591 = vst.msk [vmem:[#allocation5 + $0x28] sm:$0xf] %vm1588, %v1569
        %1592 = vst.msk [vmem:[#allocation5 + $0x38] sm:$0xf] %vm1588, %v1571
        %1593 = vst.msk [vmem:[#allocation5 + $0x48] sm:$0xf] %vm1588, %v1573
        %1594 = vst.msk [vmem:[#allocation5 + $0x58] sm:$0xf] %vm1588, %v1575
        %1595 = vst.msk [vmem:[#allocation5 + $0x68] sm:$0xf] %vm1588, %v1577
        %1596 = vst.msk [vmem:[#allocation5 + $0x78] sm:$0xf] %vm1588, %v1579
        %v1597 = vld [vmem:[%s564] sm:$0xf]
        %v1598 = vld [vmem:[%s564 + $0x4] sm:$0x1]
        %v1599 = vld [vmem:[%s564 + $0x8] sm:$0xf]
        %v1600 = vld [vmem:[%s564 + $0xc] sm:$0x1]
        %v1601 = vld [vmem:[%s564 + $0x10] sm:$0xf]
        %v1602 = vld [vmem:[%s564 + $0x14] sm:$0x1]
        %v1603 = vld [vmem:[%s564 + $0x18] sm:$0xf]
        %v1604 = vld [vmem:[%s564 + $0x1c] sm:$0x1]
        %v1605 = vld [vmem:[%s564 + $0x20] sm:$0xf]
        %v1606 = vld [vmem:[%s564 + $0x24] sm:$0x1]
        %v1607 = vld [vmem:[%s564 + $0x28] sm:$0xf]
        %v1608 = vld [vmem:[%s564 + $0x2c] sm:$0x1]
        %v1609 = vld [vmem:[%s564 + $0x30] sm:$0xf]
        %v1610 = vld [vmem:[%s564 + $0x34] sm:$0x1]
        %v1611 = vld [vmem:[%s564 + $0x38] sm:$0xf]
        %v1612 = vld [vmem:[%s564 + $0x3c] sm:$0x1]
        %v1614 = vshrl.u32 %v1597, 16
        %v1616 = vrot.slane %v1614, 4
        %v1617 = vshll.u32 %v1597, 16
        %v1619 = vrot.slane %v1617, 5
        %v1620 = vor.u32 %v1616, %v1619
        %v1621 = vrot.slane %v1620, 4
        %v1623 = vshll.u32 %v1598, 16
        %v1625 = vrot.slane %v1623, 5
        %v1626 = vsel %vm995, %v1621, %v1625
        %v1628 = vshrl.u32 %v1599, 16
        %v1630 = vrot.slane %v1628, 4
        %v1631 = vshll.u32 %v1599, 16
        %v1633 = vrot.slane %v1631, 5
        %v1634 = vor.u32 %v1630, %v1633
        %v1635 = vrot.slane %v1634, 4
        %v1637 = vshll.u32 %v1600, 16
        %v1639 = vrot.slane %v1637, 5
        %v1640 = vsel %vm995, %v1635, %v1639
        %v1642 = vshrl.u32 %v1601, 16
        %v1644 = vrot.slane %v1642, 4
        %v1645 = vshll.u32 %v1601, 16
        %v1647 = vrot.slane %v1645, 5
        %v1648 = vor.u32 %v1644, %v1647
        %v1649 = vrot.slane %v1648, 4
        %v1651 = vshll.u32 %v1602, 16
        %v1653 = vrot.slane %v1651, 5
        %v1654 = vsel %vm995, %v1649, %v1653
        %v1656 = vshrl.u32 %v1603, 16
        %v1658 = vrot.slane %v1656, 4
        %v1659 = vshll.u32 %v1603, 16
        %v1661 = vrot.slane %v1659, 5
        %v1662 = vor.u32 %v1658, %v1661
        %v1663 = vrot.slane %v1662, 4
        %v1665 = vshll.u32 %v1604, 16
        %v1667 = vrot.slane %v1665, 5
        %v1668 = vsel %vm995, %v1663, %v1667
        %v1670 = vshrl.u32 %v1605, 16
        %v1672 = vrot.slane %v1670, 4
        %v1673 = vshll.u32 %v1605, 16
        %v1675 = vrot.slane %v1673, 5
        %v1676 = vor.u32 %v1672, %v1675
        %v1677 = vrot.slane %v1676, 4
        %v1679 = vshll.u32 %v1606, 16
        %v1681 = vrot.slane %v1679, 5
        %v1682 = vsel %vm995, %v1677, %v1681
        %v1684 = vshrl.u32 %v1607, 16
        %v1686 = vrot.slane %v1684, 4
        %v1687 = vshll.u32 %v1607, 16
        %v1689 = vrot.slane %v1687, 5
        %v1690 = vor.u32 %v1686, %v1689
        %v1691 = vrot.slane %v1690, 4
        %v1693 = vshll.u32 %v1608, 16
        %v1695 = vrot.slane %v1693, 5
        %v1696 = vsel %vm995, %v1691, %v1695
        %v1698 = vshrl.u32 %v1609, 16
        %v1700 = vrot.slane %v1698, 4
        %v1701 = vshll.u32 %v1609, 16
        %v1703 = vrot.slane %v1701, 5
        %v1704 = vor.u32 %v1700, %v1703
        %v1705 = vrot.slane %v1704, 4
        %v1707 = vshll.u32 %v1610, 16
        %v1709 = vrot.slane %v1707, 5
        %v1710 = vsel %vm995, %v1705, %v1709
        %v1712 = vshrl.u32 %v1611, 16
        %v1714 = vrot.slane %v1712, 4
        %v1715 = vshll.u32 %v1611, 16
        %v1717 = vrot.slane %v1715, 5
        %v1718 = vor.u32 %v1714, %v1717
        %v1719 = vrot.slane %v1718, 4
        %v1721 = vshll.u32 %v1612, 16
        %v1723 = vrot.slane %v1721, 5
        %v1724 = vsel %vm995, %v1719, %v1723
        %1733 = vst.msk [vmem:[#allocation5 + $0x4] sm:$0xf] %vm325, %v1626
        %1734 = vst.msk [vmem:[#allocation5 + $0x14] sm:$0xf] %vm325, %v1640
        %1735 = vst.msk [vmem:[#allocation5 + $0x24] sm:$0xf] %vm325, %v1654
        %1736 = vst.msk [vmem:[#allocation5 + $0x34] sm:$0xf] %vm325, %v1668
        %1737 = vst.msk [vmem:[#allocation5 + $0x44] sm:$0xf] %vm325, %v1682
        %1738 = vst.msk [vmem:[#allocation5 + $0x54] sm:$0xf] %vm325, %v1696
        %1739 = vst.msk [vmem:[#allocation5 + $0x64] sm:$0xf] %vm325, %v1710
        %1740 = vst.msk [vmem:[#allocation5 + $0x74] sm:$0xf] %vm325, %v1724
        %v1741 = vld [vmem:[%s861] sm:$0xf]
        %v1742 = vld [vmem:[%s861 + $0x4] sm:$0x1]
        %v1743 = vld [vmem:[%s861 + $0x8] sm:$0xf]
        %v1744 = vld [vmem:[%s861 + $0xc] sm:$0x1]
        %v1745 = vld [vmem:[%s861 + $0x10] sm:$0xf]
        %v1746 = vld [vmem:[%s861 + $0x14] sm:$0x1]
        %v1747 = vld [vmem:[%s861 + $0x18] sm:$0xf]
        %v1748 = vld [vmem:[%s861 + $0x1c] sm:$0x1]
        %v1749 = vld [vmem:[%s861 + $0x20] sm:$0xf]
        %v1750 = vld [vmem:[%s861 + $0x24] sm:$0x1]
        %v1751 = vld [vmem:[%s861 + $0x28] sm:$0xf]
        %v1752 = vld [vmem:[%s861 + $0x2c] sm:$0x1]
        %v1753 = vld [vmem:[%s861 + $0x30] sm:$0xf]
        %v1754 = vld [vmem:[%s861 + $0x34] sm:$0x1]
        %v1755 = vld [vmem:[%s861 + $0x38] sm:$0xf]
        %v1756 = vld [vmem:[%s861 + $0x3c] sm:$0x1]
        %v1758 = vshrl.u32 %v1741, 16
        %v1760 = vrot.slane %v1758, 4
        %v1761 = vshll.u32 %v1741, 16
        %v1763 = vrot.slane %v1761, 5
        %v1764 = vor.u32 %v1760, %v1763
        %v1765 = vrot.slane %v1764, 4
        %v1767 = vshll.u32 %v1742, 16
        %v1769 = vrot.slane %v1767, 5
        %v1770 = vsel %vm995, %v1765, %v1769
        %v1772 = vshrl.u32 %v1743, 16
        %v1774 = vrot.slane %v1772, 4
        %v1775 = vshll.u32 %v1743, 16
        %v1777 = vrot.slane %v1775, 5
        %v1778 = vor.u32 %v1774, %v1777
        %v1779 = vrot.slane %v1778, 4
        %v1781 = vshll.u32 %v1744, 16
        %v1783 = vrot.slane %v1781, 5
        %v1784 = vsel %vm995, %v1779, %v1783
        %v1786 = vshrl.u32 %v1745, 16
        %v1788 = vrot.slane %v1786, 4
        %v1789 = vshll.u32 %v1745, 16
        %v1791 = vrot.slane %v1789, 5
        %v1792 = vor.u32 %v1788, %v1791
        %v1793 = vrot.slane %v1792, 4
        %v1795 = vshll.u32 %v1746, 16
        %v1797 = vrot.slane %v1795, 5
        %v1798 = vsel %vm995, %v1793, %v1797
        %v1800 = vshrl.u32 %v1747, 16
        %v1802 = vrot.slane %v1800, 4
        %v1803 = vshll.u32 %v1747, 16
        %v1805 = vrot.slane %v1803, 5
        %v1806 = vor.u32 %v1802, %v1805
        %v1807 = vrot.slane %v1806, 4
        %v1809 = vshll.u32 %v1748, 16
        %v1811 = vrot.slane %v1809, 5
        %v1812 = vsel %vm995, %v1807, %v1811
        %v1814 = vshrl.u32 %v1749, 16
        %v1816 = vrot.slane %v1814, 4
        %v1817 = vshll.u32 %v1749, 16
        %v1819 = vrot.slane %v1817, 5
        %v1820 = vor.u32 %v1816, %v1819
        %v1821 = vrot.slane %v1820, 4
        %v1823 = vshll.u32 %v1750, 16
        %v1825 = vrot.slane %v1823, 5
        %v1826 = vsel %vm995, %v1821, %v1825
        %v1828 = vshrl.u32 %v1751, 16
        %v1830 = vrot.slane %v1828, 4
        %v1831 = vshll.u32 %v1751, 16
        %v1833 = vrot.slane %v1831, 5
        %v1834 = vor.u32 %v1830, %v1833
        %v1835 = vrot.slane %v1834, 4
        %v1837 = vshll.u32 %v1752, 16
        %v1839 = vrot.slane %v1837, 5
        %v1840 = vsel %vm995, %v1835, %v1839
        %v1842 = vshrl.u32 %v1753, 16
        %v1844 = vrot.slane %v1842, 4
        %v1845 = vshll.u32 %v1753, 16
        %v1847 = vrot.slane %v1845, 5
        %v1848 = vor.u32 %v1844, %v1847
        %v1849 = vrot.slane %v1848, 4
        %v1851 = vshll.u32 %v1754, 16
        %v1853 = vrot.slane %v1851, 5
        %v1854 = vsel %vm995, %v1849, %v1853
        %v1856 = vshrl.u32 %v1755, 16
        %v1858 = vrot.slane %v1856, 4
        %v1859 = vshll.u32 %v1755, 16
        %v1861 = vrot.slane %v1859, 5
        %v1862 = vor.u32 %v1858, %v1861
        %v1863 = vrot.slane %v1862, 4
        %v1865 = vshll.u32 %v1756, 16
        %v1867 = vrot.slane %v1865, 5
        %v1868 = vsel %vm995, %v1863, %v1867
        %1869 = vrot.lane.b32.xlu0 %v1770, 96
        %v1870 = vpop.permute.xlu0 %1869
        %1871 = vrot.lane.b32.xlu0 %v1784, 96
        %v1872 = vpop.permute.xlu0 %1871
        %1873 = vrot.lane.b32.xlu0 %v1798, 96
        %v1874 = vpop.permute.xlu0 %1873
        %1875 = vrot.lane.b32.xlu0 %v1812, 96
        %v1876 = vpop.permute.xlu0 %1875
        %1877 = vrot.lane.b32.xlu0 %v1826, 96
        %v1878 = vpop.permute.xlu0 %1877
        %1879 = vrot.lane.b32.xlu0 %v1840, 96
        %v1880 = vpop.permute.xlu0 %1879
        %1881 = vrot.lane.b32.xlu0 %v1854, 96
        %v1882 = vpop.permute.xlu0 %1881
        %1883 = vrot.lane.b32.xlu0 %v1868, 96
        %v1884 = vpop.permute.xlu0 %1883
        %vm1893 = vcmask 913152
        %1894 = vst.msk [vmem:[#allocation5 + $0x8] sm:$0xf] %vm1893, %v1870
        %1895 = vst.msk [vmem:[#allocation5 + $0x18] sm:$0xf] %vm1893, %v1872
        %1896 = vst.msk [vmem:[#allocation5 + $0x28] sm:$0xf] %vm1893, %v1874
        %1897 = vst.msk [vmem:[#allocation5 + $0x38] sm:$0xf] %vm1893, %v1876
        %1898 = vst.msk [vmem:[#allocation5 + $0x48] sm:$0xf] %vm1893, %v1878
        %1899 = vst.msk [vmem:[#allocation5 + $0x58] sm:$0xf] %vm1893, %v1880
        %1900 = vst.msk [vmem:[#allocation5 + $0x68] sm:$0xf] %vm1893, %v1882
        %1901 = vst.msk [vmem:[#allocation5 + $0x78] sm:$0xf] %vm1893, %v1884
        %v1902 = vld [vmem:[%s564] sm:$0xe]
        %v1903 = vld [vmem:[%s564 + $0x4] sm:$0x1]
        %v1904 = vld [vmem:[%s564 + $0x8] sm:$0xe]
        %v1905 = vld [vmem:[%s564 + $0xc] sm:$0x1]
        %v1906 = vld [vmem:[%s564 + $0x10] sm:$0xe]
        %v1907 = vld [vmem:[%s564 + $0x14] sm:$0x1]
        %v1908 = vld [vmem:[%s564 + $0x18] sm:$0xe]
        %v1909 = vld [vmem:[%s564 + $0x1c] sm:$0x1]
        %v1910 = vld [vmem:[%s564 + $0x20] sm:$0xe]
        %v1911 = vld [vmem:[%s564 + $0x24] sm:$0x1]
        %v1912 = vld [vmem:[%s564 + $0x28] sm:$0xe]
        %v1913 = vld [vmem:[%s564 + $0x2c] sm:$0x1]
        %v1914 = vld [vmem:[%s564 + $0x30] sm:$0xe]
        %v1915 = vld [vmem:[%s564 + $0x34] sm:$0x1]
        %v1916 = vld [vmem:[%s564 + $0x38] sm:$0xe]
        %v1917 = vld [vmem:[%s564 + $0x3c] sm:$0x1]
        %v1934 = vrot.slane %v1902, 5
        %v1935 = vrot.slane %v1934, 4
        %v1936 = vrot.slane %v1903, 5
        %v1937 = vsel %vm1336, %v1935, %v1936
        %v1938 = vrot.slane %v1904, 5
        %v1939 = vrot.slane %v1938, 4
        %v1940 = vrot.slane %v1905, 5
        %v1941 = vsel %vm1336, %v1939, %v1940
        %v1942 = vrot.slane %v1906, 5
        %v1943 = vrot.slane %v1942, 4
        %v1944 = vrot.slane %v1907, 5
        %v1945 = vsel %vm1336, %v1943, %v1944
        %v1946 = vrot.slane %v1908, 5
        %v1947 = vrot.slane %v1946, 4
        %v1948 = vrot.slane %v1909, 5
        %v1949 = vsel %vm1336, %v1947, %v1948
        %v1950 = vrot.slane %v1910, 5
        %v1951 = vrot.slane %v1950, 4
        %v1952 = vrot.slane %v1911, 5
        %v1953 = vsel %vm1336, %v1951, %v1952
        %v1954 = vrot.slane %v1912, 5
        %v1955 = vrot.slane %v1954, 4
        %v1956 = vrot.slane %v1913, 5
        %v1957 = vsel %vm1336, %v1955, %v1956
        %v1958 = vrot.slane %v1914, 5
        %v1959 = vrot.slane %v1958, 4
        %v1960 = vrot.slane %v1915, 5
        %v1961 = vsel %vm1336, %v1959, %v1960
        %v1962 = vrot.slane %v1916, 5
        %v1963 = vrot.slane %v1962, 4
        %v1964 = vrot.slane %v1917, 5
        %v1965 = vsel %vm1336, %v1963, %v1964
        %1966 = vrot.lane.b32.xlu0 %v1937, 32
        %v1967 = vpop.permute.xlu0 %1966
        %1968 = vrot.lane.b32.xlu0 %v1941, 32
        %v1969 = vpop.permute.xlu0 %1968
        %1970 = vrot.lane.b32.xlu0 %v1945, 32
        %v1971 = vpop.permute.xlu0 %1970
        %1972 = vrot.lane.b32.xlu0 %v1949, 32
        %v1973 = vpop.permute.xlu0 %1972
        %1974 = vrot.lane.b32.xlu0 %v1953, 32
        %v1975 = vpop.permute.xlu0 %1974
        %1976 = vrot.lane.b32.xlu0 %v1957, 32
        %v1977 = vpop.permute.xlu0 %1976
        %1978 = vrot.lane.b32.xlu0 %v1961, 32
        %v1979 = vpop.permute.xlu0 %1978
        %1980 = vrot.lane.b32.xlu0 %v1965, 32
        %v1981 = vpop.permute.xlu0 %1980
        %1990 = vst.msk [vmem:[#allocation5 + $0x4] sm:$0xf] %vm1132, %v1967
        %1991 = vst.msk [vmem:[#allocation5 + $0x14] sm:$0xf] %vm1132, %v1969
        %1992 = vst.msk [vmem:[#allocation5 + $0x24] sm:$0xf] %vm1132, %v1971
        %1993 = vst.msk [vmem:[#allocation5 + $0x34] sm:$0xf] %vm1132, %v1973
        %1994 = vst.msk [vmem:[#allocation5 + $0x44] sm:$0xf] %vm1132, %v1975
        %1995 = vst.msk [vmem:[#allocation5 + $0x54] sm:$0xf] %vm1132, %v1977
        %1996 = vst.msk [vmem:[#allocation5 + $0x64] sm:$0xf] %vm1132, %v1979
        %1997 = vst.msk [vmem:[#allocation5 + $0x74] sm:$0xf] %vm1132, %v1981
        %v1998 = vld [vmem:[%s861] sm:$0xe]
        %v1999 = vld [vmem:[%s861 + $0x4] sm:$0x1]
        %v2000 = vld [vmem:[%s861 + $0x8] sm:$0xe]
        %v2001 = vld [vmem:[%s861 + $0xc] sm:$0x1]
        %v2002 = vld [vmem:[%s861 + $0x10] sm:$0xe]
        %v2003 = vld [vmem:[%s861 + $0x14] sm:$0x1]
        %v2004 = vld [vmem:[%s861 + $0x18] sm:$0xe]
        %v2005 = vld [vmem:[%s861 + $0x1c] sm:$0x1]
        %v2006 = vld [vmem:[%s861 + $0x20] sm:$0xe]
        %v2007 = vld [vmem:[%s861 + $0x24] sm:$0x1]
        %v2008 = vld [vmem:[%s861 + $0x28] sm:$0xe]
        %v2009 = vld [vmem:[%s861 + $0x2c] sm:$0x1]
        %v2010 = vld [vmem:[%s861 + $0x30] sm:$0xe]
        %v2011 = vld [vmem:[%s861 + $0x34] sm:$0x1]
        %v2012 = vld [vmem:[%s861 + $0x38] sm:$0xe]
        %v2013 = vld [vmem:[%s861 + $0x3c] sm:$0x1]
        %v2030 = vrot.slane %v1998, 5
        %v2031 = vrot.slane %v2030, 4
        %v2032 = vrot.slane %v1999, 5
        %v2033 = vsel %vm1336, %v2031, %v2032
        %v2034 = vrot.slane %v2000, 5
        %v2035 = vrot.slane %v2034, 4
        %v2036 = vrot.slane %v2001, 5
        %v2037 = vsel %vm1336, %v2035, %v2036
        %v2038 = vrot.slane %v2002, 5
        %v2039 = vrot.slane %v2038, 4
        %v2040 = vrot.slane %v2003, 5
        %v2041 = vsel %vm1336, %v2039, %v2040
        %v2042 = vrot.slane %v2004, 5
        %v2043 = vrot.slane %v2042, 4
        %v2044 = vrot.slane %v2005, 5
        %v2045 = vsel %vm1336, %v2043, %v2044
        %v2046 = vrot.slane %v2006, 5
        %v2047 = vrot.slane %v2046, 4
        %v2048 = vrot.slane %v2007, 5
        %v2049 = vsel %vm1336, %v2047, %v2048
        %v2050 = vrot.slane %v2008, 5
        %v2051 = vrot.slane %v2050, 4
        %v2052 = vrot.slane %v2009, 5
        %v2053 = vsel %vm1336, %v2051, %v2052
        %v2054 = vrot.slane %v2010, 5
        %v2055 = vrot.slane %v2054, 4
        %v2056 = vrot.slane %v2011, 5
        %v2057 = vsel %vm1336, %v2055, %v2056
        %v2058 = vrot.slane %v2012, 5
        %v2059 = vrot.slane %v2058, 4
        %v2060 = vrot.slane %v2013, 5
        %v2061 = vsel %vm1336, %v2059, %v2060
        %2062 = vrot.lane.b32.xlu0 %v2033, 112
        %v2063 = vpop.permute.xlu0 %2062
        %2064 = vrot.lane.b32.xlu0 %v2037, 112
        %v2065 = vpop.permute.xlu0 %2064
        %2066 = vrot.lane.b32.xlu0 %v2041, 112
        %v2067 = vpop.permute.xlu0 %2066
        %2068 = vrot.lane.b32.xlu0 %v2045, 112
        %v2069 = vpop.permute.xlu0 %2068
        %2070 = vrot.lane.b32.xlu0 %v2049, 112
        %v2071 = vpop.permute.xlu0 %2070
        %2072 = vrot.lane.b32.xlu0 %v2053, 112
        %v2073 = vpop.permute.xlu0 %2072
        %2074 = vrot.lane.b32.xlu0 %v2057, 112
        %v2075 = vpop.permute.xlu0 %2074
        %2076 = vrot.lane.b32.xlu0 %v2061, 112
        %v2077 = vpop.permute.xlu0 %2076
        %vm2086 = vcmask 1044352
        %2087 = vst.msk [vmem:[#allocation5 + $0x8] sm:$0xf] %vm2086, %v2063
        %2088 = vst.msk [vmem:[#allocation5 + $0x18] sm:$0xf] %vm2086, %v2065
        %2089 = vst.msk [vmem:[#allocation5 + $0x28] sm:$0xf] %vm2086, %v2067
        %2090 = vst.msk [vmem:[#allocation5 + $0x38] sm:$0xf] %vm2086, %v2069
        %2091 = vst.msk [vmem:[#allocation5 + $0x48] sm:$0xf] %vm2086, %v2071
        %2092 = vst.msk [vmem:[#allocation5 + $0x58] sm:$0xf] %vm2086, %v2073
        %2093 = vst.msk [vmem:[#allocation5 + $0x68] sm:$0xf] %vm2086, %v2075
        %2094 = vst.msk [vmem:[#allocation5 + $0x78] sm:$0xf] %vm2086, %v2077
        %s2095 = scalar_lea.vmem [#allocation2], 16
        %v2096 = vld [vmem:[%s2095] sm:$0xf]
        %v2097 = vld [vmem:[%s2095 + $0x8] sm:$0xf]
        %v2098 = vld [vmem:[%s2095 + $0x10] sm:$0xf]
        %v2099 = vld [vmem:[%s2095 + $0x18] sm:$0xf]
        %v2100 = vld [vmem:[%s2095 + $0x20] sm:$0xf]
        %v2101 = vld [vmem:[%s2095 + $0x28] sm:$0xf]
        %v2102 = vld [vmem:[%s2095 + $0x30] sm:$0xf]
        %v2103 = vld [vmem:[%s2095 + $0x38] sm:$0xf]
        %2112 = vrot.lane.b32.xlu0 %v2096, 64
        %v2113 = vpop.permute.xlu0 %2112
        %2114 = vrot.lane.b32.xlu0 %v2097, 64
        %v2115 = vpop.permute.xlu0 %2114
        %2116 = vrot.lane.b32.xlu0 %v2098, 64
        %v2117 = vpop.permute.xlu0 %2116
        %2118 = vrot.lane.b32.xlu0 %v2099, 64
        %v2119 = vpop.permute.xlu0 %2118
        %2120 = vrot.lane.b32.xlu0 %v2100, 64
        %v2121 = vpop.permute.xlu0 %2120
        %2122 = vrot.lane.b32.xlu0 %v2101, 64
        %v2123 = vpop.permute.xlu0 %2122
        %2124 = vrot.lane.b32.xlu0 %v2102, 64
        %v2125 = vpop.permute.xlu0 %2124
        %2126 = vrot.lane.b32.xlu0 %v2103, 64
        %v2127 = vpop.permute.xlu0 %2126
        %2136 = vst.msk [vmem:[#allocation5 + $0x4] sm:$0xf] %vm1393, %v2113
        %2137 = vst.msk [vmem:[#allocation5 + $0x14] sm:$0xf] %vm1393, %v2115
        %2138 = vst.msk [vmem:[#allocation5 + $0x24] sm:$0xf] %vm1393, %v2117
        %2139 = vst.msk [vmem:[#allocation5 + $0x34] sm:$0xf] %vm1393, %v2119
        %2140 = vst.msk [vmem:[#allocation5 + $0x44] sm:$0xf] %vm1393, %v2121
        %2141 = vst.msk [vmem:[#allocation5 + $0x54] sm:$0xf] %vm1393, %v2123
        %2142 = vst.msk [vmem:[#allocation5 + $0x64] sm:$0xf] %vm1393, %v2125
        %2143 = vst.msk [vmem:[#allocation5 + $0x74] sm:$0xf] %vm1393, %v2127
        %s2144 = scalar_lea.vmem [#allocation3], 16
        %v2145 = vld [vmem:[%s2144] sm:$0xf]
        %v2146 = vld [vmem:[%s2144 + $0x8] sm:$0xf]
        %v2147 = vld [vmem:[%s2144 + $0x10] sm:$0xf]
        %v2148 = vld [vmem:[%s2144 + $0x18] sm:$0xf]
        %v2149 = vld [vmem:[%s2144 + $0x20] sm:$0xf]
        %v2150 = vld [vmem:[%s2144 + $0x28] sm:$0xf]
        %v2151 = vld [vmem:[%s2144 + $0x30] sm:$0xf]
        %v2152 = vld [vmem:[%s2144 + $0x38] sm:$0xf]
        %2153 = vst.msk [vmem:[#allocation5 + $0xc] sm:$0xf] %vm397, %v2145
        %2154 = vst.msk [vmem:[#allocation5 + $0x1c] sm:$0xf] %vm397, %v2146
        %2155 = vst.msk [vmem:[#allocation5 + $0x2c] sm:$0xf] %vm397, %v2147
        %2156 = vst.msk [vmem:[#allocation5 + $0x3c] sm:$0xf] %vm397, %v2148
        %2157 = vst.msk [vmem:[#allocation5 + $0x4c] sm:$0xf] %vm397, %v2149
        %2158 = vst.msk [vmem:[#allocation5 + $0x5c] sm:$0xf] %vm397, %v2150
        %2159 = vst.msk [vmem:[#allocation5 + $0x6c] sm:$0xf] %vm397, %v2151
        %2160 = vst.msk [vmem:[#allocation5 + $0x7c] sm:$0xf] %vm397, %v2152
        %v2161 = vld [vmem:[%s2095] sm:$0xf]
        %v2162 = vld [vmem:[%s2095 + $0x4] sm:$0x1]
        %v2163 = vld [vmem:[%s2095 + $0x8] sm:$0xf]
        %v2164 = vld [vmem:[%s2095 + $0xc] sm:$0x1]
        %v2165 = vld [vmem:[%s2095 + $0x10] sm:$0xf]
        %v2166 = vld [vmem:[%s2095 + $0x14] sm:$0x1]
        %v2167 = vld [vmem:[%s2095 + $0x18] sm:$0xf]
        %v2168 = vld [vmem:[%s2095 + $0x1c] sm:$0x1]
        %v2169 = vld [vmem:[%s2095 + $0x20] sm:$0xf]
        %v2170 = vld [vmem:[%s2095 + $0x24] sm:$0x1]
        %v2171 = vld [vmem:[%s2095 + $0x28] sm:$0xf]
        %v2172 = vld [vmem:[%s2095 + $0x2c] sm:$0x1]
        %v2173 = vld [vmem:[%s2095 + $0x30] sm:$0xf]
        %v2174 = vld [vmem:[%s2095 + $0x34] sm:$0x1]
        %v2175 = vld [vmem:[%s2095 + $0x38] sm:$0xf]
        %v2176 = vld [vmem:[%s2095 + $0x3c] sm:$0x1]
        %v2178 = vshrl.u32 %v2161, 16
        %v2180 = vrot.slane %v2178, 4
        %v2181 = vshll.u32 %v2161, 16
        %v2183 = vrot.slane %v2181, 5
        %v2184 = vor.u32 %v2180, %v2183
        %v2185 = vrot.slane %v2184, 4
        %v2187 = vshll.u32 %v2162, 16
        %v2189 = vrot.slane %v2187, 5
        %v2190 = vsel %vm995, %v2185, %v2189
        %v2192 = vshrl.u32 %v2163, 16
        %v2194 = vrot.slane %v2192, 4
        %v2195 = vshll.u32 %v2163, 16
        %v2197 = vrot.slane %v2195, 5
        %v2198 = vor.u32 %v2194, %v2197
        %v2199 = vrot.slane %v2198, 4
        %v2201 = vshll.u32 %v2164, 16
        %v2203 = vrot.slane %v2201, 5
        %v2204 = vsel %vm995, %v2199, %v2203
        %v2206 = vshrl.u32 %v2165, 16
        %v2208 = vrot.slane %v2206, 4
        %v2209 = vshll.u32 %v2165, 16
        %v2211 = vrot.slane %v2209, 5
        %v2212 = vor.u32 %v2208, %v2211
        %v2213 = vrot.slane %v2212, 4
        %v2215 = vshll.u32 %v2166, 16
        %v2217 = vrot.slane %v2215, 5
        %v2218 = vsel %vm995, %v2213, %v2217
        %v2220 = vshrl.u32 %v2167, 16
        %v2222 = vrot.slane %v2220, 4
        %v2223 = vshll.u32 %v2167, 16
        %v2225 = vrot.slane %v2223, 5
        %v2226 = vor.u32 %v2222, %v2225
        %v2227 = vrot.slane %v2226, 4
        %v2229 = vshll.u32 %v2168, 16
        %v2231 = vrot.slane %v2229, 5
        %v2232 = vsel %vm995, %v2227, %v2231
        %v2234 = vshrl.u32 %v2169, 16
        %v2236 = vrot.slane %v2234, 4
        %v2237 = vshll.u32 %v2169, 16
        %v2239 = vrot.slane %v2237, 5
        %v2240 = vor.u32 %v2236, %v2239
        %v2241 = vrot.slane %v2240, 4
        %v2243 = vshll.u32 %v2170, 16
        %v2245 = vrot.slane %v2243, 5
        %v2246 = vsel %vm995, %v2241, %v2245
        %v2248 = vshrl.u32 %v2171, 16
        %v2250 = vrot.slane %v2248, 4
        %v2251 = vshll.u32 %v2171, 16
        %v2253 = vrot.slane %v2251, 5
        %v2254 = vor.u32 %v2250, %v2253
        %v2255 = vrot.slane %v2254, 4
        %v2257 = vshll.u32 %v2172, 16
        %v2259 = vrot.slane %v2257, 5
        %v2260 = vsel %vm995, %v2255, %v2259
        %v2262 = vshrl.u32 %v2173, 16
        %v2264 = vrot.slane %v2262, 4
        %v2265 = vshll.u32 %v2173, 16
        %v2267 = vrot.slane %v2265, 5
        %v2268 = vor.u32 %v2264, %v2267
        %v2269 = vrot.slane %v2268, 4
        %v2271 = vshll.u32 %v2174, 16
        %v2273 = vrot.slane %v2271, 5
        %v2274 = vsel %vm995, %v2269, %v2273
        %v2276 = vshrl.u32 %v2175, 16
        %v2278 = vrot.slane %v2276, 4
        %v2279 = vshll.u32 %v2175, 16
        %v2281 = vrot.slane %v2279, 5
        %v2282 = vor.u32 %v2278, %v2281
        %v2283 = vrot.slane %v2282, 4
        %v2285 = vshll.u32 %v2176, 16
        %v2287 = vrot.slane %v2285, 5
        %v2288 = vsel %vm995, %v2283, %v2287
        %2289 = vrot.lane.b32.xlu0 %v2190, 96
        %v2290 = vpop.permute.xlu0 %2289
        %2291 = vrot.lane.b32.xlu0 %v2204, 96
        %v2292 = vpop.permute.xlu0 %2291
        %2293 = vrot.lane.b32.xlu0 %v2218, 96
        %v2294 = vpop.permute.xlu0 %2293
        %2295 = vrot.lane.b32.xlu0 %v2232, 96
        %v2296 = vpop.permute.xlu0 %2295
        %2297 = vrot.lane.b32.xlu0 %v2246, 96
        %v2298 = vpop.permute.xlu0 %2297
        %2299 = vrot.lane.b32.xlu0 %v2260, 96
        %v2300 = vpop.permute.xlu0 %2299
        %2301 = vrot.lane.b32.xlu0 %v2274, 96
        %v2302 = vpop.permute.xlu0 %2301
        %2303 = vrot.lane.b32.xlu0 %v2288, 96
        %v2304 = vpop.permute.xlu0 %2303
        %2313 = vst.msk [vmem:[#allocation5 + $0x4] sm:$0xf] %vm1539, %v2290
        %2314 = vst.msk [vmem:[#allocation5 + $0x14] sm:$0xf] %vm1539, %v2292
        %2315 = vst.msk [vmem:[#allocation5 + $0x24] sm:$0xf] %vm1539, %v2294
        %2316 = vst.msk [vmem:[#allocation5 + $0x34] sm:$0xf] %vm1539, %v2296
        %2317 = vst.msk [vmem:[#allocation5 + $0x44] sm:$0xf] %vm1539, %v2298
        %2318 = vst.msk [vmem:[#allocation5 + $0x54] sm:$0xf] %vm1539, %v2300
        %2319 = vst.msk [vmem:[#allocation5 + $0x64] sm:$0xf] %vm1539, %v2302
        %2320 = vst.msk [vmem:[#allocation5 + $0x74] sm:$0xf] %vm1539, %v2304
        %v2321 = vld [vmem:[%s2144] sm:$0xf]
        %v2322 = vld [vmem:[%s2144 + $0x4] sm:$0x1]
        %v2323 = vld [vmem:[%s2144 + $0x8] sm:$0xf]
        %v2324 = vld [vmem:[%s2144 + $0xc] sm:$0x1]
        %v2325 = vld [vmem:[%s2144 + $0x10] sm:$0xf]
        %v2326 = vld [vmem:[%s2144 + $0x14] sm:$0x1]
        %v2327 = vld [vmem:[%s2144 + $0x18] sm:$0xf]
        %v2328 = vld [vmem:[%s2144 + $0x1c] sm:$0x1]
        %v2329 = vld [vmem:[%s2144 + $0x20] sm:$0xf]
        %v2330 = vld [vmem:[%s2144 + $0x24] sm:$0x1]
        %v2331 = vld [vmem:[%s2144 + $0x28] sm:$0xf]
        %v2332 = vld [vmem:[%s2144 + $0x2c] sm:$0x1]
        %v2333 = vld [vmem:[%s2144 + $0x30] sm:$0xf]
        %v2334 = vld [vmem:[%s2144 + $0x34] sm:$0x1]
        %v2335 = vld [vmem:[%s2144 + $0x38] sm:$0xf]
        %v2336 = vld [vmem:[%s2144 + $0x3c] sm:$0x1]
        %v2338 = vshrl.u32 %v2321, 16
        %v2340 = vrot.slane %v2338, 4
        %v2341 = vshll.u32 %v2321, 16
        %v2343 = vrot.slane %v2341, 5
        %v2344 = vor.u32 %v2340, %v2343
        %v2345 = vrot.slane %v2344, 4
        %v2347 = vshll.u32 %v2322, 16
        %v2349 = vrot.slane %v2347, 5
        %v2350 = vsel %vm995, %v2345, %v2349
        %v2352 = vshrl.u32 %v2323, 16
        %v2354 = vrot.slane %v2352, 4
        %v2355 = vshll.u32 %v2323, 16
        %v2357 = vrot.slane %v2355, 5
        %v2358 = vor.u32 %v2354, %v2357
        %v2359 = vrot.slane %v2358, 4
        %v2361 = vshll.u32 %v2324, 16
        %v2363 = vrot.slane %v2361, 5
        %v2364 = vsel %vm995, %v2359, %v2363
        %v2366 = vshrl.u32 %v2325, 16
        %v2368 = vrot.slane %v2366, 4
        %v2369 = vshll.u32 %v2325, 16
        %v2371 = vrot.slane %v2369, 5
        %v2372 = vor.u32 %v2368, %v2371
        %v2373 = vrot.slane %v2372, 4
        %v2375 = vshll.u32 %v2326, 16
        %v2377 = vrot.slane %v2375, 5
        %v2378 = vsel %vm995, %v2373, %v2377
        %v2380 = vshrl.u32 %v2327, 16
        %v2382 = vrot.slane %v2380, 4
        %v2383 = vshll.u32 %v2327, 16
        %v2385 = vrot.slane %v2383, 5
        %v2386 = vor.u32 %v2382, %v2385
        %v2387 = vrot.slane %v2386, 4
        %v2389 = vshll.u32 %v2328, 16
        %v2391 = vrot.slane %v2389, 5
        %v2392 = vsel %vm995, %v2387, %v2391
        %v2394 = vshrl.u32 %v2329, 16
        %v2396 = vrot.slane %v2394, 4
        %v2397 = vshll.u32 %v2329, 16
        %v2399 = vrot.slane %v2397, 5
        %v2400 = vor.u32 %v2396, %v2399
        %v2401 = vrot.slane %v2400, 4
        %v2403 = vshll.u32 %v2330, 16
        %v2405 = vrot.slane %v2403, 5
        %v2406 = vsel %vm995, %v2401, %v2405
        %v2408 = vshrl.u32 %v2331, 16
        %v2410 = vrot.slane %v2408, 4
        %v2411 = vshll.u32 %v2331, 16
        %v2413 = vrot.slane %v2411, 5
        %v2414 = vor.u32 %v2410, %v2413
        %v2415 = vrot.slane %v2414, 4
        %v2417 = vshll.u32 %v2332, 16
        %v2419 = vrot.slane %v2417, 5
        %v2420 = vsel %vm995, %v2415, %v2419
        %v2422 = vshrl.u32 %v2333, 16
        %v2424 = vrot.slane %v2422, 4
        %v2425 = vshll.u32 %v2333, 16
        %v2427 = vrot.slane %v2425, 5
        %v2428 = vor.u32 %v2424, %v2427
        %v2429 = vrot.slane %v2428, 4
        %v2431 = vshll.u32 %v2334, 16
        %v2433 = vrot.slane %v2431, 5
        %v2434 = vsel %vm995, %v2429, %v2433
        %v2436 = vshrl.u32 %v2335, 16
        %v2438 = vrot.slane %v2436, 4
        %v2439 = vshll.u32 %v2335, 16
        %v2441 = vrot.slane %v2439, 5
        %v2442 = vor.u32 %v2438, %v2441
        %v2443 = vrot.slane %v2442, 4
        %v2445 = vshll.u32 %v2336, 16
        %v2447 = vrot.slane %v2445, 5
        %v2448 = vsel %vm995, %v2443, %v2447
        %2449 = vrot.lane.b32.xlu0 %v2350, 16
        %v2450 = vpop.permute.xlu0 %2449
        %2451 = vrot.lane.b32.xlu0 %v2364, 16
        %v2452 = vpop.permute.xlu0 %2451
        %2453 = vrot.lane.b32.xlu0 %v2378, 16
        %v2454 = vpop.permute.xlu0 %2453
        %2455 = vrot.lane.b32.xlu0 %v2392, 16
        %v2456 = vpop.permute.xlu0 %2455
        %2457 = vrot.lane.b32.xlu0 %v2406, 16
        %v2458 = vpop.permute.xlu0 %2457
        %2459 = vrot.lane.b32.xlu0 %v2420, 16
        %v2460 = vpop.permute.xlu0 %2459
        %2461 = vrot.lane.b32.xlu0 %v2434, 16
        %v2462 = vpop.permute.xlu0 %2461
        %2463 = vrot.lane.b32.xlu0 %v2448, 16
        %v2464 = vpop.permute.xlu0 %2463
        %vm2473 = vcmask 257152
        %2474 = vst.msk [vmem:[#allocation5 + $0xc] sm:$0xf] %vm2473, %v2450
        %2475 = vst.msk [vmem:[#allocation5 + $0x1c] sm:$0xf] %vm2473, %v2452
        %2476 = vst.msk [vmem:[#allocation5 + $0x2c] sm:$0xf] %vm2473, %v2454
        %2477 = vst.msk [vmem:[#allocation5 + $0x3c] sm:$0xf] %vm2473, %v2456
        %2478 = vst.msk [vmem:[#allocation5 + $0x4c] sm:$0xf] %vm2473, %v2458
        %2479 = vst.msk [vmem:[#allocation5 + $0x5c] sm:$0xf] %vm2473, %v2460
        %2480 = vst.msk [vmem:[#allocation5 + $0x6c] sm:$0xf] %vm2473, %v2462
        %2481 = vst.msk [vmem:[#allocation5 + $0x7c] sm:$0xf] %vm2473, %v2464
        %v2482 = vld [vmem:[%s2095] sm:$0xe]
        %v2483 = vld [vmem:[%s2095 + $0x4] sm:$0x1]
        %v2484 = vld [vmem:[%s2095 + $0x8] sm:$0xe]
        %v2485 = vld [vmem:[%s2095 + $0xc] sm:$0x1]
        %v2486 = vld [vmem:[%s2095 + $0x10] sm:$0xe]
        %v2487 = vld [vmem:[%s2095 + $0x14] sm:$0x1]
        %v2488 = vld [vmem:[%s2095 + $0x18] sm:$0xe]
        %v2489 = vld [vmem:[%s2095 + $0x1c] sm:$0x1]
        %v2490 = vld [vmem:[%s2095 + $0x20] sm:$0xe]
        %v2491 = vld [vmem:[%s2095 + $0x24] sm:$0x1]
        %v2492 = vld [vmem:[%s2095 + $0x28] sm:$0xe]
        %v2493 = vld [vmem:[%s2095 + $0x2c] sm:$0x1]
        %v2494 = vld [vmem:[%s2095 + $0x30] sm:$0xe]
        %v2495 = vld [vmem:[%s2095 + $0x34] sm:$0x1]
        %v2496 = vld [vmem:[%s2095 + $0x38] sm:$0xe]
        %v2497 = vld [vmem:[%s2095 + $0x3c] sm:$0x1]
        %v2514 = vrot.slane %v2482, 5
        %v2515 = vrot.slane %v2514, 4
        %v2516 = vrot.slane %v2483, 5
        %v2517 = vsel %vm1336, %v2515, %v2516
        %v2518 = vrot.slane %v2484, 5
        %v2519 = vrot.slane %v2518, 4
        %v2520 = vrot.slane %v2485, 5
        %v2521 = vsel %vm1336, %v2519, %v2520
        %v2522 = vrot.slane %v2486, 5
        %v2523 = vrot.slane %v2522, 4
        %v2524 = vrot.slane %v2487, 5
        %v2525 = vsel %vm1336, %v2523, %v2524
        %v2526 = vrot.slane %v2488, 5
        %v2527 = vrot.slane %v2526, 4
        %v2528 = vrot.slane %v2489, 5
        %v2529 = vsel %vm1336, %v2527, %v2528
        %v2530 = vrot.slane %v2490, 5
        %v2531 = vrot.slane %v2530, 4
        %v2532 = vrot.slane %v2491, 5
        %v2533 = vsel %vm1336, %v2531, %v2532
        %v2534 = vrot.slane %v2492, 5
        %v2535 = vrot.slane %v2534, 4
        %v2536 = vrot.slane %v2493, 5
        %v2537 = vsel %vm1336, %v2535, %v2536
        %v2538 = vrot.slane %v2494, 5
        %v2539 = vrot.slane %v2538, 4
        %v2540 = vrot.slane %v2495, 5
        %v2541 = vsel %vm1336, %v2539, %v2540
        %v2542 = vrot.slane %v2496, 5
        %v2543 = vrot.slane %v2542, 4
        %v2544 = vrot.slane %v2497, 5
        %v2545 = vsel %vm1336, %v2543, %v2544
        %2554 = vst.msk [vmem:[#allocation5 + $0x8] sm:$0xf] %vm325, %v2517
        %2555 = vst.msk [vmem:[#allocation5 + $0x18] sm:$0xf] %vm325, %v2521
        %2556 = vst.msk [vmem:[#allocation5 + $0x28] sm:$0xf] %vm325, %v2525
        %2557 = vst.msk [vmem:[#allocation5 + $0x38] sm:$0xf] %vm325, %v2529
        %2558 = vst.msk [vmem:[#allocation5 + $0x48] sm:$0xf] %vm325, %v2533
        %2559 = vst.msk [vmem:[#allocation5 + $0x58] sm:$0xf] %vm325, %v2537
        %2560 = vst.msk [vmem:[#allocation5 + $0x68] sm:$0xf] %vm325, %v2541
        %2561 = vst.msk [vmem:[#allocation5 + $0x78] sm:$0xf] %vm325, %v2545
        %v2562 = vld [vmem:[%s2144] sm:$0xe]
        %v2563 = vld [vmem:[%s2144 + $0x4] sm:$0x1]
        %v2564 = vld [vmem:[%s2144 + $0x8] sm:$0xe]
        %v2565 = vld [vmem:[%s2144 + $0xc] sm:$0x1]
        %v2566 = vld [vmem:[%s2144 + $0x10] sm:$0xe]
        %v2567 = vld [vmem:[%s2144 + $0x14] sm:$0x1]
        %v2568 = vld [vmem:[%s2144 + $0x18] sm:$0xe]
        %v2569 = vld [vmem:[%s2144 + $0x1c] sm:$0x1]
        %v2570 = vld [vmem:[%s2144 + $0x20] sm:$0xe]
        %v2571 = vld [vmem:[%s2144 + $0x24] sm:$0x1]
        %v2572 = vld [vmem:[%s2144 + $0x28] sm:$0xe]
        %v2573 = vld [vmem:[%s2144 + $0x2c] sm:$0x1]
        %v2574 = vld [vmem:[%s2144 + $0x30] sm:$0xe]
        %v2575 = vld [vmem:[%s2144 + $0x34] sm:$0x1]
        %v2576 = vld [vmem:[%s2144 + $0x38] sm:$0xe]
        %v2577 = vld [vmem:[%s2144 + $0x3c] sm:$0x1]
        %v2594 = vrot.slane %v2562, 5
        %v2595 = vrot.slane %v2594, 4
        %v2596 = vrot.slane %v2563, 5
        %v2597 = vsel %vm1336, %v2595, %v2596
        %v2598 = vrot.slane %v2564, 5
        %v2599 = vrot.slane %v2598, 4
        %v2600 = vrot.slane %v2565, 5
        %v2601 = vsel %vm1336, %v2599, %v2600
        %v2602 = vrot.slane %v2566, 5
        %v2603 = vrot.slane %v2602, 4
        %v2604 = vrot.slane %v2567, 5
        %v2605 = vsel %vm1336, %v2603, %v2604
        %v2606 = vrot.slane %v2568, 5
        %v2607 = vrot.slane %v2606, 4
        %v2608 = vrot.slane %v2569, 5
        %v2609 = vsel %vm1336, %v2607, %v2608
        %v2610 = vrot.slane %v2570, 5
        %v2611 = vrot.slane %v2610, 4
        %v2612 = vrot.slane %v2571, 5
        %v2613 = vsel %vm1336, %v2611, %v2612
        %v2614 = vrot.slane %v2572, 5
        %v2615 = vrot.slane %v2614, 4
        %v2616 = vrot.slane %v2573, 5
        %v2617 = vsel %vm1336, %v2615, %v2616
        %v2618 = vrot.slane %v2574, 5
        %v2619 = vrot.slane %v2618, 4
        %v2620 = vrot.slane %v2575, 5
        %v2621 = vsel %vm1336, %v2619, %v2620
        %v2622 = vrot.slane %v2576, 5
        %v2623 = vrot.slane %v2622, 4
        %v2624 = vrot.slane %v2577, 5
        %v2625 = vsel %vm1336, %v2623, %v2624
        %2626 = vrot.lane.b32.xlu0 %v2597, 32
        %v2627 = vpop.permute.xlu0 %2626
        %2628 = vrot.lane.b32.xlu0 %v2601, 32
        %v2629 = vpop.permute.xlu0 %2628
        %2630 = vrot.lane.b32.xlu0 %v2605, 32
        %v2631 = vpop.permute.xlu0 %2630
        %2632 = vrot.lane.b32.xlu0 %v2609, 32
        %v2633 = vpop.permute.xlu0 %2632
        %2634 = vrot.lane.b32.xlu0 %v2613, 32
        %v2635 = vpop.permute.xlu0 %2634
        %2636 = vrot.lane.b32.xlu0 %v2617, 32
        %v2637 = vpop.permute.xlu0 %2636
        %2638 = vrot.lane.b32.xlu0 %v2621, 32
        %v2639 = vpop.permute.xlu0 %2638
        %2640 = vrot.lane.b32.xlu0 %v2625, 32
        %v2641 = vpop.permute.xlu0 %2640
        %2650 = vst.msk [vmem:[#allocation5 + $0xc] sm:$0xf] %vm968, %v2627
        %2651 = vst.msk [vmem:[#allocation5 + $0x1c] sm:$0xf] %vm968, %v2629
        %2652 = vst.msk [vmem:[#allocation5 + $0x2c] sm:$0xf] %vm968, %v2631
        %2653 = vst.msk [vmem:[#allocation5 + $0x3c] sm:$0xf] %vm968, %v2633
        %2654 = vst.msk [vmem:[#allocation5 + $0x4c] sm:$0xf] %vm968, %v2635
        %2655 = vst.msk [vmem:[#allocation5 + $0x5c] sm:$0xf] %vm968, %v2637
        %2656 = vst.msk [vmem:[#allocation5 + $0x6c] sm:$0xf] %vm968, %v2639
        %2657 = vst.msk [vmem:[#allocation5 + $0x7c] sm:$0xf] %vm968, %v2641
        %v2658 = vld [vmem:[#allocation5] sm:$0xff]
        %v2659 = vld [vmem:[#allocation5 + $0x8] sm:$0xff]
        %v2660 = vld [vmem:[#allocation5 + $0x10] sm:$0xff]
        %v2661 = vld [vmem:[#allocation5 + $0x18] sm:$0xff]
        %v2662 = vld [vmem:[#allocation5 + $0x20] sm:$0xff]
        %v2663 = vld [vmem:[#allocation5 + $0x28] sm:$0xff]
        %v2664 = vld [vmem:[#allocation5 + $0x30] sm:$0xff]
        %v2665 = vld [vmem:[#allocation5 + $0x38] sm:$0xff]
        %v2666 = vld [vmem:[#allocation5 + $0x40] sm:$0xff]
        %v2667 = vld [vmem:[#allocation5 + $0x48] sm:$0xff]
        %v2668 = vld [vmem:[#allocation5 + $0x50] sm:$0xff]
        %v2669 = vld [vmem:[#allocation5 + $0x58] sm:$0xff]
        %v2670 = vld [vmem:[#allocation5 + $0x60] sm:$0xff]
        %v2671 = vld [vmem:[#allocation5 + $0x68] sm:$0xff]
        %v2672 = vld [vmem:[#allocation5 + $0x70] sm:$0xff]
        %v2673 = vld [vmem:[#allocation5 + $0x78] sm:$0xff]
        %v2674 = vld [vmem:[%s2] sm:$0xf]
        %v2675 = vld [vmem:[%s2 + $0x4] sm:$0xf]
        %v2676 = vld [vmem:[%s2 + $0x8] sm:$0xf]
        %v2677 = vld [vmem:[%s2 + $0xc] sm:$0xf]
        %v2678 = vld [vmem:[%s2 + $0x10] sm:$0xf]
        %v2679 = vld [vmem:[%s2 + $0x14] sm:$0xf]
        %v2680 = vld [vmem:[%s2 + $0x18] sm:$0xf]
        %v2681 = vld [vmem:[%s2 + $0x1c] sm:$0xf]
        %v2682 = vld [vmem:[%s2 + $0x20] sm:$0xf]
        %v2683 = vld [vmem:[%s2 + $0x24] sm:$0xf]
        %v2684 = vld [vmem:[%s2 + $0x28] sm:$0xf]
        %v2685 = vld [vmem:[%s2 + $0x2c] sm:$0xf]
        %v2686 = vld [vmem:[%s2 + $0x30] sm:$0xf]
        %v2687 = vld [vmem:[%s2 + $0x34] sm:$0xf]
        %v2688 = vld [vmem:[%s2 + $0x38] sm:$0xf]
        %v2689 = vld [vmem:[%s2 + $0x3c] sm:$0xf]
        %v2690 = vld [vmem:[%s2 + $0x40] sm:$0xf]
        %v2691 = vld [vmem:[%s2 + $0x44] sm:$0xf]
        %v2692 = vld [vmem:[%s2 + $0x48] sm:$0xf]
        %v2693 = vld [vmem:[%s2 + $0x4c] sm:$0xf]
        %v2694 = vld [vmem:[%s2 + $0x50] sm:$0xf]
        %v2695 = vld [vmem:[%s2 + $0x54] sm:$0xf]
        %v2696 = vld [vmem:[%s2 + $0x58] sm:$0xf]
        %v2697 = vld [vmem:[%s2 + $0x5c] sm:$0xf]
        %v2698 = vld [vmem:[%s2 + $0x60] sm:$0xf]
        %v2699 = vld [vmem:[%s2 + $0x64] sm:$0xf]
        %v2700 = vld [vmem:[%s2 + $0x68] sm:$0xf]
        %v2701 = vld [vmem:[%s2 + $0x6c] sm:$0xf]
        %v2702 = vld [vmem:[%s2 + $0x70] sm:$0xf]
        %v2703 = vld [vmem:[%s2 + $0x74] sm:$0xf]
        %v2704 = vld [vmem:[%s2 + $0x78] sm:$0xf]
        %v2705 = vld [vmem:[%s2 + $0x7c] sm:$0xf]
        %v2706 = vld [vmem:[%s2 + $0x80] sm:$0xf]
        %v2707 = vld [vmem:[%s2 + $0x84] sm:$0xf]
        %v2708 = vld [vmem:[%s2 + $0x88] sm:$0xf]
        %v2709 = vld [vmem:[%s2 + $0x8c] sm:$0xf]
        %v2710 = vld [vmem:[%s2 + $0x90] sm:$0xf]
        %v2711 = vld [vmem:[%s2 + $0x94] sm:$0xf]
        %v2712 = vld [vmem:[%s2 + $0x98] sm:$0xf]
        %v2713 = vld [vmem:[%s2 + $0x9c] sm:$0xf]
        %v2714 = vld [vmem:[%s2 + $0xa0] sm:$0xf]
        %v2715 = vld [vmem:[%s2 + $0xa4] sm:$0xf]
        %v2716 = vld [vmem:[%s2 + $0xa8] sm:$0xf]
        %v2717 = vld [vmem:[%s2 + $0xac] sm:$0xf]
        %v2718 = vld [vmem:[%s2 + $0xb0] sm:$0xf]
        %v2719 = vld [vmem:[%s2 + $0xb4] sm:$0xf]
        %v2720 = vld [vmem:[%s2 + $0xb8] sm:$0xf]
        %v2721 = vld [vmem:[%s2 + $0xbc] sm:$0xf]
        %v2722 = vld [vmem:[%s2 + $0xc0] sm:$0xf]
        %v2723 = vld [vmem:[%s2 + $0xc4] sm:$0xf]
        %v2724 = vld [vmem:[%s2 + $0xc8] sm:$0xf]
        %v2725 = vld [vmem:[%s2 + $0xcc] sm:$0xf]
        %v2726 = vld [vmem:[%s2 + $0xd0] sm:$0xf]
        %v2727 = vld [vmem:[%s2 + $0xd4] sm:$0xf]
        %v2744 = vunpack.c.l.b16 %v2658
        %v2745 = vunpack.c.h.b16 %v2658
        %v2746 = vunpack.c.l.b16 %v2659
        %v2747 = vunpack.c.h.b16 %v2659
        %v2748 = vunpack.c.l.b16 %v2660
        %v2749 = vunpack.c.h.b16 %v2660
        %v2750 = vunpack.c.l.b16 %v2661
        %v2751 = vunpack.c.h.b16 %v2661
        %v2752 = vunpack.c.l.b16 %v2662
        %v2753 = vunpack.c.h.b16 %v2662
        %v2754 = vunpack.c.l.b16 %v2663
        %v2755 = vunpack.c.h.b16 %v2663
        %v2756 = vunpack.c.l.b16 %v2664
        %v2757 = vunpack.c.h.b16 %v2664
        %v2758 = vunpack.c.l.b16 %v2665
        %v2759 = vunpack.c.h.b16 %v2665
        %v2760 = vunpack.c.l.b16 %v2666
        %v2761 = vunpack.c.h.b16 %v2666
        %v2762 = vunpack.c.l.b16 %v2667
        %v2763 = vunpack.c.h.b16 %v2667
        %v2764 = vunpack.c.l.b16 %v2668
        %v2765 = vunpack.c.h.b16 %v2668
        %v2766 = vunpack.c.l.b16 %v2669
        %v2767 = vunpack.c.h.b16 %v2669
        %v2768 = vunpack.c.l.b16 %v2670
        %v2769 = vunpack.c.h.b16 %v2670
        %v2770 = vunpack.c.l.b16 %v2671
        %v2771 = vunpack.c.h.b16 %v2671
        %v2772 = vunpack.c.l.b16 %v2672
        %v2773 = vunpack.c.h.b16 %v2672
        %v2774 = vunpack.c.l.b16 %v2673
        %v2775 = vunpack.c.h.b16 %v2673
        %v2776 = vpack.c.b16 %v2748, %v2744
        %v2777 = vpack.c.b16 %v2749, %v2745
        %v2778 = vpack.c.b16 %v2750, %v2746
        %v2779 = vpack.c.b16 %v2751, %v2747
        %v2780 = vpack.c.b16 %v2756, %v2752
        %v2781 = vpack.c.b16 %v2757, %v2753
        %v2782 = vpack.c.b16 %v2758, %v2754
        %v2783 = vpack.c.b16 %v2759, %v2755
        %v2784 = vpack.c.b16 %v2764, %v2760
        %v2785 = vpack.c.b16 %v2765, %v2761
        %v2786 = vpack.c.b16 %v2766, %v2762
        %v2787 = vpack.c.b16 %v2767, %v2763
        %v2788 = vpack.c.b16 %v2772, %v2768
        %v2789 = vpack.c.b16 %v2773, %v2769
        %v2790 = vpack.c.b16 %v2774, %v2770
        %v2791 = vpack.c.b16 %v2775, %v2771
        %v2858 = vunpack.c.l.b16 %v2674
        %v2859 = vunpack.c.l.b16 %v2675
        %v2860 = vunpack.c.l.b16 %v2676
        %v2861 = vunpack.c.l.b16 %v2677
        %v2862 = vunpack.c.l.b16 %v2678
        %v2863 = vunpack.c.l.b16 %v2679
        %v2864 = vunpack.c.l.b16 %v2680
        %v2865 = vunpack.c.l.b16 %v2681
        %v2866 = vunpack.c.l.b16 %v2682
        %v2867 = vunpack.c.l.b16 %v2683
        %v2868 = vunpack.c.l.b16 %v2684
        %v2869 = vunpack.c.l.b16 %v2685
        %v2870 = vunpack.c.l.b16 %v2686
        %v2871 = vunpack.c.l.b16 %v2687
        %v2872 = vunpack.c.l.b16 %v2688
        %v2873 = vunpack.c.l.b16 %v2689
        %v2874 = vunpack.c.l.b16 %v2690
        %v2875 = vunpack.c.l.b16 %v2691
        %v2876 = vunpack.c.l.b16 %v2692
        %v2877 = vunpack.c.l.b16 %v2693
        %v2878 = vunpack.c.l.b16 %v2694
        %v2879 = vunpack.c.l.b16 %v2695
        %v2880 = vunpack.c.l.b16 %v2696
        %v2881 = vunpack.c.l.b16 %v2697
        %v2882 = vunpack.c.l.b16 %v2698
        %v2883 = vunpack.c.l.b16 %v2699
        %v2884 = vunpack.c.l.b16 %v2700
        %v2885 = vunpack.c.l.b16 %v2701
        %v2886 = vunpack.c.l.b16 %v2702
        %v2887 = vunpack.c.l.b16 %v2703
        %v2888 = vunpack.c.l.b16 %v2704
        %v2889 = vunpack.c.l.b16 %v2705
        %v2890 = vunpack.c.l.b16 %v2706
        %v2891 = vunpack.c.l.b16 %v2707
        %v2892 = vunpack.c.l.b16 %v2708
        %v2893 = vunpack.c.l.b16 %v2709
        %v2894 = vunpack.c.l.b16 %v2710
        %v2895 = vunpack.c.l.b16 %v2711
        %v2896 = vunpack.c.l.b16 %v2712
        %v2897 = vunpack.c.l.b16 %v2713
        %v2898 = vunpack.c.l.b16 %v2714
        %v2899 = vunpack.c.l.b16 %v2715
        %v2900 = vunpack.c.l.b16 %v2716
        %v2901 = vunpack.c.l.b16 %v2717
        %v2902 = vunpack.c.l.b16 %v2718
        %v2903 = vunpack.c.l.b16 %v2719
        %v2904 = vunpack.c.l.b16 %v2720
        %v2905 = vunpack.c.l.b16 %v2721
        %v2906 = vunpack.c.l.b16 %v2722
        %v2907 = vunpack.c.l.b16 %v2723
        %v2908 = vunpack.c.l.b16 %v2724
        %v2909 = vunpack.c.l.b16 %v2725
        %v2910 = vunpack.c.l.b16 %v2726
        %v2911 = vunpack.c.l.b16 %v2727
        %v2912 = vpack.c.b16 %v2859, %v2858
        %v2913 = vpack.c.b16 %v2861, %v2860
        %v2914 = vpack.c.b16 %v2863, %v2862
        %v2915 = vpack.c.b16 %v2865, %v2864
        %v2916 = vpack.c.b16 %v2867, %v2866
        %v2917 = vpack.c.b16 %v2869, %v2868
        %v2918 = vpack.c.b16 %v2871, %v2870
        %v2919 = vpack.c.b16 %v2873, %v2872
        %v2920 = vpack.c.b16 %v2875, %v2874
        %v2921 = vpack.c.b16 %v2877, %v2876
        %v2922 = vpack.c.b16 %v2879, %v2878
        %v2923 = vpack.c.b16 %v2881, %v2880
        %v2924 = vpack.c.b16 %v2883, %v2882
        %v2925 = vpack.c.b16 %v2885, %v2884
        %v2926 = vpack.c.b16 %v2887, %v2886
        %v2927 = vpack.c.b16 %v2889, %v2888
        %v2928 = vpack.c.b16 %v2891, %v2890
        %v2929 = vpack.c.b16 %v2893, %v2892
        %v2930 = vpack.c.b16 %v2895, %v2894
        %v2931 = vpack.c.b16 %v2897, %v2896
        %v2932 = vpack.c.b16 %v2899, %v2898
        %v2933 = vpack.c.b16 %v2901, %v2900
        %v2934 = vpack.c.b16 %v2903, %v2902
        %v2935 = vpack.c.b16 %v2905, %v2904
        %v2936 = vpack.c.b16 %v2907, %v2906
        %v2937 = vpack.c.b16 %v2909, %v2908
        %v2938 = vpack.c.b16 %v2911, %v2910
        %vm2966 = vcmask 392192
        %v2968 = vsel %vm2966, %v2779, 0
        %v2971 = vsel %vm2966, %v2783, 0
        %v2974 = vsel %vm2966, %v2787, 0
        %v2977 = vsel %vm2966, %v2791, 0
        %2979 = vmatprep.subr.bf16.mxu0 0
        %2980 = vmatpush1.bf16.msra.mxu0 %v2919
        %2981 = vmatprep.subr.bf16.mxu0 0
        %2982 = vmatpush1.bf16.msra.mxu0 %v2918
        %2983 = vmatprep.subr.bf16.mxu0 0
        %2984 = vmatpush1.bf16.msra.mxu0 %v2917
        %2985 = vmatprep.subr.bf16.mxu0 0
        %2986 = vmatpush1.bf16.msra.mxu0 %v2916
        %2987 = vmatprep.subr.bf16.mxu0 0
        %2988 = vmatpush1.bf16.msra.mxu0 %v2915
        %2989 = vmatprep.subr.bf16.mxu0 0
        %2990 = vmatpush1.bf16.msra.mxu0 %v2914
        %2991 = vmatprep.subr.bf16.mxu0 0
        %2992 = vmatpush1.bf16.msra.mxu0 %v2913
        %2993 = vmatprep.subr.bf16.mxu0 0
        %2994 = vmatpush1.bf16.msra.mxu0 %v2912
        %2995 = vmatprep.subr.bf16.mxu0 0
        %2996 = vmatpush2.bf16.msra.mxu0 %v2927
        %2997 = vmatprep.subr.bf16.mxu0 0
        %2998 = vmatpush2.bf16.msra.mxu0 %v2926
        %2999 = vmatprep.subr.bf16.mxu0 0
        %3000 = vmatpush2.bf16.msra.mxu0 %v2925
        %3001 = vmatprep.subr.bf16.mxu0 0
        %3002 = vmatpush2.bf16.msra.mxu0 %v2924
        %3003 = vmatprep.subr.bf16.mxu0 0
        %3004 = vmatpush2.bf16.msra.mxu0 %v2923
        %3005 = vmatprep.subr.bf16.mxu0 0
        %3006 = vmatpush2.bf16.msra.mxu0 %v2922
        %3007 = vmatprep.subr.bf16.mxu0 0
        %3008 = vmatpush2.bf16.msra.mxu0 %v2921
        %3009 = vmatprep.subr.bf16.mxu0 0
        %3010 = vmatpush2.bf16.msra.mxu0 %v2920
        %3011 = vmatprep.mubr.bf16.mxu0 %v2777
        %3012 = vmatmul.mubr.bf16.gmra.mxu0 %v2776
        %v3013 = vpop.f32.mrf.mxu0
        %v3014 = vadd.f32 0.0, %v3013
        %v3015 = vpop.f32.mrf.mxu0
        %v3016 = vpop.f32.mrf.mxu0
        %v3017 = vadd.f32 0.0, %v3016
        %v3018 = vpop.f32.mrf.mxu0
        %3019 = vmatprep.mubr.bf16.mxu0 %v2781
        %3020 = vmatmul.mubr.bf16.gmra.mxu0 %v2780
        %v3021 = vpop.f32.mrf.mxu0
        %v3022 = vadd.f32 0.0, %v3021
        %v3023 = vpop.f32.mrf.mxu0
        %v3024 = vpop.f32.mrf.mxu0
        %v3025 = vadd.f32 0.0, %v3024
        %v3026 = vpop.f32.mrf.mxu0
        %3027 = vmatprep.mubr.bf16.mxu0 %v2785
        %3028 = vmatmul.mubr.bf16.gmra.mxu0 %v2784
        %v3029 = vpop.f32.mrf.mxu0
        %v3030 = vadd.f32 0.0, %v3029
        %v3031 = vpop.f32.mrf.mxu0
        %v3032 = vpop.f32.mrf.mxu0
        %v3033 = vadd.f32 0.0, %v3032
        %v3034 = vpop.f32.mrf.mxu0
        %3035 = vmatprep.mubr.bf16.mxu0 %v2789
        %3036 = vmatmul.mubr.bf16.gmra.mxu0 %v2788
        %v3037 = vpop.f32.mrf.mxu0
        %v3038 = vadd.f32 0.0, %v3037
        %v3039 = vpop.f32.mrf.mxu0
        %v3040 = vpop.f32.mrf.mxu0
        %v3041 = vadd.f32 0.0, %v3040
        %v3042 = vpop.f32.mrf.mxu0
        %3043 = vdwg.mxu0
        %3044 = vmatprep.subr.bf16.mxu0 0
        %3045 = vmatpush1.bf16.msra.mxu0 %v2935
        %3046 = vmatprep.subr.bf16.mxu0 0
        %3047 = vmatpush1.bf16.msra.mxu0 %v2934
        %3048 = vmatprep.subr.bf16.mxu0 0
        %3049 = vmatpush1.bf16.msra.mxu0 %v2933
        %3050 = vmatprep.subr.bf16.mxu0 0
        %3051 = vmatpush1.bf16.msra.mxu0 %v2932
        %3052 = vmatprep.subr.bf16.mxu0 0
        %3053 = vmatpush1.bf16.msra.mxu0 %v2931
        %3054 = vmatprep.subr.bf16.mxu0 0
        %3055 = vmatpush1.bf16.msra.mxu0 %v2930
        %3056 = vmatprep.subr.bf16.mxu0 0
        %3057 = vmatpush1.bf16.msra.mxu0 %v2929
        %3058 = vmatprep.subr.bf16.mxu0 0
        %3059 = vmatpush1.bf16.msra.mxu0 %v2928
        %3060 = vmatprep.subr.bf16.mxu0 0
        %3061 = vmatpush2.bf16.msra.mxu0 0
        %3062 = vmatprep.subr.bf16.mxu0 0
        %3063 = vmatpush2.bf16.msra.mxu0 0
        %3064 = vmatprep.subr.bf16.mxu0 0
        %3065 = vmatpush2.bf16.msra.mxu0 0
        %3066 = vmatprep.subr.bf16.mxu0 0
        %3067 = vmatpush2.bf16.msra.mxu0 0
        %3068 = vmatprep.subr.bf16.mxu0 0
        %3069 = vmatpush2.bf16.msra.mxu0 0
        %3070 = vmatprep.subr.bf16.mxu0 0
        %3071 = vmatpush2.bf16.msra.mxu0 %v2938
        %3072 = vmatprep.subr.bf16.mxu0 0
        %3073 = vmatpush2.bf16.msra.mxu0 %v2937
        %3074 = vmatprep.subr.bf16.mxu0 0
        %3075 = vmatpush2.bf16.msra.mxu0 %v2936
        %3076 = vmatprep.mubr.bf16.mxu0 %v2968
        %3077 = vmatmul.mubr.bf16.gmra.mxu0 %v2778
        %v3078 = vpop.f32.mrf.mxu0
        %v3079 = vadd.f32 %v3014, %v3078
        %v3080 = vpop.f32.mrf.mxu0
        %v3081 = vpop.f32.mrf.mxu0
        %v3082 = vadd.f32 %v3017, %v3081
        %v3083 = vpop.f32.mrf.mxu0
        %3084 = vmatprep.mubr.bf16.mxu0 %v2971
        %3085 = vmatmul.mubr.bf16.gmra.mxu0 %v2782
        %v3086 = vpop.f32.mrf.mxu0
        %v3087 = vadd.f32 %v3022, %v3086
        %v3088 = vpop.f32.mrf.mxu0
        %v3089 = vpop.f32.mrf.mxu0
        %v3090 = vadd.f32 %v3025, %v3089
        %v3091 = vpop.f32.mrf.mxu0
        %3092 = vmatprep.mubr.bf16.mxu0 %v2974
        %3093 = vmatmul.mubr.bf16.gmra.mxu0 %v2786
        %v3094 = vpop.f32.mrf.mxu0
        %v3095 = vadd.f32 %v3030, %v3094
        %v3096 = vpop.f32.mrf.mxu0
        %v3097 = vpop.f32.mrf.mxu0
        %v3098 = vadd.f32 %v3033, %v3097
        %v3099 = vpop.f32.mrf.mxu0
        %3100 = vmatprep.mubr.bf16.mxu0 %v2977
        %3101 = vmatmul.mubr.bf16.gmra.mxu0 %v2790
        %v3102 = vpop.f32.mrf.mxu0
        %v3103 = vadd.f32 %v3038, %v3102
        %v3104 = vpop.f32.mrf.mxu0
        %v3105 = vpop.f32.mrf.mxu0
        %v3106 = vadd.f32 %v3041, %v3105
        %v3107 = vpop.f32.mrf.mxu0
        %3108 = vdwg.mxu0
        %v3109 = vld [vmem:[%s3] sm:$0x1]
        %v3111 = vlaneseq
        %v3112 = vshrl.u32 %v3111, 7
        %v3113 = vsub.s32 0, %v3112
        %v3114 = vrot.slane %v3109, %v3113
        %v3116 = vmul.f32 %v3079, %v3114
        %v3117 = vmul.f32 %v3082, %v3114
        %v3118 = vmul.f32 %v3087, %v3114
        %v3119 = vmul.f32 %v3090, %v3114
        %v3120 = vmul.f32 %v3095, %v3114
        %v3121 = vmul.f32 %v3098, %v3114
        %v3122 = vmul.f32 %v3103, %v3114
        %v3123 = vmul.f32 %v3106, %v3114
        %v3124 = vld [vmem:[%s4] sm:$0x1]
        %v3126 = vlaneseq
        %v3127 = vshrl.u32 %v3126, 7
        %v3128 = vsub.s32 0, %v3127
        %v3129 = vrot.slane %v3124, %v3128
        %v3131 = vadd.f32 %v3116, %v3129
        %v3132 = vadd.f32 %v3117, %v3129
        %v3133 = vadd.f32 %v3118, %v3129
        %v3134 = vadd.f32 %v3119, %v3129
        %v3135 = vadd.f32 %v3120, %v3129
        %v3136 = vadd.f32 %v3121, %v3129
        %v3137 = vadd.f32 %v3122, %v3129
        %v3138 = vadd.f32 %v3123, %v3129
        %v3139 = vmax.f32 %v3131, 0.0
        %v3140 = vmax.f32 %v3132, 0.0
        %v3141 = vmax.f32 %v3133, 0.0
        %v3142 = vmax.f32 %v3134, 0.0
        %v3143 = vmax.f32 %v3135, 0.0
        %v3144 = vmax.f32 %v3136, 0.0
        %v3145 = vmax.f32 %v3137, 0.0
        %v3146 = vmax.f32 %v3138, 0.0
        %v3147 = vpack.c.bf16 %v3140, %v3139
        %v3148 = vpack.c.bf16 %v3142, %v3141
        %v3149 = vpack.c.bf16 %v3144, %v3143
        %v3150 = vpack.c.bf16 %v3146, %v3145
        %v3155 = vunpack.c.l.b16 %v3147
        %v3156 = vunpack.c.h.b16 %v3147
        %v3157 = vunpack.c.l.b16 %v3148
        %v3158 = vunpack.c.h.b16 %v3148
        %v3159 = vunpack.c.l.b16 %v3149
        %v3160 = vunpack.c.h.b16 %v3149
        %v3161 = vunpack.c.l.b16 %v3150
        %v3162 = vunpack.c.h.b16 %v3150
        %v3163 = vpack.c.b16 %v3155, %v3155
        %v3164 = vpack.c.b16 %v3156, %v3156
        %v3165 = vpack.c.b16 %v3157, %v3157
        %v3166 = vpack.c.b16 %v3158, %v3158
        %v3167 = vpack.c.b16 %v3159, %v3159
        %v3168 = vpack.c.b16 %v3160, %v3160
        %v3169 = vpack.c.b16 %v3161, %v3161
        %v3170 = vpack.c.b16 %v3162, %v3162
        %v3172 = vshrl.u32 %v3163, 16
        %v3174 = vrot.slane %v3172, 7
        %v3175 = vshll.u32 %v3163, 16
        %v3177 = vor.u32 %v3174, %v3175
        %v3178 = vrot.slane %v3174, 4
        %v3180 = vshrl.u32 %v3164, 16
        %v3182 = vrot.slane %v3180, 7
        %v3183 = vshll.u32 %v3164, 16
        %v3185 = vor.u32 %v3182, %v3183
        %v3186 = vrot.slane %v3182, 4
        %v3188 = vshrl.u32 %v3165, 16
        %v3190 = vrot.slane %v3188, 7
        %v3191 = vshll.u32 %v3165, 16
        %v3193 = vor.u32 %v3190, %v3191
        %v3194 = vrot.slane %v3190, 4
        %v3196 = vshrl.u32 %v3166, 16
        %v3198 = vrot.slane %v3196, 7
        %v3199 = vshll.u32 %v3166, 16
        %v3201 = vor.u32 %v3198, %v3199
        %v3202 = vrot.slane %v3198, 4
        %v3204 = vshrl.u32 %v3167, 16
        %v3206 = vrot.slane %v3204, 7
        %v3207 = vshll.u32 %v3167, 16
        %v3209 = vor.u32 %v3206, %v3207
        %v3210 = vrot.slane %v3206, 4
        %v3212 = vshrl.u32 %v3168, 16
        %v3214 = vrot.slane %v3212, 7
        %v3215 = vshll.u32 %v3168, 16
        %v3217 = vor.u32 %v3214, %v3215
        %v3218 = vrot.slane %v3214, 4
        %v3220 = vshrl.u32 %v3169, 16
        %v3222 = vrot.slane %v3220, 7
        %v3223 = vshll.u32 %v3169, 16
        %v3225 = vor.u32 %v3222, %v3223
        %v3226 = vrot.slane %v3222, 4
        %v3228 = vshrl.u32 %v3170, 16
        %v3230 = vrot.slane %v3228, 7
        %v3231 = vshll.u32 %v3170, 16
        %v3233 = vor.u32 %v3230, %v3231
        %v3234 = vrot.slane %v3230, 4
        %s3251 = scalar_lea.vmem [#allocation4], 8
        %vm3252 = vcmask 257024
        %vm3253 = vmand %vm3252, %vm365
        %v3254 = vld [vmem:[%s3251] sm:$0xf]
        %v3255 = vsel %vm3253, %v3177, %v3254
        %3256 = vst [vmem:[%s3251] sm:$0xf] %v3255
        %v3257 = vld [vmem:[%s3251 + $0x4] sm:$0x1]
        %v3258 = vsel %vm334, %v3178, %v3257
        %3259 = vst [vmem:[%s3251 + $0x4] sm:$0x1] %v3258
        %v3260 = vld [vmem:[%s3251 + $0x8] sm:$0xf]
        %v3261 = vsel %vm3253, %v3185, %v3260
        %3262 = vst [vmem:[%s3251 + $0x8] sm:$0xf] %v3261
        %v3263 = vld [vmem:[%s3251 + $0xc] sm:$0x1]
        %v3264 = vsel %vm334, %v3186, %v3263
        %3265 = vst [vmem:[%s3251 + $0xc] sm:$0x1] %v3264
        %v3266 = vld [vmem:[%s3251 + $0x10] sm:$0xf]
        %v3267 = vsel %vm3253, %v3193, %v3266
        %3268 = vst [vmem:[%s3251 + $0x10] sm:$0xf] %v3267
        %v3269 = vld [vmem:[%s3251 + $0x14] sm:$0x1]
        %v3270 = vsel %vm334, %v3194, %v3269
        %3271 = vst [vmem:[%s3251 + $0x14] sm:$0x1] %v3270
        %v3272 = vld [vmem:[%s3251 + $0x18] sm:$0xf]
        %v3273 = vsel %vm3253, %v3201, %v3272
        %3274 = vst [vmem:[%s3251 + $0x18] sm:$0xf] %v3273
        %v3275 = vld [vmem:[%s3251 + $0x1c] sm:$0x1]
        %v3276 = vsel %vm334, %v3202, %v3275
        %3277 = vst [vmem:[%s3251 + $0x1c] sm:$0x1] %v3276
        %v3278 = vld [vmem:[%s3251 + $0x20] sm:$0xf]
        %v3279 = vsel %vm3253, %v3209, %v3278
        %3280 = vst [vmem:[%s3251 + $0x20] sm:$0xf] %v3279
        %v3281 = vld [vmem:[%s3251 + $0x24] sm:$0x1]
        %v3282 = vsel %vm334, %v3210, %v3281
        %3283 = vst [vmem:[%s3251 + $0x24] sm:$0x1] %v3282
        %v3284 = vld [vmem:[%s3251 + $0x28] sm:$0xf]
        %v3285 = vsel %vm3253, %v3217, %v3284
        %3286 = vst [vmem:[%s3251 + $0x28] sm:$0xf] %v3285
        %v3287 = vld [vmem:[%s3251 + $0x2c] sm:$0x1]
        %v3288 = vsel %vm334, %v3218, %v3287
        %3289 = vst [vmem:[%s3251 + $0x2c] sm:$0x1] %v3288
        %v3290 = vld [vmem:[%s3251 + $0x30] sm:$0xf]
        %v3291 = vsel %vm3253, %v3225, %v3290
        %3292 = vst [vmem:[%s3251 + $0x30] sm:$0xf] %v3291
        %v3293 = vld [vmem:[%s3251 + $0x34] sm:$0x1]
        %v3294 = vsel %vm334, %v3226, %v3293
        %3295 = vst [vmem:[%s3251 + $0x34] sm:$0x1] %v3294
        %v3296 = vld [vmem:[%s3251 + $0x38] sm:$0xf]
        %v3297 = vsel %vm3253, %v3233, %v3296
        %3298 = vst [vmem:[%s3251 + $0x38] sm:$0xf] %v3297
        %v3299 = vld [vmem:[%s3251 + $0x3c] sm:$0x1]
        %v3300 = vsel %vm334, %v3234, %v3299
        %3301 = vst [vmem:[%s3251 + $0x3c] sm:$0x1] %v3300
        %v3302 = vld [vmem:[#allocation4] sm:$0xf]
        %v3303 = vld [vmem:[#allocation4 + $0x8] sm:$0xf]
        %v3304 = vld [vmem:[#allocation4 + $0x10] sm:$0xf]
        %v3305 = vld [vmem:[#allocation4 + $0x18] sm:$0xf]
        %v3306 = vld [vmem:[#allocation4 + $0x20] sm:$0xf]
        %v3307 = vld [vmem:[#allocation4 + $0x28] sm:$0xf]
        %v3308 = vld [vmem:[#allocation4 + $0x30] sm:$0xf]
        %v3309 = vld [vmem:[#allocation4 + $0x38] sm:$0xf]
        %3310 = vst.msk [vmem:[#allocation6] sm:$0xf] %vm325, %v3302
        %3311 = vst.msk [vmem:[#allocation6 + $0xc] sm:$0xf] %vm325, %v3303
        %3312 = vst.msk [vmem:[#allocation6 + $0x18] sm:$0xf] %vm325, %v3304
        %3313 = vst.msk [vmem:[#allocation6 + $0x24] sm:$0xf] %vm325, %v3305
        %3314 = vst.msk [vmem:[#allocation6 + $0x30] sm:$0xf] %vm325, %v3306
        %3315 = vst.msk [vmem:[#allocation6 + $0x3c] sm:$0xf] %vm325, %v3307
        %3316 = vst.msk [vmem:[#allocation6 + $0x48] sm:$0xf] %vm325, %v3308
        %3317 = vst.msk [vmem:[#allocation6 + $0x54] sm:$0xf] %vm325, %v3309
        %v3318 = vld [vmem:[#allocation4] sm:$0xf]
        %v3319 = vld [vmem:[#allocation4 + $0x4] sm:$0x1]
        %v3320 = vld [vmem:[#allocation4 + $0x8] sm:$0xf]
        %v3321 = vld [vmem:[#allocation4 + $0xc] sm:$0x1]
        %v3322 = vld [vmem:[#allocation4 + $0x10] sm:$0xf]
        %v3323 = vld [vmem:[#allocation4 + $0x14] sm:$0x1]
        %v3324 = vld [vmem:[#allocation4 + $0x18] sm:$0xf]
        %v3325 = vld [vmem:[#allocation4 + $0x1c] sm:$0x1]
        %v3326 = vld [vmem:[#allocation4 + $0x20] sm:$0xf]
        %v3327 = vld [vmem:[#allocation4 + $0x24] sm:$0x1]
        %v3328 = vld [vmem:[#allocation4 + $0x28] sm:$0xf]
        %v3329 = vld [vmem:[#allocation4 + $0x2c] sm:$0x1]
        %v3330 = vld [vmem:[#allocation4 + $0x30] sm:$0xf]
        %v3331 = vld [vmem:[#allocation4 + $0x34] sm:$0x1]
        %v3332 = vld [vmem:[#allocation4 + $0x38] sm:$0xf]
        %v3333 = vld [vmem:[#allocation4 + $0x3c] sm:$0x1]
        %v3335 = vshrl.u32 %v3318, 16
        %v3337 = vrot.slane %v3335, 4
        %v3338 = vshll.u32 %v3318, 16
        %v3340 = vrot.slane %v3338, 5
        %v3341 = vor.u32 %v3337, %v3340
        %v3342 = vrot.slane %v3341, 4
        %v3344 = vshll.u32 %v3319, 16
        %v3346 = vrot.slane %v3344, 5
        %v3347 = vsel %vm995, %v3342, %v3346
        %v3349 = vshrl.u32 %v3320, 16
        %v3351 = vrot.slane %v3349, 4
        %v3352 = vshll.u32 %v3320, 16
        %v3354 = vrot.slane %v3352, 5
        %v3355 = vor.u32 %v3351, %v3354
        %v3356 = vrot.slane %v3355, 4
        %v3358 = vshll.u32 %v3321, 16
        %v3360 = vrot.slane %v3358, 5
        %v3361 = vsel %vm995, %v3356, %v3360
        %v3363 = vshrl.u32 %v3322, 16
        %v3365 = vrot.slane %v3363, 4
        %v3366 = vshll.u32 %v3322, 16
        %v3368 = vrot.slane %v3366, 5
        %v3369 = vor.u32 %v3365, %v3368
        %v3370 = vrot.slane %v3369, 4
        %v3372 = vshll.u32 %v3323, 16
        %v3374 = vrot.slane %v3372, 5
        %v3375 = vsel %vm995, %v3370, %v3374
        %v3377 = vshrl.u32 %v3324, 16
        %v3379 = vrot.slane %v3377, 4
        %v3380 = vshll.u32 %v3324, 16
        %v3382 = vrot.slane %v3380, 5
        %v3383 = vor.u32 %v3379, %v3382
        %v3384 = vrot.slane %v3383, 4
        %v3386 = vshll.u32 %v3325, 16
        %v3388 = vrot.slane %v3386, 5
        %v3389 = vsel %vm995, %v3384, %v3388
        %v3391 = vshrl.u32 %v3326, 16
        %v3393 = vrot.slane %v3391, 4
        %v3394 = vshll.u32 %v3326, 16
        %v3396 = vrot.slane %v3394, 5
        %v3397 = vor.u32 %v3393, %v3396
        %v3398 = vrot.slane %v3397, 4
        %v3400 = vshll.u32 %v3327, 16
        %v3402 = vrot.slane %v3400, 5
        %v3403 = vsel %vm995, %v3398, %v3402
        %v3405 = vshrl.u32 %v3328, 16
        %v3407 = vrot.slane %v3405, 4
        %v3408 = vshll.u32 %v3328, 16
        %v3410 = vrot.slane %v3408, 5
        %v3411 = vor.u32 %v3407, %v3410
        %v3412 = vrot.slane %v3411, 4
        %v3414 = vshll.u32 %v3329, 16
        %v3416 = vrot.slane %v3414, 5
        %v3417 = vsel %vm995, %v3412, %v3416
        %v3419 = vshrl.u32 %v3330, 16
        %v3421 = vrot.slane %v3419, 4
        %v3422 = vshll.u32 %v3330, 16
        %v3424 = vrot.slane %v3422, 5
        %v3425 = vor.u32 %v3421, %v3424
        %v3426 = vrot.slane %v3425, 4
        %v3428 = vshll.u32 %v3331, 16
        %v3430 = vrot.slane %v3428, 5
        %v3431 = vsel %vm995, %v3426, %v3430
        %v3433 = vshrl.u32 %v3332, 16
        %v3435 = vrot.slane %v3433, 4
        %v3436 = vshll.u32 %v3332, 16
        %v3438 = vrot.slane %v3436, 5
        %v3439 = vor.u32 %v3435, %v3438
        %v3440 = vrot.slane %v3439, 4
        %v3442 = vshll.u32 %v3333, 16
        %v3444 = vrot.slane %v3442, 5
        %v3445 = vsel %vm995, %v3440, %v3444
        %3446 = vrot.lane.b32.xlu0 %v3347, 32
        %v3447 = vpop.permute.xlu0 %3446
        %3448 = vrot.lane.b32.xlu0 %v3361, 32
        %v3449 = vpop.permute.xlu0 %3448
        %3450 = vrot.lane.b32.xlu0 %v3375, 32
        %v3451 = vpop.permute.xlu0 %3450
        %3452 = vrot.lane.b32.xlu0 %v3389, 32
        %v3453 = vpop.permute.xlu0 %3452
        %3454 = vrot.lane.b32.xlu0 %v3403, 32
        %v3455 = vpop.permute.xlu0 %3454
        %3456 = vrot.lane.b32.xlu0 %v3417, 32
        %v3457 = vpop.permute.xlu0 %3456
        %3458 = vrot.lane.b32.xlu0 %v3431, 32
        %v3459 = vpop.permute.xlu0 %3458
        %3460 = vrot.lane.b32.xlu0 %v3445, 32
        %v3461 = vpop.permute.xlu0 %3460
        %3470 = vst.msk [vmem:[#allocation6] sm:$0xf] %vm1132, %v3447
        %3471 = vst.msk [vmem:[#allocation6 + $0xc] sm:$0xf] %vm1132, %v3449
        %3472 = vst.msk [vmem:[#allocation6 + $0x18] sm:$0xf] %vm1132, %v3451
        %3473 = vst.msk [vmem:[#allocation6 + $0x24] sm:$0xf] %vm1132, %v3453
        %3474 = vst.msk [vmem:[#allocation6 + $0x30] sm:$0xf] %vm1132, %v3455
        %3475 = vst.msk [vmem:[#allocation6 + $0x3c] sm:$0xf] %vm1132, %v3457
        %3476 = vst.msk [vmem:[#allocation6 + $0x48] sm:$0xf] %vm1132, %v3459
        %3477 = vst.msk [vmem:[#allocation6 + $0x54] sm:$0xf] %vm1132, %v3461
        %v3478 = vld [vmem:[#allocation4] sm:$0xe]
        %v3479 = vld [vmem:[#allocation4 + $0x4] sm:$0x1]
        %v3480 = vld [vmem:[#allocation4 + $0x8] sm:$0xe]
        %v3481 = vld [vmem:[#allocation4 + $0xc] sm:$0x1]
        %v3482 = vld [vmem:[#allocation4 + $0x10] sm:$0xe]
        %v3483 = vld [vmem:[#allocation4 + $0x14] sm:$0x1]
        %v3484 = vld [vmem:[#allocation4 + $0x18] sm:$0xe]
        %v3485 = vld [vmem:[#allocation4 + $0x1c] sm:$0x1]
        %v3486 = vld [vmem:[#allocation4 + $0x20] sm:$0xe]
        %v3487 = vld [vmem:[#allocation4 + $0x24] sm:$0x1]
        %v3488 = vld [vmem:[#allocation4 + $0x28] sm:$0xe]
        %v3489 = vld [vmem:[#allocation4 + $0x2c] sm:$0x1]
        %v3490 = vld [vmem:[#allocation4 + $0x30] sm:$0xe]
        %v3491 = vld [vmem:[#allocation4 + $0x34] sm:$0x1]
        %v3492 = vld [vmem:[#allocation4 + $0x38] sm:$0xe]
        %v3493 = vld [vmem:[#allocation4 + $0x3c] sm:$0x1]
        %v3510 = vrot.slane %v3478, 5
        %v3511 = vrot.slane %v3510, 4
        %v3512 = vrot.slane %v3479, 5
        %v3513 = vsel %vm1336, %v3511, %v3512
        %v3514 = vrot.slane %v3480, 5
        %v3515 = vrot.slane %v3514, 4
        %v3516 = vrot.slane %v3481, 5
        %v3517 = vsel %vm1336, %v3515, %v3516
        %v3518 = vrot.slane %v3482, 5
        %v3519 = vrot.slane %v3518, 4
        %v3520 = vrot.slane %v3483, 5
        %v3521 = vsel %vm1336, %v3519, %v3520
        %v3522 = vrot.slane %v3484, 5
        %v3523 = vrot.slane %v3522, 4
        %v3524 = vrot.slane %v3485, 5
        %v3525 = vsel %vm1336, %v3523, %v3524
        %v3526 = vrot.slane %v3486, 5
        %v3527 = vrot.slane %v3526, 4
        %v3528 = vrot.slane %v3487, 5
        %v3529 = vsel %vm1336, %v3527, %v3528
        %v3530 = vrot.slane %v3488, 5
        %v3531 = vrot.slane %v3530, 4
        %v3532 = vrot.slane %v3489, 5
        %v3533 = vsel %vm1336, %v3531, %v3532
        %v3534 = vrot.slane %v3490, 5
        %v3535 = vrot.slane %v3534, 4
        %v3536 = vrot.slane %v3491, 5
        %v3537 = vsel %vm1336, %v3535, %v3536
        %v3538 = vrot.slane %v3492, 5
        %v3539 = vrot.slane %v3538, 4
        %v3540 = vrot.slane %v3493, 5
        %v3541 = vsel %vm1336, %v3539, %v3540
        %3542 = vrot.lane.b32.xlu0 %v3513, 64
        %v3543 = vpop.permute.xlu0 %3542
        %3544 = vrot.lane.b32.xlu0 %v3517, 64
        %v3545 = vpop.permute.xlu0 %3544
        %3546 = vrot.lane.b32.xlu0 %v3521, 64
        %v3547 = vpop.permute.xlu0 %3546
        %3548 = vrot.lane.b32.xlu0 %v3525, 64
        %v3549 = vpop.permute.xlu0 %3548
        %3550 = vrot.lane.b32.xlu0 %v3529, 64
        %v3551 = vpop.permute.xlu0 %3550
        %3552 = vrot.lane.b32.xlu0 %v3533, 64
        %v3553 = vpop.permute.xlu0 %3552
        %3554 = vrot.lane.b32.xlu0 %v3537, 64
        %v3555 = vpop.permute.xlu0 %3554
        %3556 = vrot.lane.b32.xlu0 %v3541, 64
        %v3557 = vpop.permute.xlu0 %3556
        %3566 = vst.msk [vmem:[#allocation6] sm:$0xf] %vm1393, %v3543
        %3567 = vst.msk [vmem:[#allocation6 + $0xc] sm:$0xf] %vm1393, %v3545
        %3568 = vst.msk [vmem:[#allocation6 + $0x18] sm:$0xf] %vm1393, %v3547
        %3569 = vst.msk [vmem:[#allocation6 + $0x24] sm:$0xf] %vm1393, %v3549
        %3570 = vst.msk [vmem:[#allocation6 + $0x30] sm:$0xf] %vm1393, %v3551
        %3571 = vst.msk [vmem:[#allocation6 + $0x3c] sm:$0xf] %vm1393, %v3553
        %3572 = vst.msk [vmem:[#allocation6 + $0x48] sm:$0xf] %vm1393, %v3555
        %3573 = vst.msk [vmem:[#allocation6 + $0x54] sm:$0xf] %vm1393, %v3557
        %v3574 = vld [vmem:[%s3251] sm:$0xf]
        %v3575 = vld [vmem:[%s3251 + $0x8] sm:$0xf]
        %v3576 = vld [vmem:[%s3251 + $0x10] sm:$0xf]
        %v3577 = vld [vmem:[%s3251 + $0x18] sm:$0xf]
        %v3578 = vld [vmem:[%s3251 + $0x20] sm:$0xf]
        %v3579 = vld [vmem:[%s3251 + $0x28] sm:$0xf]
        %v3580 = vld [vmem:[%s3251 + $0x30] sm:$0xf]
        %v3581 = vld [vmem:[%s3251 + $0x38] sm:$0xf]
        %3590 = vrot.lane.b32.xlu0 %v3574, 96
        %v3591 = vpop.permute.xlu0 %3590
        %3592 = vrot.lane.b32.xlu0 %v3575, 96
        %v3593 = vpop.permute.xlu0 %3592
        %3594 = vrot.lane.b32.xlu0 %v3576, 96
        %v3595 = vpop.permute.xlu0 %3594
        %3596 = vrot.lane.b32.xlu0 %v3577, 96
        %v3597 = vpop.permute.xlu0 %3596
        %3598 = vrot.lane.b32.xlu0 %v3578, 96
        %v3599 = vpop.permute.xlu0 %3598
        %3600 = vrot.lane.b32.xlu0 %v3579, 96
        %v3601 = vpop.permute.xlu0 %3600
        %3602 = vrot.lane.b32.xlu0 %v3580, 96
        %v3603 = vpop.permute.xlu0 %3602
        %3604 = vrot.lane.b32.xlu0 %v3581, 96
        %v3605 = vpop.permute.xlu0 %3604
        %3614 = vst.msk [vmem:[#allocation6] sm:$0xf] %vm1539, %v3591
        %3615 = vst.msk [vmem:[#allocation6 + $0xc] sm:$0xf] %vm1539, %v3593
        %3616 = vst.msk [vmem:[#allocation6 + $0x18] sm:$0xf] %vm1539, %v3595
        %3617 = vst.msk [vmem:[#allocation6 + $0x24] sm:$0xf] %vm1539, %v3597
        %3618 = vst.msk [vmem:[#allocation6 + $0x30] sm:$0xf] %vm1539, %v3599
        %3619 = vst.msk [vmem:[#allocation6 + $0x3c] sm:$0xf] %vm1539, %v3601
        %3620 = vst.msk [vmem:[#allocation6 + $0x48] sm:$0xf] %vm1539, %v3603
        %3621 = vst.msk [vmem:[#allocation6 + $0x54] sm:$0xf] %vm1539, %v3605
        %v3622 = vld [vmem:[%s3251] sm:$0xf]
        %v3623 = vld [vmem:[%s3251 + $0x4] sm:$0x1]
        %v3624 = vld [vmem:[%s3251 + $0x8] sm:$0xf]
        %v3625 = vld [vmem:[%s3251 + $0xc] sm:$0x1]
        %v3626 = vld [vmem:[%s3251 + $0x10] sm:$0xf]
        %v3627 = vld [vmem:[%s3251 + $0x14] sm:$0x1]
        %v3628 = vld [vmem:[%s3251 + $0x18] sm:$0xf]
        %v3629 = vld [vmem:[%s3251 + $0x1c] sm:$0x1]
        %v3630 = vld [vmem:[%s3251 + $0x20] sm:$0xf]
        %v3631 = vld [vmem:[%s3251 + $0x24] sm:$0x1]
        %v3632 = vld [vmem:[%s3251 + $0x28] sm:$0xf]
        %v3633 = vld [vmem:[%s3251 + $0x2c] sm:$0x1]
        %v3634 = vld [vmem:[%s3251 + $0x30] sm:$0xf]
        %v3635 = vld [vmem:[%s3251 + $0x34] sm:$0x1]
        %v3636 = vld [vmem:[%s3251 + $0x38] sm:$0xf]
        %v3637 = vld [vmem:[%s3251 + $0x3c] sm:$0x1]
        %v3639 = vshrl.u32 %v3622, 16
        %v3641 = vrot.slane %v3639, 4
        %v3642 = vshll.u32 %v3622, 16
        %v3644 = vrot.slane %v3642, 5
        %v3645 = vor.u32 %v3641, %v3644
        %v3646 = vrot.slane %v3645, 4
        %v3648 = vshll.u32 %v3623, 16
        %v3650 = vrot.slane %v3648, 5
        %v3651 = vsel %vm995, %v3646, %v3650
        %v3653 = vshrl.u32 %v3624, 16
        %v3655 = vrot.slane %v3653, 4
        %v3656 = vshll.u32 %v3624, 16
        %v3658 = vrot.slane %v3656, 5
        %v3659 = vor.u32 %v3655, %v3658
        %v3660 = vrot.slane %v3659, 4
        %v3662 = vshll.u32 %v3625, 16
        %v3664 = vrot.slane %v3662, 5
        %v3665 = vsel %vm995, %v3660, %v3664
        %v3667 = vshrl.u32 %v3626, 16
        %v3669 = vrot.slane %v3667, 4
        %v3670 = vshll.u32 %v3626, 16
        %v3672 = vrot.slane %v3670, 5
        %v3673 = vor.u32 %v3669, %v3672
        %v3674 = vrot.slane %v3673, 4
        %v3676 = vshll.u32 %v3627, 16
        %v3678 = vrot.slane %v3676, 5
        %v3679 = vsel %vm995, %v3674, %v3678
        %v3681 = vshrl.u32 %v3628, 16
        %v3683 = vrot.slane %v3681, 4
        %v3684 = vshll.u32 %v3628, 16
        %v3686 = vrot.slane %v3684, 5
        %v3687 = vor.u32 %v3683, %v3686
        %v3688 = vrot.slane %v3687, 4
        %v3690 = vshll.u32 %v3629, 16
        %v3692 = vrot.slane %v3690, 5
        %v3693 = vsel %vm995, %v3688, %v3692
        %v3695 = vshrl.u32 %v3630, 16
        %v3697 = vrot.slane %v3695, 4
        %v3698 = vshll.u32 %v3630, 16
        %v3700 = vrot.slane %v3698, 5
        %v3701 = vor.u32 %v3697, %v3700
        %v3702 = vrot.slane %v3701, 4
        %v3704 = vshll.u32 %v3631, 16
        %v3706 = vrot.slane %v3704, 5
        %v3707 = vsel %vm995, %v3702, %v3706
        %v3709 = vshrl.u32 %v3632, 16
        %v3711 = vrot.slane %v3709, 4
        %v3712 = vshll.u32 %v3632, 16
        %v3714 = vrot.slane %v3712, 5
        %v3715 = vor.u32 %v3711, %v3714
        %v3716 = vrot.slane %v3715, 4
        %v3718 = vshll.u32 %v3633, 16
        %v3720 = vrot.slane %v3718, 5
        %v3721 = vsel %vm995, %v3716, %v3720
        %v3723 = vshrl.u32 %v3634, 16
        %v3725 = vrot.slane %v3723, 4
        %v3726 = vshll.u32 %v3634, 16
        %v3728 = vrot.slane %v3726, 5
        %v3729 = vor.u32 %v3725, %v3728
        %v3730 = vrot.slane %v3729, 4
        %v3732 = vshll.u32 %v3635, 16
        %v3734 = vrot.slane %v3732, 5
        %v3735 = vsel %vm995, %v3730, %v3734
        %v3737 = vshrl.u32 %v3636, 16
        %v3739 = vrot.slane %v3737, 4
        %v3740 = vshll.u32 %v3636, 16
        %v3742 = vrot.slane %v3740, 5
        %v3743 = vor.u32 %v3739, %v3742
        %v3744 = vrot.slane %v3743, 4
        %v3746 = vshll.u32 %v3637, 16
        %v3748 = vrot.slane %v3746, 5
        %v3749 = vsel %vm995, %v3744, %v3748
        %3758 = vst.msk [vmem:[#allocation6 + $0x4] sm:$0xf] %vm325, %v3651
        %3759 = vst.msk [vmem:[#allocation6 + $0x10] sm:$0xf] %vm325, %v3665
        %3760 = vst.msk [vmem:[#allocation6 + $0x1c] sm:$0xf] %vm325, %v3679
        %3761 = vst.msk [vmem:[#allocation6 + $0x28] sm:$0xf] %vm325, %v3693
        %3762 = vst.msk [vmem:[#allocation6 + $0x34] sm:$0xf] %vm325, %v3707
        %3763 = vst.msk [vmem:[#allocation6 + $0x40] sm:$0xf] %vm325, %v3721
        %3764 = vst.msk [vmem:[#allocation6 + $0x4c] sm:$0xf] %vm325, %v3735
        %3765 = vst.msk [vmem:[#allocation6 + $0x58] sm:$0xf] %vm325, %v3749
        %v3766 = vld [vmem:[%s3251] sm:$0xe]
        %v3767 = vld [vmem:[%s3251 + $0x4] sm:$0x1]
        %v3768 = vld [vmem:[%s3251 + $0x8] sm:$0xe]
        %v3769 = vld [vmem:[%s3251 + $0xc] sm:$0x1]
        %v3770 = vld [vmem:[%s3251 + $0x10] sm:$0xe]
        %v3771 = vld [vmem:[%s3251 + $0x14] sm:$0x1]
        %v3772 = vld [vmem:[%s3251 + $0x18] sm:$0xe]
        %v3773 = vld [vmem:[%s3251 + $0x1c] sm:$0x1]
        %v3774 = vld [vmem:[%s3251 + $0x20] sm:$0xe]
        %v3775 = vld [vmem:[%s3251 + $0x24] sm:$0x1]
        %v3776 = vld [vmem:[%s3251 + $0x28] sm:$0xe]
        %v3777 = vld [vmem:[%s3251 + $0x2c] sm:$0x1]
        %v3778 = vld [vmem:[%s3251 + $0x30] sm:$0xe]
        %v3779 = vld [vmem:[%s3251 + $0x34] sm:$0x1]
        %v3780 = vld [vmem:[%s3251 + $0x38] sm:$0xe]
        %v3781 = vld [vmem:[%s3251 + $0x3c] sm:$0x1]
        %v3798 = vrot.slane %v3766, 5
        %v3799 = vrot.slane %v3798, 4
        %v3800 = vrot.slane %v3767, 5
        %v3801 = vsel %vm1336, %v3799, %v3800
        %v3802 = vrot.slane %v3768, 5
        %v3803 = vrot.slane %v3802, 4
        %v3804 = vrot.slane %v3769, 5
        %v3805 = vsel %vm1336, %v3803, %v3804
        %v3806 = vrot.slane %v3770, 5
        %v3807 = vrot.slane %v3806, 4
        %v3808 = vrot.slane %v3771, 5
        %v3809 = vsel %vm1336, %v3807, %v3808
        %v3810 = vrot.slane %v3772, 5
        %v3811 = vrot.slane %v3810, 4
        %v3812 = vrot.slane %v3773, 5
        %v3813 = vsel %vm1336, %v3811, %v3812
        %v3814 = vrot.slane %v3774, 5
        %v3815 = vrot.slane %v3814, 4
        %v3816 = vrot.slane %v3775, 5
        %v3817 = vsel %vm1336, %v3815, %v3816
        %v3818 = vrot.slane %v3776, 5
        %v3819 = vrot.slane %v3818, 4
        %v3820 = vrot.slane %v3777, 5
        %v3821 = vsel %vm1336, %v3819, %v3820
        %v3822 = vrot.slane %v3778, 5
        %v3823 = vrot.slane %v3822, 4
        %v3824 = vrot.slane %v3779, 5
        %v3825 = vsel %vm1336, %v3823, %v3824
        %v3826 = vrot.slane %v3780, 5
        %v3827 = vrot.slane %v3826, 4
        %v3828 = vrot.slane %v3781, 5
        %v3829 = vsel %vm1336, %v3827, %v3828
        %3830 = vrot.lane.b32.xlu0 %v3801, 32
        %v3831 = vpop.permute.xlu0 %3830
        %3832 = vrot.lane.b32.xlu0 %v3805, 32
        %v3833 = vpop.permute.xlu0 %3832
        %3834 = vrot.lane.b32.xlu0 %v3809, 32
        %v3835 = vpop.permute.xlu0 %3834
        %3836 = vrot.lane.b32.xlu0 %v3813, 32
        %v3837 = vpop.permute.xlu0 %3836
        %3838 = vrot.lane.b32.xlu0 %v3817, 32
        %v3839 = vpop.permute.xlu0 %3838
        %3840 = vrot.lane.b32.xlu0 %v3821, 32
        %v3841 = vpop.permute.xlu0 %3840
        %3842 = vrot.lane.b32.xlu0 %v3825, 32
        %v3843 = vpop.permute.xlu0 %3842
        %3844 = vrot.lane.b32.xlu0 %v3829, 32
        %v3845 = vpop.permute.xlu0 %3844
        %3854 = vst.msk [vmem:[#allocation6 + $0x4] sm:$0xf] %vm1132, %v3831
        %3855 = vst.msk [vmem:[#allocation6 + $0x10] sm:$0xf] %vm1132, %v3833
        %3856 = vst.msk [vmem:[#allocation6 + $0x1c] sm:$0xf] %vm1132, %v3835
        %3857 = vst.msk [vmem:[#allocation6 + $0x28] sm:$0xf] %vm1132, %v3837
        %3858 = vst.msk [vmem:[#allocation6 + $0x34] sm:$0xf] %vm1132, %v3839
        %3859 = vst.msk [vmem:[#allocation6 + $0x40] sm:$0xf] %vm1132, %v3841
        %3860 = vst.msk [vmem:[#allocation6 + $0x4c] sm:$0xf] %vm1132, %v3843
        %3861 = vst.msk [vmem:[#allocation6 + $0x58] sm:$0xf] %vm1132, %v3845
        %s3862 = scalar_lea.vmem [#allocation4], 16
        %v3863 = vld [vmem:[%s3862] sm:$0xf]
        %v3864 = vld [vmem:[%s3862 + $0x8] sm:$0xf]
        %v3865 = vld [vmem:[%s3862 + $0x10] sm:$0xf]
        %v3866 = vld [vmem:[%s3862 + $0x18] sm:$0xf]
        %v3867 = vld [vmem:[%s3862 + $0x20] sm:$0xf]
        %v3868 = vld [vmem:[%s3862 + $0x28] sm:$0xf]
        %v3869 = vld [vmem:[%s3862 + $0x30] sm:$0xf]
        %v3870 = vld [vmem:[%s3862 + $0x38] sm:$0xf]
        %3879 = vrot.lane.b32.xlu0 %v3863, 64
        %v3880 = vpop.permute.xlu0 %3879
        %3881 = vrot.lane.b32.xlu0 %v3864, 64
        %v3882 = vpop.permute.xlu0 %3881
        %3883 = vrot.lane.b32.xlu0 %v3865, 64
        %v3884 = vpop.permute.xlu0 %3883
        %3885 = vrot.lane.b32.xlu0 %v3866, 64
        %v3886 = vpop.permute.xlu0 %3885
        %3887 = vrot.lane.b32.xlu0 %v3867, 64
        %v3888 = vpop.permute.xlu0 %3887
        %3889 = vrot.lane.b32.xlu0 %v3868, 64
        %v3890 = vpop.permute.xlu0 %3889
        %3891 = vrot.lane.b32.xlu0 %v3869, 64
        %v3892 = vpop.permute.xlu0 %3891
        %3893 = vrot.lane.b32.xlu0 %v3870, 64
        %v3894 = vpop.permute.xlu0 %3893
        %3903 = vst.msk [vmem:[#allocation6 + $0x4] sm:$0xf] %vm1393, %v3880
        %3904 = vst.msk [vmem:[#allocation6 + $0x10] sm:$0xf] %vm1393, %v3882
        %3905 = vst.msk [vmem:[#allocation6 + $0x1c] sm:$0xf] %vm1393, %v3884
        %3906 = vst.msk [vmem:[#allocation6 + $0x28] sm:$0xf] %vm1393, %v3886
        %3907 = vst.msk [vmem:[#allocation6 + $0x34] sm:$0xf] %vm1393, %v3888
        %3908 = vst.msk [vmem:[#allocation6 + $0x40] sm:$0xf] %vm1393, %v3890
        %3909 = vst.msk [vmem:[#allocation6 + $0x4c] sm:$0xf] %vm1393, %v3892
        %3910 = vst.msk [vmem:[#allocation6 + $0x58] sm:$0xf] %vm1393, %v3894
        %v3911 = vld [vmem:[%s3862] sm:$0xf]
        %v3912 = vld [vmem:[%s3862 + $0x4] sm:$0x1]
        %v3913 = vld [vmem:[%s3862 + $0x8] sm:$0xf]
        %v3914 = vld [vmem:[%s3862 + $0xc] sm:$0x1]
        %v3915 = vld [vmem:[%s3862 + $0x10] sm:$0xf]
        %v3916 = vld [vmem:[%s3862 + $0x14] sm:$0x1]
        %v3917 = vld [vmem:[%s3862 + $0x18] sm:$0xf]
        %v3918 = vld [vmem:[%s3862 + $0x1c] sm:$0x1]
        %v3919 = vld [vmem:[%s3862 + $0x20] sm:$0xf]
        %v3920 = vld [vmem:[%s3862 + $0x24] sm:$0x1]
        %v3921 = vld [vmem:[%s3862 + $0x28] sm:$0xf]
        %v3922 = vld [vmem:[%s3862 + $0x2c] sm:$0x1]
        %v3923 = vld [vmem:[%s3862 + $0x30] sm:$0xf]
        %v3924 = vld [vmem:[%s3862 + $0x34] sm:$0x1]
        %v3925 = vld [vmem:[%s3862 + $0x38] sm:$0xf]
        %v3926 = vld [vmem:[%s3862 + $0x3c] sm:$0x1]
        %v3928 = vshrl.u32 %v3911, 16
        %v3930 = vrot.slane %v3928, 4
        %v3931 = vshll.u32 %v3911, 16
        %v3933 = vrot.slane %v3931, 5
        %v3934 = vor.u32 %v3930, %v3933
        %v3935 = vrot.slane %v3934, 4
        %v3937 = vshll.u32 %v3912, 16
        %v3939 = vrot.slane %v3937, 5
        %v3940 = vsel %vm995, %v3935, %v3939
        %v3942 = vshrl.u32 %v3913, 16
        %v3944 = vrot.slane %v3942, 4
        %v3945 = vshll.u32 %v3913, 16
        %v3947 = vrot.slane %v3945, 5
        %v3948 = vor.u32 %v3944, %v3947
        %v3949 = vrot.slane %v3948, 4
        %v3951 = vshll.u32 %v3914, 16
        %v3953 = vrot.slane %v3951, 5
        %v3954 = vsel %vm995, %v3949, %v3953
        %v3956 = vshrl.u32 %v3915, 16
        %v3958 = vrot.slane %v3956, 4
        %v3959 = vshll.u32 %v3915, 16
        %v3961 = vrot.slane %v3959, 5
        %v3962 = vor.u32 %v3958, %v3961
        %v3963 = vrot.slane %v3962, 4
        %v3965 = vshll.u32 %v3916, 16
        %v3967 = vrot.slane %v3965, 5
        %v3968 = vsel %vm995, %v3963, %v3967
        %v3970 = vshrl.u32 %v3917, 16
        %v3972 = vrot.slane %v3970, 4
        %v3973 = vshll.u32 %v3917, 16
        %v3975 = vrot.slane %v3973, 5
        %v3976 = vor.u32 %v3972, %v3975
        %v3977 = vrot.slane %v3976, 4
        %v3979 = vshll.u32 %v3918, 16
        %v3981 = vrot.slane %v3979, 5
        %v3982 = vsel %vm995, %v3977, %v3981
        %v3984 = vshrl.u32 %v3919, 16
        %v3986 = vrot.slane %v3984, 4
        %v3987 = vshll.u32 %v3919, 16
        %v3989 = vrot.slane %v3987, 5
        %v3990 = vor.u32 %v3986, %v3989
        %v3991 = vrot.slane %v3990, 4
        %v3993 = vshll.u32 %v3920, 16
        %v3995 = vrot.slane %v3993, 5
        %v3996 = vsel %vm995, %v3991, %v3995
        %v3998 = vshrl.u32 %v3921, 16
        %v4000 = vrot.slane %v3998, 4
        %v4001 = vshll.u32 %v3921, 16
        %v4003 = vrot.slane %v4001, 5
        %v4004 = vor.u32 %v4000, %v4003
        %v4005 = vrot.slane %v4004, 4
        %v4007 = vshll.u32 %v3922, 16
        %v4009 = vrot.slane %v4007, 5
        %v4010 = vsel %vm995, %v4005, %v4009
        %v4012 = vshrl.u32 %v3923, 16
        %v4014 = vrot.slane %v4012, 4
        %v4015 = vshll.u32 %v3923, 16
        %v4017 = vrot.slane %v4015, 5
        %v4018 = vor.u32 %v4014, %v4017
        %v4019 = vrot.slane %v4018, 4
        %v4021 = vshll.u32 %v3924, 16
        %v4023 = vrot.slane %v4021, 5
        %v4024 = vsel %vm995, %v4019, %v4023
        %v4026 = vshrl.u32 %v3925, 16
        %v4028 = vrot.slane %v4026, 4
        %v4029 = vshll.u32 %v3925, 16
        %v4031 = vrot.slane %v4029, 5
        %v4032 = vor.u32 %v4028, %v4031
        %v4033 = vrot.slane %v4032, 4
        %v4035 = vshll.u32 %v3926, 16
        %v4037 = vrot.slane %v4035, 5
        %v4038 = vsel %vm995, %v4033, %v4037
        %4039 = vrot.lane.b32.xlu0 %v3940, 96
        %v4040 = vpop.permute.xlu0 %4039
        %4041 = vrot.lane.b32.xlu0 %v3954, 96
        %v4042 = vpop.permute.xlu0 %4041
        %4043 = vrot.lane.b32.xlu0 %v3968, 96
        %v4044 = vpop.permute.xlu0 %4043
        %4045 = vrot.lane.b32.xlu0 %v3982, 96
        %v4046 = vpop.permute.xlu0 %4045
        %4047 = vrot.lane.b32.xlu0 %v3996, 96
        %v4048 = vpop.permute.xlu0 %4047
        %4049 = vrot.lane.b32.xlu0 %v4010, 96
        %v4050 = vpop.permute.xlu0 %4049
        %4051 = vrot.lane.b32.xlu0 %v4024, 96
        %v4052 = vpop.permute.xlu0 %4051
        %4053 = vrot.lane.b32.xlu0 %v4038, 96
        %v4054 = vpop.permute.xlu0 %4053
        %4063 = vst.msk [vmem:[#allocation6 + $0x4] sm:$0xf] %vm1539, %v4040
        %4064 = vst.msk [vmem:[#allocation6 + $0x10] sm:$0xf] %vm1539, %v4042
        %4065 = vst.msk [vmem:[#allocation6 + $0x1c] sm:$0xf] %vm1539, %v4044
        %4066 = vst.msk [vmem:[#allocation6 + $0x28] sm:$0xf] %vm1539, %v4046
        %4067 = vst.msk [vmem:[#allocation6 + $0x34] sm:$0xf] %vm1539, %v4048
        %4068 = vst.msk [vmem:[#allocation6 + $0x40] sm:$0xf] %vm1539, %v4050
        %4069 = vst.msk [vmem:[#allocation6 + $0x4c] sm:$0xf] %vm1539, %v4052
        %4070 = vst.msk [vmem:[#allocation6 + $0x58] sm:$0xf] %vm1539, %v4054
        %v4071 = vld [vmem:[%s3862] sm:$0xe]
        %v4072 = vld [vmem:[%s3862 + $0x4] sm:$0x1]
        %v4073 = vld [vmem:[%s3862 + $0x8] sm:$0xe]
        %v4074 = vld [vmem:[%s3862 + $0xc] sm:$0x1]
        %v4075 = vld [vmem:[%s3862 + $0x10] sm:$0xe]
        %v4076 = vld [vmem:[%s3862 + $0x14] sm:$0x1]
        %v4077 = vld [vmem:[%s3862 + $0x18] sm:$0xe]
        %v4078 = vld [vmem:[%s3862 + $0x1c] sm:$0x1]
        %v4079 = vld [vmem:[%s3862 + $0x20] sm:$0xe]
        %v4080 = vld [vmem:[%s3862 + $0x24] sm:$0x1]
        %v4081 = vld [vmem:[%s3862 + $0x28] sm:$0xe]
        %v4082 = vld [vmem:[%s3862 + $0x2c] sm:$0x1]
        %v4083 = vld [vmem:[%s3862 + $0x30] sm:$0xe]
        %v4084 = vld [vmem:[%s3862 + $0x34] sm:$0x1]
        %v4085 = vld [vmem:[%s3862 + $0x38] sm:$0xe]
        %v4086 = vld [vmem:[%s3862 + $0x3c] sm:$0x1]
        %v4103 = vrot.slane %v4071, 5
        %v4104 = vrot.slane %v4103, 4
        %v4105 = vrot.slane %v4072, 5
        %v4106 = vsel %vm1336, %v4104, %v4105
        %v4107 = vrot.slane %v4073, 5
        %v4108 = vrot.slane %v4107, 4
        %v4109 = vrot.slane %v4074, 5
        %v4110 = vsel %vm1336, %v4108, %v4109
        %v4111 = vrot.slane %v4075, 5
        %v4112 = vrot.slane %v4111, 4
        %v4113 = vrot.slane %v4076, 5
        %v4114 = vsel %vm1336, %v4112, %v4113
        %v4115 = vrot.slane %v4077, 5
        %v4116 = vrot.slane %v4115, 4
        %v4117 = vrot.slane %v4078, 5
        %v4118 = vsel %vm1336, %v4116, %v4117
        %v4119 = vrot.slane %v4079, 5
        %v4120 = vrot.slane %v4119, 4
        %v4121 = vrot.slane %v4080, 5
        %v4122 = vsel %vm1336, %v4120, %v4121
        %v4123 = vrot.slane %v4081, 5
        %v4124 = vrot.slane %v4123, 4
        %v4125 = vrot.slane %v4082, 5
        %v4126 = vsel %vm1336, %v4124, %v4125
        %v4127 = vrot.slane %v4083, 5
        %v4128 = vrot.slane %v4127, 4
        %v4129 = vrot.slane %v4084, 5
        %v4130 = vsel %vm1336, %v4128, %v4129
        %v4131 = vrot.slane %v4085, 5
        %v4132 = vrot.slane %v4131, 4
        %v4133 = vrot.slane %v4086, 5
        %v4134 = vsel %vm1336, %v4132, %v4133
        %4143 = vst.msk [vmem:[#allocation6 + $0x8] sm:$0xf] %vm325, %v4106
        %4144 = vst.msk [vmem:[#allocation6 + $0x14] sm:$0xf] %vm325, %v4110
        %4145 = vst.msk [vmem:[#allocation6 + $0x20] sm:$0xf] %vm325, %v4114
        %4146 = vst.msk [vmem:[#allocation6 + $0x2c] sm:$0xf] %vm325, %v4118
        %4147 = vst.msk [vmem:[#allocation6 + $0x38] sm:$0xf] %vm325, %v4122
        %4148 = vst.msk [vmem:[#allocation6 + $0x44] sm:$0xf] %vm325, %v4126
        %4149 = vst.msk [vmem:[#allocation6 + $0x50] sm:$0xf] %vm325, %v4130
        %4150 = vst.msk [vmem:[#allocation6 + $0x5c] sm:$0xf] %vm325, %v4134
        %v4151 = vld [vmem:[#allocation6] sm:$0xff]
        %v4152 = vld [vmem:[#allocation6 + $0x8] sm:$0xf]
        %v4153 = vld [vmem:[#allocation6 + $0xc] sm:$0xff]
        %v4154 = vld [vmem:[#allocation6 + $0x14] sm:$0xf]
        %v4155 = vld [vmem:[#allocation6 + $0x18] sm:$0xff]
        %v4156 = vld [vmem:[#allocation6 + $0x20] sm:$0xf]
        %v4157 = vld [vmem:[#allocation6 + $0x24] sm:$0xff]
        %v4158 = vld [vmem:[#allocation6 + $0x2c] sm:$0xf]
        %v4159 = vld [vmem:[#allocation6 + $0x30] sm:$0xff]
        %v4160 = vld [vmem:[#allocation6 + $0x38] sm:$0xf]
        %v4161 = vld [vmem:[#allocation6 + $0x3c] sm:$0xff]
        %v4162 = vld [vmem:[#allocation6 + $0x44] sm:$0xf]
        %v4163 = vld [vmem:[#allocation6 + $0x48] sm:$0xff]
        %v4164 = vld [vmem:[#allocation6 + $0x50] sm:$0xf]
        %v4165 = vld [vmem:[#allocation6 + $0x54] sm:$0xff]
        %v4166 = vld [vmem:[#allocation6 + $0x5c] sm:$0xf]
        %v4167 = vld [vmem:[%s5] sm:$0xf]
        %v4168 = vld [vmem:[%s5 + $0x4] sm:$0xf]
        %v4169 = vld [vmem:[%s5 + $0x8] sm:$0xf]
        %v4170 = vld [vmem:[%s5 + $0xc] sm:$0xf]
        %v4171 = vld [vmem:[%s5 + $0x10] sm:$0xf]
        %v4172 = vld [vmem:[%s5 + $0x14] sm:$0xf]
        %v4173 = vld [vmem:[%s5 + $0x18] sm:$0xf]
        %v4174 = vld [vmem:[%s5 + $0x1c] sm:$0xf]
        %v4175 = vld [vmem:[%s5 + $0x20] sm:$0xf]
        %v4176 = vld [vmem:[%s5 + $0x24] sm:$0xf]
        %v4177 = vld [vmem:[%s5 + $0x28] sm:$0xf]
        %v4178 = vld [vmem:[%s5 + $0x2c] sm:$0xf]
        %v4179 = vld [vmem:[%s5 + $0x30] sm:$0xf]
        %v4180 = vld [vmem:[%s5 + $0x34] sm:$0xf]
        %v4181 = vld [vmem:[%s5 + $0x38] sm:$0xf]
        %v4182 = vld [vmem:[%s5 + $0x3c] sm:$0xf]
        %v4183 = vld [vmem:[%s5 + $0x40] sm:$0xf]
        %v4184 = vld [vmem:[%s5 + $0x44] sm:$0xf]
        %v4185 = vld [vmem:[%s5 + $0x48] sm:$0xf]
        %v4186 = vld [vmem:[%s5 + $0x4c] sm:$0xf]
        %v4187 = vld [vmem:[%s5 + $0x50] sm:$0xf]
        %v4188 = vld [vmem:[%s5 + $0x54] sm:$0xf]
        %v4189 = vld [vmem:[%s5 + $0x58] sm:$0xf]
        %v4190 = vld [vmem:[%s5 + $0x5c] sm:$0xf]
        %v4191 = vld [vmem:[%s5 + $0x60] sm:$0xf]
        %v4192 = vld [vmem:[%s5 + $0x64] sm:$0xf]
        %v4193 = vld [vmem:[%s5 + $0x68] sm:$0xf]
        %v4194 = vld [vmem:[%s5 + $0x6c] sm:$0xf]
        %v4195 = vld [vmem:[%s5 + $0x70] sm:$0xf]
        %v4196 = vld [vmem:[%s5 + $0x74] sm:$0xf]
        %v4197 = vld [vmem:[%s5 + $0x78] sm:$0xf]
        %v4198 = vld [vmem:[%s5 + $0x7c] sm:$0xf]
        %v4199 = vld [vmem:[%s5 + $0x80] sm:$0xf]
        %v4200 = vld [vmem:[%s5 + $0x84] sm:$0xf]
        %v4201 = vld [vmem:[%s5 + $0x88] sm:$0xf]
        %v4202 = vld [vmem:[%s5 + $0x8c] sm:$0xf]
        %v4219 = vunpack.c.l.b16 %v4151
        %v4220 = vunpack.c.h.b16 %v4151
        %v4221 = vunpack.c.l.b16 %v4152
        %v4222 = vunpack.c.l.b16 %v4153
        %v4223 = vunpack.c.h.b16 %v4153
        %v4224 = vunpack.c.l.b16 %v4154
        %v4225 = vunpack.c.l.b16 %v4155
        %v4226 = vunpack.c.h.b16 %v4155
        %v4227 = vunpack.c.l.b16 %v4156
        %v4228 = vunpack.c.l.b16 %v4157
        %v4229 = vunpack.c.h.b16 %v4157
        %v4230 = vunpack.c.l.b16 %v4158
        %v4231 = vunpack.c.l.b16 %v4159
        %v4232 = vunpack.c.h.b16 %v4159
        %v4233 = vunpack.c.l.b16 %v4160
        %v4234 = vunpack.c.l.b16 %v4161
        %v4235 = vunpack.c.h.b16 %v4161
        %v4236 = vunpack.c.l.b16 %v4162
        %v4237 = vunpack.c.l.b16 %v4163
        %v4238 = vunpack.c.h.b16 %v4163
        %v4239 = vunpack.c.l.b16 %v4164
        %v4240 = vunpack.c.l.b16 %v4165
        %v4241 = vunpack.c.h.b16 %v4165
        %v4242 = vunpack.c.l.b16 %v4166
        %v4243 = vpack.c.b16 %v4222, %v4219
        %v4244 = vpack.c.b16 %v4223, %v4220
        %v4245 = vpack.c.b16 %v4224, %v4221
        %v4246 = vpack.c.b16 %v4228, %v4225
        %v4247 = vpack.c.b16 %v4229, %v4226
        %v4248 = vpack.c.b16 %v4230, %v4227
        %v4249 = vpack.c.b16 %v4234, %v4231
        %v4250 = vpack.c.b16 %v4235, %v4232
        %v4251 = vpack.c.b16 %v4236, %v4233
        %v4252 = vpack.c.b16 %v4240, %v4237
        %v4253 = vpack.c.b16 %v4241, %v4238
        %v4254 = vpack.c.b16 %v4242, %v4239
        %v4299 = vunpack.c.l.b16 %v4167
        %v4300 = vunpack.c.l.b16 %v4168
        %v4301 = vunpack.c.l.b16 %v4169
        %v4302 = vunpack.c.l.b16 %v4170
        %v4303 = vunpack.c.l.b16 %v4171
        %v4304 = vunpack.c.l.b16 %v4172
        %v4305 = vunpack.c.l.b16 %v4173
        %v4306 = vunpack.c.l.b16 %v4174
        %v4307 = vunpack.c.l.b16 %v4175
        %v4308 = vunpack.c.l.b16 %v4176
        %v4309 = vunpack.c.l.b16 %v4177
        %v4310 = vunpack.c.l.b16 %v4178
        %v4311 = vunpack.c.l.b16 %v4179
        %v4312 = vunpack.c.l.b16 %v4180
        %v4313 = vunpack.c.l.b16 %v4181
        %v4314 = vunpack.c.l.b16 %v4182
        %v4315 = vunpack.c.l.b16 %v4183
        %v4316 = vunpack.c.l.b16 %v4184
        %v4317 = vunpack.c.l.b16 %v4185
        %v4318 = vunpack.c.l.b16 %v4186
        %v4319 = vunpack.c.l.b16 %v4187
        %v4320 = vunpack.c.l.b16 %v4188
        %v4321 = vunpack.c.l.b16 %v4189
        %v4322 = vunpack.c.l.b16 %v4190
        %v4323 = vunpack.c.l.b16 %v4191
        %v4324 = vunpack.c.l.b16 %v4192
        %v4325 = vunpack.c.l.b16 %v4193
        %v4326 = vunpack.c.l.b16 %v4194
        %v4327 = vunpack.c.l.b16 %v4195
        %v4328 = vunpack.c.l.b16 %v4196
        %v4329 = vunpack.c.l.b16 %v4197
        %v4330 = vunpack.c.l.b16 %v4198
        %v4331 = vunpack.c.l.b16 %v4199
        %v4332 = vunpack.c.l.b16 %v4200
        %v4333 = vunpack.c.l.b16 %v4201
        %v4334 = vunpack.c.l.b16 %v4202
        %v4335 = vpack.c.b16 %v4300, %v4299
        %v4336 = vpack.c.b16 %v4302, %v4301
        %v4337 = vpack.c.b16 %v4304, %v4303
        %v4338 = vpack.c.b16 %v4306, %v4305
        %v4339 = vpack.c.b16 %v4308, %v4307
        %v4340 = vpack.c.b16 %v4310, %v4309
        %v4341 = vpack.c.b16 %v4312, %v4311
        %v4342 = vpack.c.b16 %v4314, %v4313
        %v4343 = vpack.c.b16 %v4316, %v4315
        %v4344 = vpack.c.b16 %v4318, %v4317
        %v4345 = vpack.c.b16 %v4320, %v4319
        %v4346 = vpack.c.b16 %v4322, %v4321
        %v4347 = vpack.c.b16 %v4324, %v4323
        %v4348 = vpack.c.b16 %v4326, %v4325
        %v4349 = vpack.c.b16 %v4328, %v4327
        %v4350 = vpack.c.b16 %v4330, %v4329
        %v4351 = vpack.c.b16 %v4332, %v4331
        %v4352 = vpack.c.b16 %v4334, %v4333
        %vm4371 = vcmask 261120
        %v4373 = vsel %vm4371, %v4245, 0
        %v4376 = vsel %vm4371, %v4248, 0
        %v4379 = vsel %vm4371, %v4251, 0
        %v4382 = vsel %vm4371, %v4254, 0
        %4384 = vmatprep.subr.bf16.mxu0 0
        %4385 = vmatpush1.bf16.msra.mxu0 %v4342
        %4386 = vmatprep.subr.bf16.mxu0 0
        %4387 = vmatpush1.bf16.msra.mxu0 %v4341
        %4388 = vmatprep.subr.bf16.mxu0 0
        %4389 = vmatpush1.bf16.msra.mxu0 %v4340
        %4390 = vmatprep.subr.bf16.mxu0 0
        %4391 = vmatpush1.bf16.msra.mxu0 %v4339
        %4392 = vmatprep.subr.bf16.mxu0 0
        %4393 = vmatpush1.bf16.msra.mxu0 %v4338
        %4394 = vmatprep.subr.bf16.mxu0 0
        %4395 = vmatpush1.bf16.msra.mxu0 %v4337
        %4396 = vmatprep.subr.bf16.mxu0 0
        %4397 = vmatpush1.bf16.msra.mxu0 %v4336
        %4398 = vmatprep.subr.bf16.mxu0 0
        %4399 = vmatpush1.bf16.msra.mxu0 %v4335
        %4400 = vmatprep.subr.bf16.mxu0 0
        %4401 = vmatpush2.bf16.msra.mxu0 %v4350
        %4402 = vmatprep.subr.bf16.mxu0 0
        %4403 = vmatpush2.bf16.msra.mxu0 %v4349
        %4404 = vmatprep.subr.bf16.mxu0 0
        %4405 = vmatpush2.bf16.msra.mxu0 %v4348
        %4406 = vmatprep.subr.bf16.mxu0 0
        %4407 = vmatpush2.bf16.msra.mxu0 %v4347
        %4408 = vmatprep.subr.bf16.mxu0 0
        %4409 = vmatpush2.bf16.msra.mxu0 %v4346
        %4410 = vmatprep.subr.bf16.mxu0 0
        %4411 = vmatpush2.bf16.msra.mxu0 %v4345
        %4412 = vmatprep.subr.bf16.mxu0 0
        %4413 = vmatpush2.bf16.msra.mxu0 %v4344
        %4414 = vmatprep.subr.bf16.mxu0 0
        %4415 = vmatpush2.bf16.msra.mxu0 %v4343
        %4416 = vmatprep.mubr.bf16.mxu0 %v4244
        %4417 = vmatmul.mubr.bf16.gmra.mxu0 %v4243
        %v4418 = vpop.f32.mrf.mxu0
        %v4419 = vadd.f32 0.0, %v4418
        %v4420 = vpop.f32.mrf.mxu0
        %v4421 = vpop.f32.mrf.mxu0
        %v4422 = vadd.f32 0.0, %v4421
        %v4423 = vpop.f32.mrf.mxu0
        %4424 = vmatprep.mubr.bf16.mxu0 %v4247
        %4425 = vmatmul.mubr.bf16.gmra.mxu0 %v4246
        %v4426 = vpop.f32.mrf.mxu0
        %v4427 = vadd.f32 0.0, %v4426
        %v4428 = vpop.f32.mrf.mxu0
        %v4429 = vpop.f32.mrf.mxu0
        %v4430 = vadd.f32 0.0, %v4429
        %v4431 = vpop.f32.mrf.mxu0
        %4432 = vmatprep.mubr.bf16.mxu0 %v4250
        %4433 = vmatmul.mubr.bf16.gmra.mxu0 %v4249
        %v4434 = vpop.f32.mrf.mxu0
        %v4435 = vadd.f32 0.0, %v4434
        %v4436 = vpop.f32.mrf.mxu0
        %v4437 = vpop.f32.mrf.mxu0
        %v4438 = vadd.f32 0.0, %v4437
        %v4439 = vpop.f32.mrf.mxu0
        %4440 = vmatprep.mubr.bf16.mxu0 %v4253
        %4441 = vmatmul.mubr.bf16.gmra.mxu0 %v4252
        %v4442 = vpop.f32.mrf.mxu0
        %v4443 = vadd.f32 0.0, %v4442
        %v4444 = vpop.f32.mrf.mxu0
        %v4445 = vpop.f32.mrf.mxu0
        %v4446 = vadd.f32 0.0, %v4445
        %v4447 = vpop.f32.mrf.mxu0
        %4448 = vdwg.mxu0
        %4449 = vmatprep.subr.bf16.mxu0 0
        %4450 = vmatpush1.bf16.msra.mxu0 0
        %4451 = vmatprep.subr.bf16.mxu0 0
        %4452 = vmatpush1.bf16.msra.mxu0 0
        %4453 = vmatprep.subr.bf16.mxu0 0
        %4454 = vmatpush1.bf16.msra.mxu0 0
        %4455 = vmatprep.subr.bf16.mxu0 0
        %4456 = vmatpush1.bf16.msra.mxu0 0
        %4457 = vmatprep.subr.bf16.mxu0 0
        %4458 = vmatpush1.bf16.msra.mxu0 0
        %4459 = vmatprep.subr.bf16.mxu0 0
        %4460 = vmatpush1.bf16.msra.mxu0 0
        %4461 = vmatprep.subr.bf16.mxu0 0
        %4462 = vmatpush1.bf16.msra.mxu0 %v4352
        %4463 = vmatprep.subr.bf16.mxu0 0
        %4464 = vmatpush1.bf16.msra.mxu0 %v4351
        %4465 = vmatprep.subr.bf16.mxu0 0
        %4466 = vmatpush2.bf16.msra.mxu0 0
        %4467 = vmatprep.subr.bf16.mxu0 0
        %4468 = vmatpush2.bf16.msra.mxu0 0
        %4469 = vmatprep.subr.bf16.mxu0 0
        %4470 = vmatpush2.bf16.msra.mxu0 0
        %4471 = vmatprep.subr.bf16.mxu0 0
        %4472 = vmatpush2.bf16.msra.mxu0 0
        %4473 = vmatprep.subr.bf16.mxu0 0
        %4474 = vmatpush2.bf16.msra.mxu0 0
        %4475 = vmatprep.subr.bf16.mxu0 0
        %4476 = vmatpush2.bf16.msra.mxu0 0
        %4477 = vmatprep.subr.bf16.mxu0 0
        %4478 = vmatpush2.bf16.msra.mxu0 0
        %4479 = vmatprep.subr.bf16.mxu0 0
        %4480 = vmatpush2.bf16.msra.mxu0 0
        %4481 = vmatprep.mubr.bf16.mxu0 0
        %4482 = vmatmul.mubr.bf16.gmra.mxu0 %v4373
        %v4483 = vpop.f32.mrf.mxu0
        %v4484 = vadd.f32 %v4419, %v4483
        %v4485 = vpop.f32.mrf.mxu0
        %v4486 = vpop.f32.mrf.mxu0
        %v4487 = vadd.f32 %v4422, %v4486
        %v4488 = vpop.f32.mrf.mxu0
        %4489 = vmatprep.mubr.bf16.mxu0 0
        %4490 = vmatmul.mubr.bf16.gmra.mxu0 %v4376
        %v4491 = vpop.f32.mrf.mxu0
        %v4492 = vadd.f32 %v4427, %v4491
        %v4493 = vpop.f32.mrf.mxu0
        %v4494 = vpop.f32.mrf.mxu0
        %v4495 = vadd.f32 %v4430, %v4494
        %v4496 = vpop.f32.mrf.mxu0
        %4497 = vmatprep.mubr.bf16.mxu0 0
        %4498 = vmatmul.mubr.bf16.gmra.mxu0 %v4379
        %v4499 = vpop.f32.mrf.mxu0
        %v4500 = vadd.f32 %v4435, %v4499
        %v4501 = vpop.f32.mrf.mxu0
        %v4502 = vpop.f32.mrf.mxu0
        %v4503 = vadd.f32 %v4438, %v4502
        %v4504 = vpop.f32.mrf.mxu0
        %4505 = vmatprep.mubr.bf16.mxu0 0
        %4506 = vmatmul.mubr.bf16.gmra.mxu0 %v4382
        %v4507 = vpop.f32.mrf.mxu0
        %v4508 = vadd.f32 %v4443, %v4507
        %v4509 = vpop.f32.mrf.mxu0
        %v4510 = vpop.f32.mrf.mxu0
        %v4511 = vadd.f32 %v4446, %v4510
        %v4512 = vpop.f32.mrf.mxu0
        %4513 = vdwg.mxu0
        %v4514 = vld [vmem:[%s6] sm:$0x1]
        %v4516 = vlaneseq
        %v4517 = vshrl.u32 %v4516, 7
        %v4518 = vsub.s32 0, %v4517
        %v4519 = vrot.slane %v4514, %v4518
        %v4521 = vmul.f32 %v4484, %v4519
        %v4522 = vmul.f32 %v4487, %v4519
        %v4523 = vmul.f32 %v4492, %v4519
        %v4524 = vmul.f32 %v4495, %v4519
        %v4525 = vmul.f32 %v4500, %v4519
        %v4526 = vmul.f32 %v4503, %v4519
        %v4527 = vmul.f32 %v4508, %v4519
        %v4528 = vmul.f32 %v4511, %v4519
        %v4529 = vld [vmem:[%s7] sm:$0x1]
        %v4531 = vlaneseq
        %v4532 = vshrl.u32 %v4531, 7
        %v4533 = vsub.s32 0, %v4532
        %v4534 = vrot.slane %v4529, %v4533
        %v4536 = vadd.f32 %v4521, %v4534
        %v4537 = vadd.f32 %v4522, %v4534
        %v4538 = vadd.f32 %v4523, %v4534
        %v4539 = vadd.f32 %v4524, %v4534
        %v4540 = vadd.f32 %v4525, %v4534
        %v4541 = vadd.f32 %v4526, %v4534
        %v4542 = vadd.f32 %v4527, %v4534
        %v4543 = vadd.f32 %v4528, %v4534
        %v4544 = vmax.f32 %v4536, 0.0
        %v4545 = vmax.f32 %v4537, 0.0
        %v4546 = vmax.f32 %v4538, 0.0
        %v4547 = vmax.f32 %v4539, 0.0
        %v4548 = vmax.f32 %v4540, 0.0
        %v4549 = vmax.f32 %v4541, 0.0
        %v4550 = vmax.f32 %v4542, 0.0
        %v4551 = vmax.f32 %v4543, 0.0
        %v4552 = vpack.c.bf16 %v4545, %v4544
        %v4553 = vpack.c.bf16 %v4547, %v4546
        %v4554 = vpack.c.bf16 %v4549, %v4548
        %v4555 = vpack.c.bf16 %v4551, %v4550
        %v4560 = vunpack.c.l.b16 %v4552
        %v4561 = vunpack.c.h.b16 %v4552
        %v4562 = vunpack.c.l.b16 %v4553
        %v4563 = vunpack.c.h.b16 %v4553
        %v4564 = vunpack.c.l.b16 %v4554
        %v4565 = vunpack.c.h.b16 %v4554
        %v4566 = vunpack.c.l.b16 %v4555
        %v4567 = vunpack.c.h.b16 %v4555
        %v4568 = vpack.c.b16 %v4560, %v4560
        %v4569 = vpack.c.b16 %v4561, %v4561
        %v4570 = vpack.c.b16 %v4562, %v4562
        %v4571 = vpack.c.b16 %v4563, %v4563
        %v4572 = vpack.c.b16 %v4564, %v4564
        %v4573 = vpack.c.b16 %v4565, %v4565
        %v4574 = vpack.c.b16 %v4566, %v4566
        %v4575 = vpack.c.b16 %v4567, %v4567
        %4584 = vst [vmem:[%s313] sm:$0xf] %v4568
        %4585 = vst [vmem:[%s313 + $0x4] sm:$0xf] %v4569
        %4586 = vst [vmem:[%s313 + $0x8] sm:$0xf] %v4570
        %4587 = vst [vmem:[%s313 + $0xc] sm:$0xf] %v4571
        %4588 = vst [vmem:[%s313 + $0x10] sm:$0xf] %v4572
        %4589 = vst [vmem:[%s313 + $0x14] sm:$0xf] %v4573
        %4590 = vst [vmem:[%s313 + $0x18] sm:$0xf] %v4574
        %4591 = vst [vmem:[%s313 + $0x1c] sm:$0xf] %v4575
        %s4592 = sand.u32 %s208, 1
        %s4593 = scalar_lea.sflag [#allocation8], %s4592
        %s4594 = sand.u32 %s208, 1
        %s4595 = smul.addr %s4594, 32
        %s4596 = scalar_lea.vmem [#allocation7], %s4595
        // Predicated region
        $region53: #{tpu_custom_call.1} parent=51 // pred_check
          %p4597 = pneg %p218
        $region54: #{tpu_custom_call.1} parent=51 // pred_check_branch
          %4599 = sbr.rel (%p4597) target = $region56
        $region55: #{tpu_custom_call.1} parent=51 // pred_region
          %s4601 = ssub.s32 512, 512
          %4602 = vsyncadd %s4593, %s4601
          %s4603 = smul.addr %s22, 8
          %s4604 = smul.addr %s4603, 64
          %s4605 = scalar_lea.hbm %s8, %s4604
          %s4606 = sshll.u32 %s4596, 4
          %s4607 = int_to_ptr.vmem [resolvable:$true] %s4606
          %4612 = dma.vmem_to_hbm [thread:$0]  %s4607, 512, %s4605, %s4593, 64, 64, 4
        $region56: #{tpu_custom_call.1} parent=51 // pred_fallthru
          _
      $region52: #{tpu_custom_call.1} parent=5 // pred_fallthru
        _
      %p4613 = scmp.le.s32.totalorder 2, %s17
      // Predicated region
      $region57: #{tpu_custom_call.1} parent=5 // pred_check
        %p4614 = pneg %p4613
      $region58: #{tpu_custom_call.1} parent=5 // pred_check_branch
        %4616 = sbr.rel (%p4614) target = $region60
      $region59: #{tpu_custom_call.1} parent=5 // pred_region
        %s4617 = ssub.s32 %s17, 2
        // Predicated region
        $region61: #{tpu_custom_call.1} parent=59 // pred_check
          %p4618 = pneg %p224
        $region62: #{tpu_custom_call.1} parent=59 // pred_check_branch
          %4620 = sbr.rel (%p4618) target = $region64
        $region63: #{tpu_custom_call.1} parent=59 // pred_region
          %s4621 = sand.u32 %s209, 1
          %s4622 = scalar_lea.sflag [#allocation8], %s4621
          %s4623 = sand.u32 %s209, 1
          %s4624 = smul.addr %s4623, 32
          %s4625 = scalar_lea.vmem [#allocation7], %s4624
          %4626 = dma.done %s4622, 512
        $region64: #{tpu_custom_call.1} parent=59 // pred_fallthru
          _
      $region60: #{tpu_custom_call.1} parent=5 // pred_fallthru
        _
    $region6: #{tpu_custom_call.1} parent=1 // loop_footer
      %s21 = sadd.s32 1, %s17
    $region7: #{tpu_custom_call.1} parent=1 // loop_footer_branch
      %16 = sbr.rel target = $region3
    $region8: #{tpu_custom_call.1} parent=1 // loop_exit
      _
    %4627 = vsyncpa [#allocation8], 1
    %s4628 = scalar_lea.sflag [#allocation8], 1
    %4629 = vsyncpa %s4628, 1

</llo_original>
